<compile_context>
chip_gen: v5e
topology: v5e:2x2
jax: 0.10.0
libtpu: 0.0.40
codegen_flags: <defaults>
</compile_context>

<pallas_src>
import jax
import jax.numpy as jnp
from jax import lax
from jax.experimental import pallas as pl
from jax.experimental.pallas import tpu as pltpu

POOL_SIZES = (5, 9, 13)          # module default; cascade below assumes exactly this set
N_BR = len(POOL_SIZES) + 1       # 3 pooled branches + identity
K = 5                            # cascade pool size (5∘5 = 9, 5∘5∘5 = 13)
P = K // 2                       # 2: halo needed per cascade stage
W_LO = 8                         # left W halo  (>= P, sublane aligned)
W_HI = 8                         # right W halo (>= P)


def _spp_kernel(x_ref, o_ref, xp_ref, hm_ref):
    """x_ref: (1, H, W, Ct); o_ref: (1, 4, H, W, Ct);
    xp_ref: (H+2P, W+W_LO+W_HI, Ct) -inf-halo scratch; hm_ref: (H+2P, W, Ct)."""
    _, H, W, Ct = x_ref.shape
    Hp = H + 2 * P
    dt = xp_ref.dtype

    def neg(shape):
        return jnp.full(shape, -jnp.inf, dtype=dt)

    # -inf halo: border strips only; the interior is overwritten every stage.
    xp_ref[:, :W_LO, :] = neg((Hp, W_LO, Ct))                  # left strip (all rows)
    xp_ref[:, W_LO + W:, :] = neg((Hp, W_HI, Ct))              # right strip (all rows)
    xp_ref[:P, W_LO:W_LO + W, :] = neg((P, W, Ct))             # top rows
    xp_ref[P + H:, W_LO:W_LO + W, :] = neg((P, W, Ct))         # bottom rows

    x = x_ref[0]                                               # (H, W, Ct)
    o_ref[0, N_BR - 1] = x                                     # identity branch (last slot)
    xp_ref[P:P + H, W_LO:W_LO + W, :] = x                      # interior (sublane-aligned)

    # SPPF cascade; output slots match torch.cat([pool13, pool9, pool5, x], dim=1).
    for stage, slot in enumerate((2, 1, 0)):
        # Horizontal 5-window max over all Hp rows (shift-doubling: 3 maxes).
        off = W_LO - P                                         # window for col j: off+j .. off+j+4
        a = jnp.maximum(xp_ref[:, off:off + W + 3, :],
                        xp_ref[:, off + 1:off + W + 4, :])     # covers 2 cols
        b = jnp.maximum(a[:, :W + 1, :], a[:, 2:W + 3, :])     # covers 4 cols
        hm_ref[...] = jnp.maximum(b[:, :W, :], b[:, 1:W + 1, :])  # covers 5 cols
        # Vertical 5-window max (leading-dim slices: no lane/sublane shifts).
        a = jnp.maximum(hm_ref[0:H + 3], hm_ref[1:H + 4])
        b = jnp.maximum(a[0:H + 1], a[2:H + 3])
        vm = jnp.maximum(b[0:H], b[1:H + 1])                   # (H, W, Ct)
        o_ref[0, slot] = vm
        if stage < len(POOL_SIZES) - 1:                        # re-pad for next cascade stage
            xp_ref[P:P + H, W_LO:W_LO + W, :] = vm


def _c_tiling(C):
    """Returns (c_tile, padded_C). Legal tiles: full C, or a multiple of 128."""
    if C <= 128:
        return C, C
    c_pad = -(-C // 128) * 128
    return 128, c_pad


def spp_branches(x_nhwc):
    """NHWC in -> (N, 4, H, W, C) branch-major out, lane-dense, no transposes.

    Branch order: [pool13, pool9, pool5, identity].  Layout-flexible consumers
    should use this directly; the NCHW wrapper below adds two HBM transposes
    purely to honour the PyTorch module's NCHW contract.
    """
    N, H, W, C = x_nhwc.shape
    assert jnp.issubdtype(x_nhwc.dtype, jnp.floating), "SPP needs a float dtype (-inf pad)"
    c_t, c_pad = _c_tiling(C)
    if c_pad != C:
        x_nhwc = jnp.pad(x_nhwc, ((0, 0), (0, 0), (0, 0), (0, c_pad - C)))
    esize = x_nhwc.dtype.itemsize
    Hp, Wp = H + 2 * P, W + W_LO + W_HI

    # Per-step VMEM: double-buffered in/out tiles + the two scratches + an
    # allowance for the wide horizontal-pass temporaries.
    step_bytes = esize * c_t * (2 * H * W + 2 * N_BR * H * W + Hp * Wp + Hp * W)
    temp_bytes = 6 * esize * c_t * Hp * (W + 3)
    vmem_limit = max(step_bytes + temp_bytes + 8 * 1024 * 1024, 32 * 1024 * 1024)
    # TODO(synk): add H/W tiling for very large feature maps where even a single
    # 128-channel block exceeds VMEM; SPP feature maps are small in practice.

    out = pl.pallas_call(
        _spp_kernel,
        out_shape=jax.ShapeDtypeStruct((N, N_BR, H, W, c_pad), x_nhwc.dtype),
        grid_spec=pltpu.PrefetchScalarGridSpec(
            num_scalar_prefetch=0,
            grid=(N, c_pad // c_t),
            in_specs=[pl.BlockSpec((1, H, W, c_t), lambda n, c: (n, 0, 0, c))],
            out_specs=pl.BlockSpec((1, N_BR, H, W, c_t),
                                   lambda n, c: (n, 0, 0, 0, c)),
            scratch_shapes=[pltpu.VMEM((Hp, Wp, c_t), x_nhwc.dtype),
                            pltpu.VMEM((Hp, W, c_t), x_nhwc.dtype)],
        ),
        compiler_params=pltpu.CompilerParams(
            dimension_semantics=("parallel", "parallel"),   # batch x channel-block
            vmem_limit_bytes=int(vmem_limit),
        ),
        cost_estimate=pl.CostEstimate(
            flops=6 * len(POOL_SIZES) * N * H * W * c_pad,   # separable cascade maxes
            transcendentals=0,
            bytes_accessed=(1 + N_BR) * N * H * W * c_pad * esize,
        ),
    )(x_nhwc)

    if c_pad != C:
        out = out[..., :C]
    return out


def _spp_nchw(x_nchw):
    """NCHW in, NCHW out: cat([pool13, pool9, pool5, x], channel dim)."""
    N, C, H, W = x_nchw.shape
    x = jnp.transpose(x_nchw, (0, 2, 3, 1))                   # NCHW -> NHWC (C on lanes)
    out = spp_branches(x)                                     # (N, 4, H, W, C)
    # (N,4,H,W,C) -> (N,4,C,H,W) -> (N,4C,H,W).  The reshape is free; the
    # transpose is the unavoidable price of the module's NCHW contract.
    return jnp.transpose(out, (0, 1, 4, 2, 3)).reshape(N, N_BR * C, H, W)


spatial_pyramid_pooling = jax.jit(_spp_nchw)


# --- pure-JAX reference (for correctness check) ---
def spp_reference(x_nchw):
    def pool(x, k):
        p = k // 2
        return lax.reduce_window(
            x, -jnp.inf, lax.max,
            window_dimensions=(1, 1, k, k),
            window_strides=(1, 1, 1, 1),
            padding=((0, 0), (0, 0), (p, p), (p, p)))
    feats = [pool(x_nchw, k) for k in sorted(POOL_SIZES, reverse=True)]
    return jnp.concatenate(feats + [x_nchw], axis=1)


if __name__ == "__main__":
    key = jax.random.PRNGKey(0)
    k1, k2 = jax.random.split(key)

    # Spec-sized small test.
    x1 = jax.random.normal(k1, (2, 4, 16, 16), jnp.float32)   # NCHW
    o1 = jax.block_until_ready(spatial_pyramid_pooling(x1))
    assert o1.shape == (2, 4 * 4, 16, 16), o1.shape
    r1 = spp_reference(x1)
    assert jnp.allclose(o1, r1, atol=1e-6, rtol=1e-6), float(jnp.max(jnp.abs(o1 - r1)))

    # Exercises the channel-block grid axis (C=256 -> c_t=128, grid=(1, 2)) and
    # non-multiple-of-8 spatial dims.
    x2 = jax.random.normal(k2, (1, 256, 20, 20), jnp.float32)
    o2 = jax.block_until_ready(spatial_pyramid_pooling(x2))
    assert o2.shape == (1, 4 * 256, 20, 20), o2.shape
    r2 = spp_reference(x2)
    assert jnp.allclose(o2, r2, atol=1e-6, rtol=1e-6), float(jnp.max(jnp.abs(o2 - r2)))

    print("KERNEL_OK")
</pallas_src>

<mosaic_0001>
module attributes {stable_mosaic.version = 11 : i64} {
  func.func @_spp_kernel(%arg0: i32, %arg1: i32, %arg2: memref<1x16x16x4xf32, #tpu.memory_space<vmem>>, %arg3: memref<1x4x16x16x4xf32, #tpu.memory_space<vmem>>, %arg4: memref<20x32x4xf32, #tpu.memory_space<vmem>>, %arg5: memref<20x16x4xf32, #tpu.memory_space<vmem>>) attributes {dimension_semantics = [#tpu.dimension_semantics<parallel>, #tpu.dimension_semantics<parallel>], iteration_bounds = array<i64: 2, 1>, scalar_prefetch = 0 : i64, scratch_operands = 2 : i64, tpu.core_type = #tpu.core_type<tc>, window_params = [{transform_indices = @transform_0, window_bounds = array<i64: 1, 16, 16, 4>}, {transform_indices = @transform_1, window_bounds = array<i64: 1, 4, 16, 16, 4>}]} {
    %cst = arith.constant 0xFF800000 : f32
    %0 = vector.broadcast %cst : f32 to vector<20x8x4xf32>
    %c0 = arith.constant 0 : index
    %c0_0 = arith.constant 0 : index
    %c0_1 = arith.constant 0 : index
    %1 = vector.load %arg4[%c0, %c0_0, %c0_1] : memref<20x32x4xf32, #tpu.memory_space<vmem>>, vector<20x8x4xf32>
    tpu.vector_store %arg4[%c0, %c0_0, %c0_1], %0 {strides = array<i32>} : memref<20x32x4xf32, #tpu.memory_space<vmem>>, vector<20x8x4xf32>,
    %cst_2 = arith.constant 0xFF800000 : f32
    %2 = vector.broadcast %cst_2 : f32 to vector<20x8x4xf32>
    %c0_3 = arith.constant 0 : index
    %c24 = arith.constant 24 : index
    %c0_4 = arith.constant 0 : index
    %3 = vector.load %arg4[%c0_3, %c24, %c0_4] : memref<20x32x4xf32, #tpu.memory_space<vmem>>, vector<20x8x4xf32>
    tpu.vector_store %arg4[%c0_3, %c24, %c0_4], %2 {strides = array<i32>} : memref<20x32x4xf32, #tpu.memory_space<vmem>>, vector<20x8x4xf32>,
    %cst_5 = arith.constant 0xFF800000 : f32
    %4 = vector.broadcast %cst_5 : f32 to vector<2x16x4xf32>
    %c0_6 = arith.constant 0 : index
    %c8 = arith.constant 8 : index
    %c0_7 = arith.constant 0 : index
    %5 = vector.load %arg4[%c0_6, %c8, %c0_7] : memref<20x32x4xf32, #tpu.memory_space<vmem>>, vector<2x16x4xf32>
    tpu.vector_store %arg4[%c0_6, %c8, %c0_7], %4 {strides = array<i32>} : memref<20x32x4xf32, #tpu.memory_space<vmem>>, vector<2x16x4xf32>,
    %cst_8 = arith.constant 0xFF800000 : f32
    %6 = vector.broadcast %cst_8 : f32 to vector<2x16x4xf32>
    %c18 = arith.constant 18 : index
    %c8_9 = arith.constant 8 : index
    %c0_10 = arith.constant 0 : index
    %7 = vector.load %arg4[%c18, %c8_9, %c0_10] : memref<20x32x4xf32, #tpu.memory_space<vmem>>, vector<2x16x4xf32>
    tpu.vector_store %arg4[%c18, %c8_9, %c0_10], %6 {strides = array<i32>} : memref<20x32x4xf32, #tpu.memory_space<vmem>>, vector<2x16x4xf32>,
    %c0_11 = arith.constant 0 : index
    %c0_12 = arith.constant 0 : index
    %c0_13 = arith.constant 0 : index
    %c0_14 = arith.constant 0 : index
    %8 = vector.load %arg2[%c0_11, %c0_12, %c0_13, %c0_14] : memref<1x16x16x4xf32, #tpu.memory_space<vmem>>, vector<1x16x16x4xf32>
    %9 = vector.shape_cast %8 : vector<1x16x16x4xf32> to vector<16x16x4xf32>
    %c0_15 = arith.constant 0 : index
    %c3 = arith.constant 3 : index
    %c0_16 = arith.constant 0 : index
    %c0_17 = arith.constant 0 : index
    %c0_18 = arith.constant 0 : index
    %10 = vector.load %arg3[%c0_15, %c3, %c0_16, %c0_17, %c0_18] : memref<1x4x16x16x4xf32, #tpu.memory_space<vmem>>, vector<1x1x16x16x4xf32>
    %11 = vector.shape_cast %10 : vector<1x1x16x16x4xf32> to vector<16x16x4xf32>
    %12 = vector.shape_cast %9 : vector<16x16x4xf32> to vector<1x1x16x16x4xf32>
    tpu.vector_store %arg3[%c0_15, %c3, %c0_16, %c0_17, %c0_18], %12 {strides = array<i32>} : memref<1x4x16x16x4xf32, #tpu.memory_space<vmem>>, vector<1x1x16x16x4xf32>,
    %c2 = arith.constant 2 : index
    %c8_19 = arith.constant 8 : index
    %c0_20 = arith.constant 0 : index
    %13 = vector.load %arg4[%c2, %c8_19, %c0_20] : memref<20x32x4xf32, #tpu.memory_space<vmem>>, vector<16x16x4xf32>
    tpu.vector_store %arg4[%c2, %c8_19, %c0_20], %9 {strides = array<i32>} : memref<20x32x4xf32, #tpu.memory_space<vmem>>, vector<16x16x4xf32>,
    %c0_21 = arith.constant 0 : index
    %c6 = arith.constant 6 : index
    %c0_22 = arith.constant 0 : index
    %14 = vector.load %arg4[%c0_21, %c6, %c0_22] : memref<20x32x4xf32, #tpu.memory_space<vmem>>, vector<20x19x4xf32>
    %c0_23 = arith.constant 0 : index
    %c7 = arith.constant 7 : index
    %c0_24 = arith.constant 0 : index
    %15 = vector.load %arg4[%c0_23, %c7, %c0_24] : memref<20x32x4xf32, #tpu.memory_space<vmem>>, vector<20x19x4xf32>
    %16 = arith.maximumf %14, %15 : vector<20x19x4xf32>
    %17 = vector.extract_strided_slice %16 {offsets = [0, 0, 0], sizes = [20, 17, 4], strides = [1, 1, 1]} : vector<20x19x4xf32> to vector<20x17x4xf32>
    %18 = vector.extract_strided_slice %16 {offsets = [0, 2, 0], sizes = [20, 17, 4], strides = [1, 1, 1]} : vector<20x19x4xf32> to vector<20x17x4xf32>
    %19 = arith.maximumf %17, %18 : vector<20x17x4xf32>
    %20 = vector.extract_strided_slice %19 {offsets = [0, 0, 0], sizes = [20, 16, 4], strides = [1, 1, 1]} : vector<20x17x4xf32> to vector<20x16x4xf32>
    %21 = vector.extract_strided_slice %19 {offsets = [0, 1, 0], sizes = [20, 16, 4], strides = [1, 1, 1]} : vector<20x17x4xf32> to vector<20x16x4xf32>
    %22 = arith.maximumf %20, %21 : vector<20x16x4xf32>
    %c0_25 = arith.constant 0 : index
    %c0_26 = arith.constant 0 : index
    %c0_27 = arith.constant 0 : index
    %23 = vector.load %arg5[%c0_25, %c0_26, %c0_27] : memref<20x16x4xf32, #tpu.memory_space<vmem>>, vector<20x16x4xf32>
    tpu.vector_store %arg5[%c0_25, %c0_26, %c0_27], %22 {strides = array<i32>} : memref<20x16x4xf32, #tpu.memory_space<vmem>>, vector<20x16x4xf32>,
    %c0_28 = arith.constant 0 : index
    %c0_29 = arith.constant 0 : index
    %c0_30 = arith.constant 0 : index
    %24 = vector.load %arg5[%c0_28, %c0_29, %c0_30] : memref<20x16x4xf32, #tpu.memory_space<vmem>>, vector<19x16x4xf32>
    %c1 = arith.constant 1 : index
    %c0_31 = arith.constant 0 : index
    %c0_32 = arith.constant 0 : index
    %25 = vector.load %arg5[%c1, %c0_31, %c0_32] : memref<20x16x4xf32, #tpu.memory_space<vmem>>, vector<19x16x4xf32>
    %26 = arith.maximumf %24, %25 : vector<19x16x4xf32>
    %27 = vector.extract_strided_slice %26 {offsets = [0, 0, 0], sizes = [17, 16, 4], strides = [1, 1, 1]} : vector<19x16x4xf32> to vector<17x16x4xf32>
    %28 = vector.extract_strided_slice %26 {offsets = [2, 0, 0], sizes = [17, 16, 4], strides = [1, 1, 1]} : vector<19x16x4xf32> to vector<17x16x4xf32>
    %29 = arith.maximumf %27, %28 : vector<17x16x4xf32>
    %30 = vector.extract_strided_slice %29 {offsets = [0, 0, 0], sizes = [16, 16, 4], strides = [1, 1, 1]} : vector<17x16x4xf32> to vector<16x16x4xf32>
    %31 = vector.extract_strided_slice %29 {offsets = [1, 0, 0], sizes = [16, 16, 4], strides = [1, 1, 1]} : vector<17x16x4xf32> to vector<16x16x4xf32>
    %32 = arith.maximumf %30, %31 : vector<16x16x4xf32>
    %c0_33 = arith.constant 0 : index
    %c2_34 = arith.constant 2 : index
    %c0_35 = arith.constant 0 : index
    %c0_36 = arith.constant 0 : index
    %c0_37 = arith.constant 0 : index
    %33 = vector.load %arg3[%c0_33, %c2_34, %c0_35, %c0_36, %c0_37] : memref<1x4x16x16x4xf32, #tpu.memory_space<vmem>>, vector<1x1x16x16x4xf32>
    %34 = vector.shape_cast %33 : vector<1x1x16x16x4xf32> to vector<16x16x4xf32>
    %35 = vector.shape_cast %32 : vector<16x16x4xf32> to vector<1x1x16x16x4xf32>
    tpu.vector_store %arg3[%c0_33, %c2_34, %c0_35, %c0_36, %c0_37], %35 {strides = array<i32>} : memref<1x4x16x16x4xf32, #tpu.memory_space<vmem>>, vector<1x1x16x16x4xf32>,
    %c2_38 = arith.constant 2 : index
    %c8_39 = arith.constant 8 : index
    %c0_40 = arith.constant 0 : index
    %36 = vector.load %arg4[%c2_38, %c8_39, %c0_40] : memref<20x32x4xf32, #tpu.memory_space<vmem>>, vector<16x16x4xf32>
    tpu.vector_store %arg4[%c2_38, %c8_39, %c0_40], %32 {strides = array<i32>} : memref<20x32x4xf32, #tpu.memory_space<vmem>>, vector<16x16x4xf32>,
    %c0_41 = arith.constant 0 : index
    %c6_42 = arith.constant 6 : index
    %c0_43 = arith.constant 0 : index
    %37 = vector.load %arg4[%c0_41, %c6_42, %c0_43] : memref<20x32x4xf32, #tpu.memory_space<vmem>>, vector<20x19x4xf32>
    %c0_44 = arith.constant 0 : index
    %c7_45 = arith.constant 7 : index
    %c0_46 = arith.constant 0 : index
    %38 = vector.load %arg4[%c0_44, %c7_45, %c0_46] : memref<20x32x4xf32, #tpu.memory_space<vmem>>, vector<20x19x4xf32>
    %39 = arith.maximumf %37, %38 : vector<20x19x4xf32>
    %40 = vector.extract_strided_slice %39 {offsets = [0, 0, 0], sizes = [20, 17, 4], strides = [1, 1, 1]} : vector<20x19x4xf32> to vector<20x17x4xf32>
    %41 = vector.extract_strided_slice %39 {offsets = [0, 2, 0], sizes = [20, 17, 4], strides = [1, 1, 1]} : vector<20x19x4xf32> to vector<20x17x4xf32>
    %42 = arith.maximumf %40, %41 : vector<20x17x4xf32>
    %43 = vector.extract_strided_slice %42 {offsets = [0, 0, 0], sizes = [20, 16, 4], strides = [1, 1, 1]} : vector<20x17x4xf32> to vector<20x16x4xf32>
    %44 = vector.extract_strided_slice %42 {offsets = [0, 1, 0], sizes = [20, 16, 4], strides = [1, 1, 1]} : vector<20x17x4xf32> to vector<20x16x4xf32>
    %45 = arith.maximumf %43, %44 : vector<20x16x4xf32>
    %c0_47 = arith.constant 0 : index
    %c0_48 = arith.constant 0 : index
    %c0_49 = arith.constant 0 : index
    %46 = vector.load %arg5[%c0_47, %c0_48, %c0_49] : memref<20x16x4xf32, #tpu.memory_space<vmem>>, vector<20x16x4xf32>
    tpu.vector_store %arg5[%c0_47, %c0_48, %c0_49], %45 {strides = array<i32>} : memref<20x16x4xf32, #tpu.memory_space<vmem>>, vector<20x16x4xf32>,
    %c0_50 = arith.constant 0 : index
    %c0_51 = arith.constant 0 : index
    %c0_52 = arith.constant 0 : index
    %47 = vector.load %arg5[%c0_50, %c0_51, %c0_52] : memref<20x16x4xf32, #tpu.memory_space<vmem>>, vector<19x16x4xf32>
    %c1_53 = arith.constant 1 : index
    %c0_54 = arith.constant 0 : index
    %c0_55 = arith.constant 0 : index
    %48 = vector.load %arg5[%c1_53, %c0_54, %c0_55] : memref<20x16x4xf32, #tpu.memory_space<vmem>>, vector<19x16x4xf32>
    %49 = arith.maximumf %47, %48 : vector<19x16x4xf32>
    %50 = vector.extract_strided_slice %49 {offsets = [0, 0, 0], sizes = [17, 16, 4], strides = [1, 1, 1]} : vector<19x16x4xf32> to vector<17x16x4xf32>
    %51 = vector.extract_strided_slice %49 {offsets = [2, 0, 0], sizes = [17, 16, 4], strides = [1, 1, 1]} : vector<19x16x4xf32> to vector<17x16x4xf32>
    %52 = arith.maximumf %50, %51 : vector<17x16x4xf32>
    %53 = vector.extract_strided_slice %52 {offsets = [0, 0, 0], sizes = [16, 16, 4], strides = [1, 1, 1]} : vector<17x16x4xf32> to vector<16x16x4xf32>
    %54 = vector.extract_strided_slice %52 {offsets = [1, 0, 0], sizes = [16, 16, 4], strides = [1, 1, 1]} : vector<17x16x4xf32> to vector<16x16x4xf32>
    %55 = arith.maximumf %53, %54 : vector<16x16x4xf32>
    %c0_56 = arith.constant 0 : index
    %c1_57 = arith.constant 1 : index
    %c0_58 = arith.constant 0 : index
    %c0_59 = arith.constant 0 : index
    %c0_60 = arith.constant 0 : index
    %56 = vector.load %arg3[%c0_56, %c1_57, %c0_58, %c0_59, %c0_60] : memref<1x4x16x16x4xf32, #tpu.memory_space<vmem>>, vector<1x1x16x16x4xf32>
    %57 = vector.shape_cast %56 : vector<1x1x16x16x4xf32> to vector<16x16x4xf32>
    %58 = vector.shape_cast %55 : vector<16x16x4xf32> to vector<1x1x16x16x4xf32>
    tpu.vector_store %arg3[%c0_56, %c1_57, %c0_58, %c0_59, %c0_60], %58 {strides = array<i32>} : memref<1x4x16x16x4xf32, #tpu.memory_space<vmem>>, vector<1x1x16x16x4xf32>,
    %c2_61 = arith.constant 2 : index
    %c8_62 = arith.constant 8 : index
    %c0_63 = arith.constant 0 : index
    %59 = vector.load %arg4[%c2_61, %c8_62, %c0_63] : memref<20x32x4xf32, #tpu.memory_space<vmem>>, vector<16x16x4xf32>
    tpu.vector_store %arg4[%c2_61, %c8_62, %c0_63], %55 {strides = array<i32>} : memref<20x32x4xf32, #tpu.memory_space<vmem>>, vector<16x16x4xf32>,
    %c0_64 = arith.constant 0 : index
    %c6_65 = arith.constant 6 : index
    %c0_66 = arith.constant 0 : index
    %60 = vector.load %arg4[%c0_64, %c6_65, %c0_66] : memref<20x32x4xf32, #tpu.memory_space<vmem>>, vector<20x19x4xf32>
    %c0_67 = arith.constant 0 : index
    %c7_68 = arith.constant 7 : index
    %c0_69 = arith.constant 0 : index
    %61 = vector.load %arg4[%c0_67, %c7_68, %c0_69] : memref<20x32x4xf32, #tpu.memory_space<vmem>>, vector<20x19x4xf32>
    %62 = arith.maximumf %60, %61 : vector<20x19x4xf32>
    %63 = vector.extract_strided_slice %62 {offsets = [0, 0, 0], sizes = [20, 17, 4], strides = [1, 1, 1]} : vector<20x19x4xf32> to vector<20x17x4xf32>
    %64 = vector.extract_strided_slice %62 {offsets = [0, 2, 0], sizes = [20, 17, 4], strides = [1, 1, 1]} : vector<20x19x4xf32> to vector<20x17x4xf32>
    %65 = arith.maximumf %63, %64 : vector<20x17x4xf32>
    %66 = vector.extract_strided_slice %65 {offsets = [0, 0, 0], sizes = [20, 16, 4], strides = [1, 1, 1]} : vector<20x17x4xf32> to vector<20x16x4xf32>
    %67 = vector.extract_strided_slice %65 {offsets = [0, 1, 0], sizes = [20, 16, 4], strides = [1, 1, 1]} : vector<20x17x4xf32> to vector<20x16x4xf32>
    %68 = arith.maximumf %66, %67 : vector<20x16x4xf32>
    %c0_70 = arith.constant 0 : index
    %c0_71 = arith.constant 0 : index
    %c0_72 = arith.constant 0 : index
    %69 = vector.load %arg5[%c0_70, %c0_71, %c0_72] : memref<20x16x4xf32, #tpu.memory_space<vmem>>, vector<20x16x4xf32>
    tpu.vector_store %arg5[%c0_70, %c0_71, %c0_72], %68 {strides = array<i32>} : memref<20x16x4xf32, #tpu.memory_space<vmem>>, vector<20x16x4xf32>,
    %c0_73 = arith.constant 0 : index
    %c0_74 = arith.constant 0 : index
    %c0_75 = arith.constant 0 : index
    %70 = vector.load %arg5[%c0_73, %c0_74, %c0_75] : memref<20x16x4xf32, #tpu.memory_space<vmem>>, vector<19x16x4xf32>
    %c1_76 = arith.constant 1 : index
    %c0_77 = arith.constant 0 : index
    %c0_78 = arith.constant 0 : index
    %71 = vector.load %arg5[%c1_76, %c0_77, %c0_78] : memref<20x16x4xf32, #tpu.memory_space<vmem>>, vector<19x16x4xf32>
    %72 = arith.maximumf %70, %71 : vector<19x16x4xf32>
    %73 = vector.extract_strided_slice %72 {offsets = [0, 0, 0], sizes = [17, 16, 4], strides = [1, 1, 1]} : vector<19x16x4xf32> to vector<17x16x4xf32>
    %74 = vector.extract_strided_slice %72 {offsets = [2, 0, 0], sizes = [17, 16, 4], strides = [1, 1, 1]} : vector<19x16x4xf32> to vector<17x16x4xf32>
    %75 = arith.maximumf %73, %74 : vector<17x16x4xf32>
    %76 = vector.extract_strided_slice %75 {offsets = [0, 0, 0], sizes = [16, 16, 4], strides = [1, 1, 1]} : vector<17x16x4xf32> to vector<16x16x4xf32>
    %77 = vector.extract_strided_slice %75 {offsets = [1, 0, 0], sizes = [16, 16, 4], strides = [1, 1, 1]} : vector<17x16x4xf32> to vector<16x16x4xf32>
    %78 = arith.maximumf %76, %77 : vector<16x16x4xf32>
    %c0_79 = arith.constant 0 : index
    %c0_80 = arith.constant 0 : index
    %c0_81 = arith.constant 0 : index
    %c0_82 = arith.constant 0 : index
    %c0_83 = arith.constant 0 : index
    %79 = vector.load %arg3[%c0_79, %c0_80, %c0_81, %c0_82, %c0_83] : memref<1x4x16x16x4xf32, #tpu.memory_space<vmem>>, vector<1x1x16x16x4xf32>
    %80 = vector.shape_cast %79 : vector<1x1x16x16x4xf32> to vector<16x16x4xf32>
    %81 = vector.shape_cast %78 : vector<16x16x4xf32> to vector<1x1x16x16x4xf32>
    tpu.vector_store %arg3[%c0_79, %c0_80, %c0_81, %c0_82, %c0_83], %81 {strides = array<i32>} : memref<1x4x16x16x4xf32, #tpu.memory_space<vmem>>, vector<1x1x16x16x4xf32>,
    return
  }
  func.func @transform_0(%arg0: i32, %arg1: i32) -> (i32, i32, i32, i32) {
    %c0_i32 = arith.constant 0 : i32
    %c0_i32_0 = arith.constant 0 : i32
    %c0_i32_1 = arith.constant 0 : i32
    return %arg0, %c0_i32, %c0_i32_0, %arg1 : i32, i32, i32, i32
  }
  func.func @transform_1(%arg0: i32, %arg1: i32) -> (i32, i32, i32, i32, i32) {
    %c0_i32 = arith.constant 0 : i32
    %c0_i32_0 = arith.constant 0 : i32
    %c0_i32_1 = arith.constant 0 : i32
    %c0_i32_2 = arith.constant 0 : i32
    return %arg0, %c0_i32, %c0_i32_0, %c0_i32_1, %arg1 : i32, i32, i32, i32, i32
  }
}

</mosaic_0001>

<llo_original>
// kernel: _spp_nchw.1
$region0: #{_spp_nchw.1}
  #allocation0 [shape = 'u32[]', space=smem, size = 0x4, offset = 0x4, fixed_abs, tag = 'smem constant byte address 0x4 - core index']
  #allocation1 [shape = 'u32[72,128]{1,0:T(1,128)}', space=vmem, size = 0x9000, scoped, tag = 'internal scratch']
  #allocation2 [shape = 'f32[20,32,4]{2,1,0:T(8,128)}', space=vmem, size = 0x50000, scoped, tag = 'scratch operand']
  #allocation3 [shape = 'f32[20,16,4]{2,1,0:T(8,128)}', space=vmem, size = 0x28000, scoped, tag = 'scratch operand']
  %s0 = inlined_call_operand.vmem [shape: f32[2,16,16,4], index: 0, kind: input, shape index: {}]
  %s1 = inlined_call_operand.vmem [shape: f32[2,4,16,16,4], index: 1, kind: output, shape index: {}]
  %s2 = sld [smem:[#allocation0]]
  $region37: #{_spp_nchw.1} parent=0
    _
  %s4 = ssub.s32 1, %s2
  %s5 = scalar_select 0, %s4, %s2
  loop: start=0, step=1, limit=4
  $region2: #{_spp_nchw.1} parent=0 // loop_pre_header
    _
  $region3: #{_spp_nchw.1} parent=0 // loop_header
    %s7 = sphi 0, %s11
    %p8 = scmp.ge.s32.totalorder %s7, 4
    %s14 = sphi 0, %s26
    %s15 = sphi 0, %s22
    %s16 = sphi 0, %s14
    %s17 = sphi 0, %s15
    %s18 = sphi 0, %s16
    %s19 = sphi 0, %s17
    %s31 = sphi 0, %s33
    %s34 = sphi 0, %s31
    %s35 = sphi 0, %s34
    %s51 = sphi 0, %s35
    %s59 = sphi 0, %s61
    %s62 = sphi 0, %s59
    %s63 = sphi 0, %s62
    %s79 = sphi 0, %s63
  $region4: #{_spp_nchw.1} parent=0 // loop_header_branch
    %10 = sbr.rel (%p8) target = $region8
  $region5: #{_spp_nchw.1} parent=0 // loop_body
    %s12 = ssub.s32 %s7, 1
    %s13 = ssub.s32 %s7, 2
    %s20 = sadd.s32 1, %s15
    %p21 = scmp.ge.s32.totalorder %s20, 1
    %s22 = scalar_select %p21, 0, %s20
    %s23 = sadd.s32 1, %s14
    %s24 = scalar_select %p21, %s23, %s14
    %p25 = scmp.ge.s32.totalorder %s24, 2
    %s26 = scalar_select %p25, 0, %s24
    %s27 = ssub.s32 %s14, %s26
    %s28 = ssub.s32 %s15, %s22
    %s29 = sor.u32 %s27, %s28
    %p30 = scmp.eq.s32.totalorder %s29, 0
    %s32 = sadd.s32 %s31, 1
    %s33 = scalar_select %p30, %s31, %s32
    %p36 = pneg %p30
    %p37 = scmp.eq.s32.totalorder %s7, 1
    %p38 = por %p36, %p37
    %p39 = scmp.ne.s32.totalorder %s31, %s34
    %p40 = scmp.eq.s32.totalorder %s7, 0
    %p41 = por %p39, %p40
    %p42 = scmp.ne.s32.totalorder %s31, %s34
    %p43 = scmp.eq.s32.totalorder %s12, 1
    %p44 = por %p42, %p43
    %p45 = scmp.ne.s32.totalorder %s34, %s35
    %p46 = scmp.eq.s32.totalorder %s12, 0
    %p47 = por %p45, %p46
    %p48 = scmp.ne.s32.totalorder %s34, %s35
    %p49 = scmp.eq.s32.totalorder %s13, 1
    %p50 = por %p48, %p49
    %p52 = scmp.ne.s32.totalorder %s35, %s51
    %p53 = scmp.eq.s32.totalorder %s13, 0
    %p54 = por %p52, %p53
    %s55 = ssub.s32 %s14, %s26
    %s56 = ssub.s32 %s15, %s22
    %s57 = sor.u32 %s55, %s56
    %p58 = scmp.eq.s32.totalorder %s57, 0
    %s60 = sadd.s32 %s59, 1
    %s61 = scalar_select %p58, %s59, %s60
    %p64 = pneg %p58
    %p65 = scmp.eq.s32.totalorder %s7, 1
    %p66 = por %p64, %p65
    %p67 = scmp.ne.s32.totalorder %s59, %s62
    %p68 = scmp.eq.s32.totalorder %s7, 0
    %p69 = por %p67, %p68
    %p70 = scmp.ne.s32.totalorder %s59, %s62
    %p71 = scmp.eq.s32.totalorder %s12, 1
    %p72 = por %p70, %p71
    %p73 = scmp.ne.s32.totalorder %s62, %s63
    %p74 = scmp.eq.s32.totalorder %s12, 0
    %p75 = por %p73, %p74
    %p76 = scmp.ne.s32.totalorder %s62, %s63
    %p77 = scmp.eq.s32.totalorder %s13, 1
    %p78 = por %p76, %p77
    %p80 = scmp.ne.s32.totalorder %s63, %s79
    %p81 = scmp.eq.s32.totalorder %s13, 0
    %p82 = por %p80, %p81
    %p83 = scmp.le.s32.totalorder 1, %s7
    %p84 = scmp.lt.s32.totalorder %s7, 3
    %p85 = pnand %p83, %p84
    %p86 = pneg %p85
    // Predicated region
    $region9: #{_spp_nchw.1} parent=5 // pred_check
      _
    $region10: #{_spp_nchw.1} parent=5 // pred_check_branch
      %88 = sbr.rel (%p85) target = $region12
    $region11: #{_spp_nchw.1} parent=5 // pred_region
      %s89 = ssub.s32 %s7, 1
    $region12: #{_spp_nchw.1} parent=5 // pred_fallthru
      _
    %p90 = scmp.lt.s32.totalorder %s7, 2
    // Predicated region
    $region13: #{_spp_nchw.1} parent=5 // pred_check
      %p91 = pneg %p90
    $region14: #{_spp_nchw.1} parent=5 // pred_check_branch
      %93 = sbr.rel (%p91) target = $region16
    $region15: #{_spp_nchw.1} parent=5 // pred_region
      // Predicated region
      $region17: #{_spp_nchw.1} parent=15 // pred_check
        %p94 = pneg %p41
      $region18: #{_spp_nchw.1} parent=15 // pred_check_branch
        %96 = sbr.rel (%p94) target = $region20
      $region19: #{_spp_nchw.1} parent=15 // pred_region
        %p97 = scmp.lt.s32.totalorder %s14, 1
        %s98 = scalar_select %p97, %s14, 1
        %p99 = scmp.lt.s32.totalorder %s15, 0
        %s100 = scalar_select %p99, %s15, 0
        %s101 = smul.addr %s98, 32
        %s102 = sadd.s32 %s100, %s101
        %s103 = smul.addr %s102, 8
        %s104 = scalar_lea.vmem %s0, %s103
      $region20: #{_spp_nchw.1} parent=15 // pred_fallthru
        _
    $region16: #{_spp_nchw.1} parent=5 // pred_fallthru
      _
    %p105 = scmp.le.s32.totalorder 1, %s7
    %p106 = scmp.lt.s32.totalorder %s7, 3
    %p107 = pnand %p105, %p106
    %p108 = pneg %p107
    // Predicated region
    $region21: #{_spp_nchw.1} parent=5 // pred_check
      _
    $region22: #{_spp_nchw.1} parent=5 // pred_check_branch
      %110 = sbr.rel (%p107) target = $region24
    $region23: #{_spp_nchw.1} parent=5 // pred_region
      %s111 = ssub.s32 %s7, 1
      %p112 = scmp.lt.s32.totalorder %s16, 1
      %s113 = scalar_select %p112, %s16, 1
      %p114 = scmp.lt.s32.totalorder %s17, 0
      %s115 = scalar_select %p114, %s17, 0
      %s116 = smul.addr %s113, 32
      %s117 = sadd.s32 %s115, %s116
      %s118 = smul.addr %s117, 8
      %s119 = scalar_lea.vmem %s0, %s118
      %p120 = pneg %p47
      %p121 = pneg %p44
      %p122 = pneg %p75
      %p123 = pneg %p72
      %p124 = scmp.lt.s32.totalorder %s16, 1
      %s125 = scalar_select %p124, %s16, 1
      %p126 = scmp.lt.s32.totalorder %s17, 0
      %s127 = scalar_select %p126, %s17, 0
      %s128 = smul.addr %s125, 128
      %s129 = sadd.s32 %s127, %s128
      %s130 = smul.addr %s129, 8
      %s131 = scalar_lea.vmem %s1, %s130
      %p132 = scmp.lt.s32.totalorder %s16, 1
      %s133 = scalar_select %p132, %s16, 1
      %p134 = scmp.lt.s32.totalorder %s17, 0
      %s135 = scalar_select %p134, %s17, 0
      %s136 = smul.addr %s133, 32
      %s137 = sadd.s32 %s135, %s136
      %s138 = smul.addr %s137, 8
      %s139 = scalar_lea.vmem %s0, %s138
      %p140 = scmp.lt.s32.totalorder %s16, 1
      %s141 = scalar_select %p140, %s16, 1
      %p142 = scmp.lt.s32.totalorder %s17, 0
      %s143 = scalar_select %p142, %s17, 0
      %s144 = smul.addr %s141, 128
      %s145 = sadd.s32 %s143, %s144
      %s146 = smul.addr %s145, 8
      %s147 = scalar_lea.vmem %s1, %s146
      %vm148 = vcmask 31744
      %149 = vst.msk [vmem:[#allocation2] sm:$0xff] %vm148, -inf
      %150 = vst.msk [vmem:[#allocation2 + $0x20] sm:$0xff] %vm148, -inf
      %151 = vst.msk [vmem:[#allocation2 + $0x40] sm:$0xff] %vm148, -inf
      %152 = vst.msk [vmem:[#allocation2 + $0x60] sm:$0xff] %vm148, -inf
      %153 = vst.msk [vmem:[#allocation2 + $0x80] sm:$0xff] %vm148, -inf
      %154 = vst.msk [vmem:[#allocation2 + $0xa0] sm:$0xff] %vm148, -inf
      %155 = vst.msk [vmem:[#allocation2 + $0xc0] sm:$0xff] %vm148, -inf
      %156 = vst.msk [vmem:[#allocation2 + $0xe0] sm:$0xff] %vm148, -inf
      %157 = vst.msk [vmem:[#allocation2 + $0x100] sm:$0xff] %vm148, -inf
      %158 = vst.msk [vmem:[#allocation2 + $0x120] sm:$0xff] %vm148, -inf
      %159 = vst.msk [vmem:[#allocation2 + $0x140] sm:$0xff] %vm148, -inf
      %160 = vst.msk [vmem:[#allocation2 + $0x160] sm:$0xff] %vm148, -inf
      %161 = vst.msk [vmem:[#allocation2 + $0x180] sm:$0xff] %vm148, -inf
      %162 = vst.msk [vmem:[#allocation2 + $0x1a0] sm:$0xff] %vm148, -inf
      %163 = vst.msk [vmem:[#allocation2 + $0x1c0] sm:$0xff] %vm148, -inf
      %164 = vst.msk [vmem:[#allocation2 + $0x1e0] sm:$0xff] %vm148, -inf
      %165 = vst.msk [vmem:[#allocation2 + $0x200] sm:$0xff] %vm148, -inf
      %166 = vst.msk [vmem:[#allocation2 + $0x220] sm:$0xff] %vm148, -inf
      %167 = vst.msk [vmem:[#allocation2 + $0x240] sm:$0xff] %vm148, -inf
      %168 = vst.msk [vmem:[#allocation2 + $0x260] sm:$0xff] %vm148, -inf
      %169 = vst.msk [vmem:[#allocation2 + $0x18] sm:$0xff] %vm148, -inf
      %170 = vst.msk [vmem:[#allocation2 + $0x38] sm:$0xff] %vm148, -inf
      %171 = vst.msk [vmem:[#allocation2 + $0x58] sm:$0xff] %vm148, -inf
      %172 = vst.msk [vmem:[#allocation2 + $0x78] sm:$0xff] %vm148, -inf
      %173 = vst.msk [vmem:[#allocation2 + $0x98] sm:$0xff] %vm148, -inf
      %174 = vst.msk [vmem:[#allocation2 + $0xb8] sm:$0xff] %vm148, -inf
      %175 = vst.msk [vmem:[#allocation2 + $0xd8] sm:$0xff] %vm148, -inf
      %176 = vst.msk [vmem:[#allocation2 + $0xf8] sm:$0xff] %vm148, -inf
      %177 = vst.msk [vmem:[#allocation2 + $0x118] sm:$0xff] %vm148, -inf
      %178 = vst.msk [vmem:[#allocation2 + $0x138] sm:$0xff] %vm148, -inf
      %179 = vst.msk [vmem:[#allocation2 + $0x158] sm:$0xff] %vm148, -inf
      %180 = vst.msk [vmem:[#allocation2 + $0x178] sm:$0xff] %vm148, -inf
      %181 = vst.msk [vmem:[#allocation2 + $0x198] sm:$0xff] %vm148, -inf
      %182 = vst.msk [vmem:[#allocation2 + $0x1b8] sm:$0xff] %vm148, -inf
      %183 = vst.msk [vmem:[#allocation2 + $0x1d8] sm:$0xff] %vm148, -inf
      %184 = vst.msk [vmem:[#allocation2 + $0x1f8] sm:$0xff] %vm148, -inf
      %185 = vst.msk [vmem:[#allocation2 + $0x218] sm:$0xff] %vm148, -inf
      %186 = vst.msk [vmem:[#allocation2 + $0x238] sm:$0xff] %vm148, -inf
      %187 = vst.msk [vmem:[#allocation2 + $0x258] sm:$0xff] %vm148, -inf
      %188 = vst.msk [vmem:[#allocation2 + $0x278] sm:$0xff] %vm148, -inf
      %189 = vst.msk [vmem:[#allocation2 + $0x8] sm:$0xff] %vm148, -inf
      %190 = vst.msk [vmem:[#allocation2 + $0x10] sm:$0xff] %vm148, -inf
      %191 = vst.msk [vmem:[#allocation2 + $0x28] sm:$0xff] %vm148, -inf
      %192 = vst.msk [vmem:[#allocation2 + $0x30] sm:$0xff] %vm148, -inf
      %s193 = scalar_lea.vmem [#allocation2], 576
      %194 = vst.msk [vmem:[%s193 + $0x8] sm:$0xff] %vm148, -inf
      %195 = vst.msk [vmem:[%s193 + $0x10] sm:$0xff] %vm148, -inf
      %196 = vst.msk [vmem:[%s193 + $0x28] sm:$0xff] %vm148, -inf
      %197 = vst.msk [vmem:[%s193 + $0x30] sm:$0xff] %vm148, -inf
      %v198 = vld [vmem:[%s139] sm:$0xff]
      %v199 = vld [vmem:[%s139 + $0x8] sm:$0xff]
      %v200 = vld [vmem:[%s139 + $0x10] sm:$0xff]
      %v201 = vld [vmem:[%s139 + $0x18] sm:$0xff]
      %v202 = vld [vmem:[%s139 + $0x20] sm:$0xff]
      %v203 = vld [vmem:[%s139 + $0x28] sm:$0xff]
      %v204 = vld [vmem:[%s139 + $0x30] sm:$0xff]
      %v205 = vld [vmem:[%s139 + $0x38] sm:$0xff]
      %v206 = vld [vmem:[%s139 + $0x40] sm:$0xff]
      %v207 = vld [vmem:[%s139 + $0x48] sm:$0xff]
      %v208 = vld [vmem:[%s139 + $0x50] sm:$0xff]
      %v209 = vld [vmem:[%s139 + $0x58] sm:$0xff]
      %v210 = vld [vmem:[%s139 + $0x60] sm:$0xff]
      %v211 = vld [vmem:[%s139 + $0x68] sm:$0xff]
      %v212 = vld [vmem:[%s139 + $0x70] sm:$0xff]
      %v213 = vld [vmem:[%s139 + $0x78] sm:$0xff]
      %v214 = vld [vmem:[%s139 + $0x80] sm:$0xff]
      %v215 = vld [vmem:[%s139 + $0x88] sm:$0xff]
      %v216 = vld [vmem:[%s139 + $0x90] sm:$0xff]
      %v217 = vld [vmem:[%s139 + $0x98] sm:$0xff]
      %v218 = vld [vmem:[%s139 + $0xa0] sm:$0xff]
      %v219 = vld [vmem:[%s139 + $0xa8] sm:$0xff]
      %v220 = vld [vmem:[%s139 + $0xb0] sm:$0xff]
      %v221 = vld [vmem:[%s139 + $0xb8] sm:$0xff]
      %v222 = vld [vmem:[%s139 + $0xc0] sm:$0xff]
      %v223 = vld [vmem:[%s139 + $0xc8] sm:$0xff]
      %v224 = vld [vmem:[%s139 + $0xd0] sm:$0xff]
      %v225 = vld [vmem:[%s139 + $0xd8] sm:$0xff]
      %v226 = vld [vmem:[%s139 + $0xe0] sm:$0xff]
      %v227 = vld [vmem:[%s139 + $0xe8] sm:$0xff]
      %v228 = vld [vmem:[%s139 + $0xf0] sm:$0xff]
      %v229 = vld [vmem:[%s139 + $0xf8] sm:$0xff]
      %s230 = scalar_lea.vmem %s147, 768
      %231 = vst.msk [vmem:[%s230] sm:$0xff] %vm148, %v198
      %232 = vst.msk [vmem:[%s230 + $0x8] sm:$0xff] %vm148, %v199
      %233 = vst.msk [vmem:[%s230 + $0x10] sm:$0xff] %vm148, %v200
      %234 = vst.msk [vmem:[%s230 + $0x18] sm:$0xff] %vm148, %v201
      %235 = vst.msk [vmem:[%s230 + $0x20] sm:$0xff] %vm148, %v202
      %236 = vst.msk [vmem:[%s230 + $0x28] sm:$0xff] %vm148, %v203
      %237 = vst.msk [vmem:[%s230 + $0x30] sm:$0xff] %vm148, %v204
      %238 = vst.msk [vmem:[%s230 + $0x38] sm:$0xff] %vm148, %v205
      %239 = vst.msk [vmem:[%s230 + $0x40] sm:$0xff] %vm148, %v206
      %240 = vst.msk [vmem:[%s230 + $0x48] sm:$0xff] %vm148, %v207
      %241 = vst.msk [vmem:[%s230 + $0x50] sm:$0xff] %vm148, %v208
      %242 = vst.msk [vmem:[%s230 + $0x58] sm:$0xff] %vm148, %v209
      %243 = vst.msk [vmem:[%s230 + $0x60] sm:$0xff] %vm148, %v210
      %244 = vst.msk [vmem:[%s230 + $0x68] sm:$0xff] %vm148, %v211
      %245 = vst.msk [vmem:[%s230 + $0x70] sm:$0xff] %vm148, %v212
      %246 = vst.msk [vmem:[%s230 + $0x78] sm:$0xff] %vm148, %v213
      %247 = vst.msk [vmem:[%s230 + $0x80] sm:$0xff] %vm148, %v214
      %248 = vst.msk [vmem:[%s230 + $0x88] sm:$0xff] %vm148, %v215
      %249 = vst.msk [vmem:[%s230 + $0x90] sm:$0xff] %vm148, %v216
      %250 = vst.msk [vmem:[%s230 + $0x98] sm:$0xff] %vm148, %v217
      %251 = vst.msk [vmem:[%s230 + $0xa0] sm:$0xff] %vm148, %v218
      %252 = vst.msk [vmem:[%s230 + $0xa8] sm:$0xff] %vm148, %v219
      %253 = vst.msk [vmem:[%s230 + $0xb0] sm:$0xff] %vm148, %v220
      %254 = vst.msk [vmem:[%s230 + $0xb8] sm:$0xff] %vm148, %v221
      %255 = vst.msk [vmem:[%s230 + $0xc0] sm:$0xff] %vm148, %v222
      %256 = vst.msk [vmem:[%s230 + $0xc8] sm:$0xff] %vm148, %v223
      %257 = vst.msk [vmem:[%s230 + $0xd0] sm:$0xff] %vm148, %v224
      %258 = vst.msk [vmem:[%s230 + $0xd8] sm:$0xff] %vm148, %v225
      %259 = vst.msk [vmem:[%s230 + $0xe0] sm:$0xff] %vm148, %v226
      %260 = vst.msk [vmem:[%s230 + $0xe8] sm:$0xff] %vm148, %v227
      %261 = vst.msk [vmem:[%s230 + $0xf0] sm:$0xff] %vm148, %v228
      %262 = vst.msk [vmem:[%s230 + $0xf8] sm:$0xff] %vm148, %v229
      %s263 = scalar_lea.vmem [#allocation2], 64
      %264 = vst.msk [vmem:[%s263 + $0x8] sm:$0xff] %vm148, %v198
      %265 = vst.msk [vmem:[%s263 + $0x10] sm:$0xff] %vm148, %v199
      %266 = vst.msk [vmem:[%s263 + $0x28] sm:$0xff] %vm148, %v200
      %267 = vst.msk [vmem:[%s263 + $0x30] sm:$0xff] %vm148, %v201
      %268 = vst.msk [vmem:[%s263 + $0x48] sm:$0xff] %vm148, %v202
      %269 = vst.msk [vmem:[%s263 + $0x50] sm:$0xff] %vm148, %v203
      %270 = vst.msk [vmem:[%s263 + $0x68] sm:$0xff] %vm148, %v204
      %271 = vst.msk [vmem:[%s263 + $0x70] sm:$0xff] %vm148, %v205
      %272 = vst.msk [vmem:[%s263 + $0x88] sm:$0xff] %vm148, %v206
      %273 = vst.msk [vmem:[%s263 + $0x90] sm:$0xff] %vm148, %v207
      %274 = vst.msk [vmem:[%s263 + $0xa8] sm:$0xff] %vm148, %v208
      %275 = vst.msk [vmem:[%s263 + $0xb0] sm:$0xff] %vm148, %v209
      %276 = vst.msk [vmem:[%s263 + $0xc8] sm:$0xff] %vm148, %v210
      %277 = vst.msk [vmem:[%s263 + $0xd0] sm:$0xff] %vm148, %v211
      %278 = vst.msk [vmem:[%s263 + $0xe8] sm:$0xff] %vm148, %v212
      %279 = vst.msk [vmem:[%s263 + $0xf0] sm:$0xff] %vm148, %v213
      %280 = vst.msk [vmem:[%s263 + $0x108] sm:$0xff] %vm148, %v214
      %281 = vst.msk [vmem:[%s263 + $0x110] sm:$0xff] %vm148, %v215
      %282 = vst.msk [vmem:[%s263 + $0x128] sm:$0xff] %vm148, %v216
      %283 = vst.msk [vmem:[%s263 + $0x130] sm:$0xff] %vm148, %v217
      %284 = vst.msk [vmem:[%s263 + $0x148] sm:$0xff] %vm148, %v218
      %285 = vst.msk [vmem:[%s263 + $0x150] sm:$0xff] %vm148, %v219
      %286 = vst.msk [vmem:[%s263 + $0x168] sm:$0xff] %vm148, %v220
      %287 = vst.msk [vmem:[%s263 + $0x170] sm:$0xff] %vm148, %v221
      %288 = vst.msk [vmem:[%s263 + $0x188] sm:$0xff] %vm148, %v222
      %289 = vst.msk [vmem:[%s263 + $0x190] sm:$0xff] %vm148, %v223
      %290 = vst.msk [vmem:[%s263 + $0x1a8] sm:$0xff] %vm148, %v224
      %291 = vst.msk [vmem:[%s263 + $0x1b0] sm:$0xff] %vm148, %v225
      %292 = vst.msk [vmem:[%s263 + $0x1c8] sm:$0xff] %vm148, %v226
      %293 = vst.msk [vmem:[%s263 + $0x1d0] sm:$0xff] %vm148, %v227
      %294 = vst.msk [vmem:[%s263 + $0x1e8] sm:$0xff] %vm148, %v228
      %295 = vst.msk [vmem:[%s263 + $0x1f0] sm:$0xff] %vm148, %v229
      %v296 = vld [vmem:[#allocation2 + $0x6] sm:$0xff]
      %v297 = vld [vmem:[#allocation2 + $0xe] sm:$0xff]
      %v298 = vld [vmem:[#allocation2 + $0x16] sm:$0x7]
      %v299 = vld [vmem:[#allocation2 + $0x26] sm:$0xff]
      %v300 = vld [vmem:[#allocation2 + $0x2e] sm:$0xff]
      %v301 = vld [vmem:[#allocation2 + $0x36] sm:$0x7]
      %v302 = vld [vmem:[#allocation2 + $0x46] sm:$0xff]
      %v303 = vld [vmem:[#allocation2 + $0x4e] sm:$0xff]
      %v304 = vld [vmem:[#allocation2 + $0x56] sm:$0x7]
      %v305 = vld [vmem:[#allocation2 + $0x66] sm:$0xff]
      %v306 = vld [vmem:[#allocation2 + $0x6e] sm:$0xff]
      %v307 = vld [vmem:[#allocation2 + $0x76] sm:$0x7]
      %v308 = vld [vmem:[#allocation2 + $0x86] sm:$0xff]
      %v309 = vld [vmem:[#allocation2 + $0x8e] sm:$0xff]
      %v310 = vld [vmem:[#allocation2 + $0x96] sm:$0x7]
      %v311 = vld [vmem:[#allocation2 + $0xa6] sm:$0xff]
      %v312 = vld [vmem:[#allocation2 + $0xae] sm:$0xff]
      %v313 = vld [vmem:[#allocation2 + $0xb6] sm:$0x7]
      %v314 = vld [vmem:[#allocation2 + $0xc6] sm:$0xff]
      %v315 = vld [vmem:[#allocation2 + $0xce] sm:$0xff]
      %v316 = vld [vmem:[#allocation2 + $0xd6] sm:$0x7]
      %v317 = vld [vmem:[#allocation2 + $0xe6] sm:$0xff]
      %v318 = vld [vmem:[#allocation2 + $0xee] sm:$0xff]
      %v319 = vld [vmem:[#allocation2 + $0xf6] sm:$0x7]
      %v320 = vld [vmem:[#allocation2 + $0x106] sm:$0xff]
      %v321 = vld [vmem:[#allocation2 + $0x10e] sm:$0xff]
      %v322 = vld [vmem:[#allocation2 + $0x116] sm:$0x7]
      %v323 = vld [vmem:[#allocation2 + $0x126] sm:$0xff]
      %v324 = vld [vmem:[#allocation2 + $0x12e] sm:$0xff]
      %v325 = vld [vmem:[#allocation2 + $0x136] sm:$0x7]
      %v326 = vld [vmem:[#allocation2 + $0x146] sm:$0xff]
      %v327 = vld [vmem:[#allocation2 + $0x14e] sm:$0xff]
      %v328 = vld [vmem:[#allocation2 + $0x156] sm:$0x7]
      %v329 = vld [vmem:[#allocation2 + $0x166] sm:$0xff]
      %v330 = vld [vmem:[#allocation2 + $0x16e] sm:$0xff]
      %v331 = vld [vmem:[#allocation2 + $0x176] sm:$0x7]
      %v332 = vld [vmem:[#allocation2 + $0x186] sm:$0xff]
      %v333 = vld [vmem:[#allocation2 + $0x18e] sm:$0xff]
      %v334 = vld [vmem:[#allocation2 + $0x196] sm:$0x7]
      %v335 = vld [vmem:[#allocation2 + $0x1a6] sm:$0xff]
      %v336 = vld [vmem:[#allocation2 + $0x1ae] sm:$0xff]
      %v337 = vld [vmem:[#allocation2 + $0x1b6] sm:$0x7]
      %v338 = vld [vmem:[#allocation2 + $0x1c6] sm:$0xff]
      %v339 = vld [vmem:[#allocation2 + $0x1ce] sm:$0xff]
      %v340 = vld [vmem:[#allocation2 + $0x1d6] sm:$0x7]
      %v341 = vld [vmem:[#allocation2 + $0x1e6] sm:$0xff]
      %v342 = vld [vmem:[#allocation2 + $0x1ee] sm:$0xff]
      %v343 = vld [vmem:[#allocation2 + $0x1f6] sm:$0x7]
      %v344 = vld [vmem:[#allocation2 + $0x206] sm:$0xff]
      %v345 = vld [vmem:[#allocation2 + $0x20e] sm:$0xff]
      %v346 = vld [vmem:[#allocation2 + $0x216] sm:$0x7]
      %v347 = vld [vmem:[#allocation2 + $0x226] sm:$0xff]
      %v348 = vld [vmem:[#allocation2 + $0x22e] sm:$0xff]
      %v349 = vld [vmem:[#allocation2 + $0x236] sm:$0x7]
      %v350 = vld [vmem:[#allocation2 + $0x246] sm:$0xff]
      %v351 = vld [vmem:[#allocation2 + $0x24e] sm:$0xff]
      %v352 = vld [vmem:[#allocation2 + $0x256] sm:$0x7]
      %v353 = vld [vmem:[#allocation2 + $0x266] sm:$0xff]
      %v354 = vld [vmem:[#allocation2 + $0x26e] sm:$0xff]
      %v355 = vld [vmem:[#allocation2 + $0x276] sm:$0x7]
      %v356 = vld [vmem:[#allocation2 + $0x7] sm:$0xff]
      %v357 = vld [vmem:[#allocation2 + $0xf] sm:$0xff]
      %v358 = vld [vmem:[#allocation2 + $0x17] sm:$0x7]
      %v359 = vld [vmem:[#allocation2 + $0x27] sm:$0xff]
      %v360 = vld [vmem:[#allocation2 + $0x2f] sm:$0xff]
      %v361 = vld [vmem:[#allocation2 + $0x37] sm:$0x7]
      %v362 = vld [vmem:[#allocation2 + $0x47] sm:$0xff]
      %v363 = vld [vmem:[#allocation2 + $0x4f] sm:$0xff]
      %v364 = vld [vmem:[#allocation2 + $0x57] sm:$0x7]
      %v365 = vld [vmem:[#allocation2 + $0x67] sm:$0xff]
      %v366 = vld [vmem:[#allocation2 + $0x6f] sm:$0xff]
      %v367 = vld [vmem:[#allocation2 + $0x77] sm:$0x7]
      %v368 = vld [vmem:[#allocation2 + $0x87] sm:$0xff]
      %v369 = vld [vmem:[#allocation2 + $0x8f] sm:$0xff]
      %v370 = vld [vmem:[#allocation2 + $0x97] sm:$0x7]
      %v371 = vld [vmem:[#allocation2 + $0xa7] sm:$0xff]
      %v372 = vld [vmem:[#allocation2 + $0xaf] sm:$0xff]
      %v373 = vld [vmem:[#allocation2 + $0xb7] sm:$0x7]
      %v374 = vld [vmem:[#allocation2 + $0xc7] sm:$0xff]
      %v375 = vld [vmem:[#allocation2 + $0xcf] sm:$0xff]
      %v376 = vld [vmem:[#allocation2 + $0xd7] sm:$0x7]
      %v377 = vld [vmem:[#allocation2 + $0xe7] sm:$0xff]
      %v378 = vld [vmem:[#allocation2 + $0xef] sm:$0xff]
      %v379 = vld [vmem:[#allocation2 + $0xf7] sm:$0x7]
      %v380 = vld [vmem:[#allocation2 + $0x107] sm:$0xff]
      %v381 = vld [vmem:[#allocation2 + $0x10f] sm:$0xff]
      %v382 = vld [vmem:[#allocation2 + $0x117] sm:$0x7]
      %v383 = vld [vmem:[#allocation2 + $0x127] sm:$0xff]
      %v384 = vld [vmem:[#allocation2 + $0x12f] sm:$0xff]
      %v385 = vld [vmem:[#allocation2 + $0x137] sm:$0x7]
      %v386 = vld [vmem:[#allocation2 + $0x147] sm:$0xff]
      %v387 = vld [vmem:[#allocation2 + $0x14f] sm:$0xff]
      %v388 = vld [vmem:[#allocation2 + $0x157] sm:$0x7]
      %v389 = vld [vmem:[#allocation2 + $0x167] sm:$0xff]
      %v390 = vld [vmem:[#allocation2 + $0x16f] sm:$0xff]
      %v391 = vld [vmem:[#allocation2 + $0x177] sm:$0x7]
      %v392 = vld [vmem:[#allocation2 + $0x187] sm:$0xff]
      %v393 = vld [vmem:[#allocation2 + $0x18f] sm:$0xff]
      %v394 = vld [vmem:[#allocation2 + $0x197] sm:$0x7]
      %v395 = vld [vmem:[#allocation2 + $0x1a7] sm:$0xff]
      %v396 = vld [vmem:[#allocation2 + $0x1af] sm:$0xff]
      %v397 = vld [vmem:[#allocation2 + $0x1b7] sm:$0x7]
      %v398 = vld [vmem:[#allocation2 + $0x1c7] sm:$0xff]
      %v399 = vld [vmem:[#allocation2 + $0x1cf] sm:$0xff]
      %v400 = vld [vmem:[#allocation2 + $0x1d7] sm:$0x7]
      %v401 = vld [vmem:[#allocation2 + $0x1e7] sm:$0xff]
      %v402 = vld [vmem:[#allocation2 + $0x1ef] sm:$0xff]
      %v403 = vld [vmem:[#allocation2 + $0x1f7] sm:$0x7]
      %v404 = vld [vmem:[#allocation2 + $0x207] sm:$0xff]
      %v405 = vld [vmem:[#allocation2 + $0x20f] sm:$0xff]
      %v406 = vld [vmem:[#allocation2 + $0x217] sm:$0x7]
      %v407 = vld [vmem:[#allocation2 + $0x227] sm:$0xff]
      %v408 = vld [vmem:[#allocation2 + $0x22f] sm:$0xff]
      %v409 = vld [vmem:[#allocation2 + $0x237] sm:$0x7]
      %v410 = vld [vmem:[#allocation2 + $0x247] sm:$0xff]
      %v411 = vld [vmem:[#allocation2 + $0x24f] sm:$0xff]
      %v412 = vld [vmem:[#allocation2 + $0x257] sm:$0x7]
      %v413 = vld [vmem:[#allocation2 + $0x267] sm:$0xff]
      %v414 = vld [vmem:[#allocation2 + $0x26f] sm:$0xff]
      %v415 = vld [vmem:[#allocation2 + $0x277] sm:$0x7]
      %v416 = vmax.f32 %v296, %v356
      %v417 = vmax.f32 %v297, %v357
      %v418 = vmax.f32 %v298, %v358
      %v419 = vmax.f32 %v299, %v359
      %v420 = vmax.f32 %v300, %v360
      %v421 = vmax.f32 %v301, %v361
      %v422 = vmax.f32 %v302, %v362
      %v423 = vmax.f32 %v303, %v363
      %v424 = vmax.f32 %v304, %v364
      %v425 = vmax.f32 %v305, %v365
      %v426 = vmax.f32 %v306, %v366
      %v427 = vmax.f32 %v307, %v367
      %v428 = vmax.f32 %v308, %v368
      %v429 = vmax.f32 %v309, %v369
      %v430 = vmax.f32 %v310, %v370
      %v431 = vmax.f32 %v311, %v371
      %v432 = vmax.f32 %v312, %v372
      %v433 = vmax.f32 %v313, %v373
      %v434 = vmax.f32 %v314, %v374
      %v435 = vmax.f32 %v315, %v375
      %v436 = vmax.f32 %v316, %v376
      %v437 = vmax.f32 %v317, %v377
      %v438 = vmax.f32 %v318, %v378
      %v439 = vmax.f32 %v319, %v379
      %v440 = vmax.f32 %v320, %v380
      %v441 = vmax.f32 %v321, %v381
      %v442 = vmax.f32 %v322, %v382
      %v443 = vmax.f32 %v323, %v383
      %v444 = vmax.f32 %v324, %v384
      %v445 = vmax.f32 %v325, %v385
      %v446 = vmax.f32 %v326, %v386
      %v447 = vmax.f32 %v327, %v387
      %v448 = vmax.f32 %v328, %v388
      %v449 = vmax.f32 %v329, %v389
      %v450 = vmax.f32 %v330, %v390
      %v451 = vmax.f32 %v331, %v391
      %v452 = vmax.f32 %v332, %v392
      %v453 = vmax.f32 %v333, %v393
      %v454 = vmax.f32 %v334, %v394
      %v455 = vmax.f32 %v335, %v395
      %v456 = vmax.f32 %v336, %v396
      %v457 = vmax.f32 %v337, %v397
      %v458 = vmax.f32 %v338, %v398
      %v459 = vmax.f32 %v339, %v399
      %v460 = vmax.f32 %v340, %v400
      %v461 = vmax.f32 %v341, %v401
      %v462 = vmax.f32 %v342, %v402
      %v463 = vmax.f32 %v343, %v403
      %v464 = vmax.f32 %v344, %v404
      %v465 = vmax.f32 %v345, %v405
      %v466 = vmax.f32 %v346, %v406
      %v467 = vmax.f32 %v347, %v407
      %v468 = vmax.f32 %v348, %v408
      %v469 = vmax.f32 %v349, %v409
      %v470 = vmax.f32 %v350, %v410
      %v471 = vmax.f32 %v351, %v411
      %v472 = vmax.f32 %v352, %v412
      %v473 = vmax.f32 %v353, %v413
      %v474 = vmax.f32 %v354, %v414
      %v475 = vmax.f32 %v355, %v415
      %vm536 = vcmask 1045504
      %v537 = vrot.slane %v416, 2
      %v538 = vrot.slane %v417, 2
      %v539 = vsel %vm536, %v537, %v538
      %v540 = vrot.slane %v418, 2
      %v541 = vsel %vm536, %v538, %v540
      %v542 = vrot.slane %v419, 2
      %v543 = vrot.slane %v420, 2
      %v544 = vsel %vm536, %v542, %v543
      %v545 = vrot.slane %v421, 2
      %v546 = vsel %vm536, %v543, %v545
      %v547 = vrot.slane %v422, 2
      %v548 = vrot.slane %v423, 2
      %v549 = vsel %vm536, %v547, %v548
      %v550 = vrot.slane %v424, 2
      %v551 = vsel %vm536, %v548, %v550
      %v552 = vrot.slane %v425, 2
      %v553 = vrot.slane %v426, 2
      %v554 = vsel %vm536, %v552, %v553
      %v555 = vrot.slane %v427, 2
      %v556 = vsel %vm536, %v553, %v555
      %v557 = vrot.slane %v428, 2
      %v558 = vrot.slane %v429, 2
      %v559 = vsel %vm536, %v557, %v558
      %v560 = vrot.slane %v430, 2
      %v561 = vsel %vm536, %v558, %v560
      %v562 = vrot.slane %v431, 2
      %v563 = vrot.slane %v432, 2
      %v564 = vsel %vm536, %v562, %v563
      %v565 = vrot.slane %v433, 2
      %v566 = vsel %vm536, %v563, %v565
      %v567 = vrot.slane %v434, 2
      %v568 = vrot.slane %v435, 2
      %v569 = vsel %vm536, %v567, %v568
      %v570 = vrot.slane %v436, 2
      %v571 = vsel %vm536, %v568, %v570
      %v572 = vrot.slane %v437, 2
      %v573 = vrot.slane %v438, 2
      %v574 = vsel %vm536, %v572, %v573
      %v575 = vrot.slane %v439, 2
      %v576 = vsel %vm536, %v573, %v575
      %v577 = vrot.slane %v440, 2
      %v578 = vrot.slane %v441, 2
      %v579 = vsel %vm536, %v577, %v578
      %v580 = vrot.slane %v442, 2
      %v581 = vsel %vm536, %v578, %v580
      %v582 = vrot.slane %v443, 2
      %v583 = vrot.slane %v444, 2
      %v584 = vsel %vm536, %v582, %v583
      %v585 = vrot.slane %v445, 2
      %v586 = vsel %vm536, %v583, %v585
      %v587 = vrot.slane %v446, 2
      %v588 = vrot.slane %v447, 2
      %v589 = vsel %vm536, %v587, %v588
      %v590 = vrot.slane %v448, 2
      %v591 = vsel %vm536, %v588, %v590
      %v592 = vrot.slane %v449, 2
      %v593 = vrot.slane %v450, 2
      %v594 = vsel %vm536, %v592, %v593
      %v595 = vrot.slane %v451, 2
      %v596 = vsel %vm536, %v593, %v595
      %v597 = vrot.slane %v452, 2
      %v598 = vrot.slane %v453, 2
      %v599 = vsel %vm536, %v597, %v598
      %v600 = vrot.slane %v454, 2
      %v601 = vsel %vm536, %v598, %v600
      %v602 = vrot.slane %v455, 2
      %v603 = vrot.slane %v456, 2
      %v604 = vsel %vm536, %v602, %v603
      %v605 = vrot.slane %v457, 2
      %v606 = vsel %vm536, %v603, %v605
      %v607 = vrot.slane %v458, 2
      %v608 = vrot.slane %v459, 2
      %v609 = vsel %vm536, %v607, %v608
      %v610 = vrot.slane %v460, 2
      %v611 = vsel %vm536, %v608, %v610
      %v612 = vrot.slane %v461, 2
      %v613 = vrot.slane %v462, 2
      %v614 = vsel %vm536, %v612, %v613
      %v615 = vrot.slane %v463, 2
      %v616 = vsel %vm536, %v613, %v615
      %v617 = vrot.slane %v464, 2
      %v618 = vrot.slane %v465, 2
      %v619 = vsel %vm536, %v617, %v618
      %v620 = vrot.slane %v466, 2
      %v621 = vsel %vm536, %v618, %v620
      %v622 = vrot.slane %v467, 2
      %v623 = vrot.slane %v468, 2
      %v624 = vsel %vm536, %v622, %v623
      %v625 = vrot.slane %v469, 2
      %v626 = vsel %vm536, %v623, %v625
      %v627 = vrot.slane %v470, 2
      %v628 = vrot.slane %v471, 2
      %v629 = vsel %vm536, %v627, %v628
      %v630 = vrot.slane %v472, 2
      %v631 = vsel %vm536, %v628, %v630
      %v632 = vrot.slane %v473, 2
      %v633 = vrot.slane %v474, 2
      %v634 = vsel %vm536, %v632, %v633
      %v635 = vrot.slane %v475, 2
      %v636 = vsel %vm536, %v633, %v635
      %v697 = vmax.f32 %v416, %v539
      %v698 = vmax.f32 %v417, %v541
      %v699 = vmax.f32 %v418, %v540
      %v700 = vmax.f32 %v419, %v544
      %v701 = vmax.f32 %v420, %v546
      %v702 = vmax.f32 %v421, %v545
      %v703 = vmax.f32 %v422, %v549
      %v704 = vmax.f32 %v423, %v551
      %v705 = vmax.f32 %v424, %v550
      %v706 = vmax.f32 %v425, %v554
      %v707 = vmax.f32 %v426, %v556
      %v708 = vmax.f32 %v427, %v555
      %v709 = vmax.f32 %v428, %v559
      %v710 = vmax.f32 %v429, %v561
      %v711 = vmax.f32 %v430, %v560
      %v712 = vmax.f32 %v431, %v564
      %v713 = vmax.f32 %v432, %v566
      %v714 = vmax.f32 %v433, %v565
      %v715 = vmax.f32 %v434, %v569
      %v716 = vmax.f32 %v435, %v571
      %v717 = vmax.f32 %v436, %v570
      %v718 = vmax.f32 %v437, %v574
      %v719 = vmax.f32 %v438, %v576
      %v720 = vmax.f32 %v439, %v575
      %v721 = vmax.f32 %v440, %v579
      %v722 = vmax.f32 %v441, %v581
      %v723 = vmax.f32 %v442, %v580
      %v724 = vmax.f32 %v443, %v584
      %v725 = vmax.f32 %v444, %v586
      %v726 = vmax.f32 %v445, %v585
      %v727 = vmax.f32 %v446, %v589
      %v728 = vmax.f32 %v447, %v591
      %v729 = vmax.f32 %v448, %v590
      %v730 = vmax.f32 %v449, %v594
      %v731 = vmax.f32 %v450, %v596
      %v732 = vmax.f32 %v451, %v595
      %v733 = vmax.f32 %v452, %v599
      %v734 = vmax.f32 %v453, %v601
      %v735 = vmax.f32 %v454, %v600
      %v736 = vmax.f32 %v455, %v604
      %v737 = vmax.f32 %v456, %v606
      %v738 = vmax.f32 %v457, %v605
      %v739 = vmax.f32 %v458, %v609
      %v740 = vmax.f32 %v459, %v611
      %v741 = vmax.f32 %v460, %v610
      %v742 = vmax.f32 %v461, %v614
      %v743 = vmax.f32 %v462, %v616
      %v744 = vmax.f32 %v463, %v615
      %v745 = vmax.f32 %v464, %v619
      %v746 = vmax.f32 %v465, %v621
      %v747 = vmax.f32 %v466, %v620
      %v748 = vmax.f32 %v467, %v624
      %v749 = vmax.f32 %v468, %v626
      %v750 = vmax.f32 %v469, %v625
      %v751 = vmax.f32 %v470, %v629
      %v752 = vmax.f32 %v471, %v631
      %v753 = vmax.f32 %v472, %v630
      %v754 = vmax.f32 %v473, %v634
      %v755 = vmax.f32 %v474, %v636
      %v756 = vmax.f32 %v475, %v635
      %vm817 = vcmask 1046528
      %v818 = vrot.slane %v697, 1
      %v819 = vrot.slane %v698, 1
      %v820 = vsel %vm817, %v818, %v819
      %v821 = vrot.slane %v699, 1
      %v822 = vsel %vm817, %v819, %v821
      %v823 = vrot.slane %v700, 1
      %v824 = vrot.slane %v701, 1
      %v825 = vsel %vm817, %v823, %v824
      %v826 = vrot.slane %v702, 1
      %v827 = vsel %vm817, %v824, %v826
      %v828 = vrot.slane %v703, 1
      %v829 = vrot.slane %v704, 1
      %v830 = vsel %vm817, %v828, %v829
      %v831 = vrot.slane %v705, 1
      %v832 = vsel %vm817, %v829, %v831
      %v833 = vrot.slane %v706, 1
      %v834 = vrot.slane %v707, 1
      %v835 = vsel %vm817, %v833, %v834
      %v836 = vrot.slane %v708, 1
      %v837 = vsel %vm817, %v834, %v836
      %v838 = vrot.slane %v709, 1
      %v839 = vrot.slane %v710, 1
      %v840 = vsel %vm817, %v838, %v839
      %v841 = vrot.slane %v711, 1
      %v842 = vsel %vm817, %v839, %v841
      %v843 = vrot.slane %v712, 1
      %v844 = vrot.slane %v713, 1
      %v845 = vsel %vm817, %v843, %v844
      %v846 = vrot.slane %v714, 1
      %v847 = vsel %vm817, %v844, %v846
      %v848 = vrot.slane %v715, 1
      %v849 = vrot.slane %v716, 1
      %v850 = vsel %vm817, %v848, %v849
      %v851 = vrot.slane %v717, 1
      %v852 = vsel %vm817, %v849, %v851
      %v853 = vrot.slane %v718, 1
      %v854 = vrot.slane %v719, 1
      %v855 = vsel %vm817, %v853, %v854
      %v856 = vrot.slane %v720, 1
      %v857 = vsel %vm817, %v854, %v856
      %v858 = vrot.slane %v721, 1
      %v859 = vrot.slane %v722, 1
      %v860 = vsel %vm817, %v858, %v859
      %v861 = vrot.slane %v723, 1
      %v862 = vsel %vm817, %v859, %v861
      %v863 = vrot.slane %v724, 1
      %v864 = vrot.slane %v725, 1
      %v865 = vsel %vm817, %v863, %v864
      %v866 = vrot.slane %v726, 1
      %v867 = vsel %vm817, %v864, %v866
      %v868 = vrot.slane %v727, 1
      %v869 = vrot.slane %v728, 1
      %v870 = vsel %vm817, %v868, %v869
      %v871 = vrot.slane %v729, 1
      %v872 = vsel %vm817, %v869, %v871
      %v873 = vrot.slane %v730, 1
      %v874 = vrot.slane %v731, 1
      %v875 = vsel %vm817, %v873, %v874
      %v876 = vrot.slane %v732, 1
      %v877 = vsel %vm817, %v874, %v876
      %v878 = vrot.slane %v733, 1
      %v879 = vrot.slane %v734, 1
      %v880 = vsel %vm817, %v878, %v879
      %v881 = vrot.slane %v735, 1
      %v882 = vsel %vm817, %v879, %v881
      %v883 = vrot.slane %v736, 1
      %v884 = vrot.slane %v737, 1
      %v885 = vsel %vm817, %v883, %v884
      %v886 = vrot.slane %v738, 1
      %v887 = vsel %vm817, %v884, %v886
      %v888 = vrot.slane %v739, 1
      %v889 = vrot.slane %v740, 1
      %v890 = vsel %vm817, %v888, %v889
      %v891 = vrot.slane %v741, 1
      %v892 = vsel %vm817, %v889, %v891
      %v893 = vrot.slane %v742, 1
      %v894 = vrot.slane %v743, 1
      %v895 = vsel %vm817, %v893, %v894
      %v896 = vrot.slane %v744, 1
      %v897 = vsel %vm817, %v894, %v896
      %v898 = vrot.slane %v745, 1
      %v899 = vrot.slane %v746, 1
      %v900 = vsel %vm817, %v898, %v899
      %v901 = vrot.slane %v747, 1
      %v902 = vsel %vm817, %v899, %v901
      %v903 = vrot.slane %v748, 1
      %v904 = vrot.slane %v749, 1
      %v905 = vsel %vm817, %v903, %v904
      %v906 = vrot.slane %v750, 1
      %v907 = vsel %vm817, %v904, %v906
      %v908 = vrot.slane %v751, 1
      %v909 = vrot.slane %v752, 1
      %v910 = vsel %vm817, %v908, %v909
      %v911 = vrot.slane %v753, 1
      %v912 = vsel %vm817, %v909, %v911
      %v913 = vrot.slane %v754, 1
      %v914 = vrot.slane %v755, 1
      %v915 = vsel %vm817, %v913, %v914
      %v916 = vrot.slane %v756, 1
      %v917 = vsel %vm817, %v914, %v916
      %v958 = vmax.f32 %v697, %v820
      %v959 = vmax.f32 %v698, %v822
      %v960 = vmax.f32 %v700, %v825
      %v961 = vmax.f32 %v701, %v827
      %v962 = vmax.f32 %v703, %v830
      %v963 = vmax.f32 %v704, %v832
      %v964 = vmax.f32 %v706, %v835
      %v965 = vmax.f32 %v707, %v837
      %v966 = vmax.f32 %v709, %v840
      %v967 = vmax.f32 %v710, %v842
      %v968 = vmax.f32 %v712, %v845
      %v969 = vmax.f32 %v713, %v847
      %v970 = vmax.f32 %v715, %v850
      %v971 = vmax.f32 %v716, %v852
      %v972 = vmax.f32 %v718, %v855
      %v973 = vmax.f32 %v719, %v857
      %v974 = vmax.f32 %v721, %v860
      %v975 = vmax.f32 %v722, %v862
      %v976 = vmax.f32 %v724, %v865
      %v977 = vmax.f32 %v725, %v867
      %v978 = vmax.f32 %v727, %v870
      %v979 = vmax.f32 %v728, %v872
      %v980 = vmax.f32 %v730, %v875
      %v981 = vmax.f32 %v731, %v877
      %v982 = vmax.f32 %v733, %v880
      %v983 = vmax.f32 %v734, %v882
      %v984 = vmax.f32 %v736, %v885
      %v985 = vmax.f32 %v737, %v887
      %v986 = vmax.f32 %v739, %v890
      %v987 = vmax.f32 %v740, %v892
      %v988 = vmax.f32 %v742, %v895
      %v989 = vmax.f32 %v743, %v897
      %v990 = vmax.f32 %v745, %v900
      %v991 = vmax.f32 %v746, %v902
      %v992 = vmax.f32 %v748, %v905
      %v993 = vmax.f32 %v749, %v907
      %v994 = vmax.f32 %v751, %v910
      %v995 = vmax.f32 %v752, %v912
      %v996 = vmax.f32 %v754, %v915
      %v997 = vmax.f32 %v755, %v917
      %998 = vst.msk [vmem:[#allocation3] sm:$0xff] %vm148, %v958
      %999 = vst.msk [vmem:[#allocation3 + $0x8] sm:$0xff] %vm148, %v959
      %1000 = vst.msk [vmem:[#allocation3 + $0x10] sm:$0xff] %vm148, %v960
      %1001 = vst.msk [vmem:[#allocation3 + $0x18] sm:$0xff] %vm148, %v961
      %1002 = vst.msk [vmem:[#allocation3 + $0x20] sm:$0xff] %vm148, %v962
      %1003 = vst.msk [vmem:[#allocation3 + $0x28] sm:$0xff] %vm148, %v963
      %1004 = vst.msk [vmem:[#allocation3 + $0x30] sm:$0xff] %vm148, %v964
      %1005 = vst.msk [vmem:[#allocation3 + $0x38] sm:$0xff] %vm148, %v965
      %1006 = vst.msk [vmem:[#allocation3 + $0x40] sm:$0xff] %vm148, %v966
      %1007 = vst.msk [vmem:[#allocation3 + $0x48] sm:$0xff] %vm148, %v967
      %1008 = vst.msk [vmem:[#allocation3 + $0x50] sm:$0xff] %vm148, %v968
      %1009 = vst.msk [vmem:[#allocation3 + $0x58] sm:$0xff] %vm148, %v969
      %1010 = vst.msk [vmem:[#allocation3 + $0x60] sm:$0xff] %vm148, %v970
      %1011 = vst.msk [vmem:[#allocation3 + $0x68] sm:$0xff] %vm148, %v971
      %1012 = vst.msk [vmem:[#allocation3 + $0x70] sm:$0xff] %vm148, %v972
      %1013 = vst.msk [vmem:[#allocation3 + $0x78] sm:$0xff] %vm148, %v973
      %1014 = vst.msk [vmem:[#allocation3 + $0x80] sm:$0xff] %vm148, %v974
      %1015 = vst.msk [vmem:[#allocation3 + $0x88] sm:$0xff] %vm148, %v975
      %1016 = vst.msk [vmem:[#allocation3 + $0x90] sm:$0xff] %vm148, %v976
      %1017 = vst.msk [vmem:[#allocation3 + $0x98] sm:$0xff] %vm148, %v977
      %1018 = vst.msk [vmem:[#allocation3 + $0xa0] sm:$0xff] %vm148, %v978
      %1019 = vst.msk [vmem:[#allocation3 + $0xa8] sm:$0xff] %vm148, %v979
      %1020 = vst.msk [vmem:[#allocation3 + $0xb0] sm:$0xff] %vm148, %v980
      %1021 = vst.msk [vmem:[#allocation3 + $0xb8] sm:$0xff] %vm148, %v981
      %1022 = vst.msk [vmem:[#allocation3 + $0xc0] sm:$0xff] %vm148, %v982
      %1023 = vst.msk [vmem:[#allocation3 + $0xc8] sm:$0xff] %vm148, %v983
      %1024 = vst.msk [vmem:[#allocation3 + $0xd0] sm:$0xff] %vm148, %v984
      %1025 = vst.msk [vmem:[#allocation3 + $0xd8] sm:$0xff] %vm148, %v985
      %1026 = vst.msk [vmem:[#allocation3 + $0xe0] sm:$0xff] %vm148, %v986
      %1027 = vst.msk [vmem:[#allocation3 + $0xe8] sm:$0xff] %vm148, %v987
      %1028 = vst.msk [vmem:[#allocation3 + $0xf0] sm:$0xff] %vm148, %v988
      %1029 = vst.msk [vmem:[#allocation3 + $0xf8] sm:$0xff] %vm148, %v989
      %1030 = vst.msk [vmem:[#allocation3 + $0x100] sm:$0xff] %vm148, %v990
      %1031 = vst.msk [vmem:[#allocation3 + $0x108] sm:$0xff] %vm148, %v991
      %1032 = vst.msk [vmem:[#allocation3 + $0x110] sm:$0xff] %vm148, %v992
      %1033 = vst.msk [vmem:[#allocation3 + $0x118] sm:$0xff] %vm148, %v993
      %1034 = vst.msk [vmem:[#allocation3 + $0x120] sm:$0xff] %vm148, %v994
      %1035 = vst.msk [vmem:[#allocation3 + $0x128] sm:$0xff] %vm148, %v995
      %1036 = vst.msk [vmem:[#allocation3 + $0x130] sm:$0xff] %vm148, %v996
      %1037 = vst.msk [vmem:[#allocation3 + $0x138] sm:$0xff] %vm148, %v997
      %v1038 = vld [vmem:[#allocation3] sm:$0xff]
      %v1039 = vld [vmem:[#allocation3 + $0x8] sm:$0xff]
      %v1040 = vld [vmem:[#allocation3 + $0x10] sm:$0xff]
      %v1041 = vld [vmem:[#allocation3 + $0x18] sm:$0xff]
      %v1042 = vld [vmem:[#allocation3 + $0x20] sm:$0xff]
      %v1043 = vld [vmem:[#allocation3 + $0x28] sm:$0xff]
      %v1044 = vld [vmem:[#allocation3 + $0x30] sm:$0xff]
      %v1045 = vld [vmem:[#allocation3 + $0x38] sm:$0xff]
      %v1046 = vld [vmem:[#allocation3 + $0x40] sm:$0xff]
      %v1047 = vld [vmem:[#allocation3 + $0x48] sm:$0xff]
      %v1048 = vld [vmem:[#allocation3 + $0x50] sm:$0xff]
      %v1049 = vld [vmem:[#allocation3 + $0x58] sm:$0xff]
      %v1050 = vld [vmem:[#allocation3 + $0x60] sm:$0xff]
      %v1051 = vld [vmem:[#allocation3 + $0x68] sm:$0xff]
      %v1052 = vld [vmem:[#allocation3 + $0x70] sm:$0xff]
      %v1053 = vld [vmem:[#allocation3 + $0x78] sm:$0xff]
      %v1054 = vld [vmem:[#allocation3 + $0x80] sm:$0xff]
      %v1055 = vld [vmem:[#allocation3 + $0x88] sm:$0xff]
      %v1056 = vld [vmem:[#allocation3 + $0x90] sm:$0xff]
      %v1057 = vld [vmem:[#allocation3 + $0x98] sm:$0xff]
      %v1058 = vld [vmem:[#allocation3 + $0xa0] sm:$0xff]
      %v1059 = vld [vmem:[#allocation3 + $0xa8] sm:$0xff]
      %v1060 = vld [vmem:[#allocation3 + $0xb0] sm:$0xff]
      %v1061 = vld [vmem:[#allocation3 + $0xb8] sm:$0xff]
      %v1062 = vld [vmem:[#allocation3 + $0xc0] sm:$0xff]
      %v1063 = vld [vmem:[#allocation3 + $0xc8] sm:$0xff]
      %v1064 = vld [vmem:[#allocation3 + $0xd0] sm:$0xff]
      %v1065 = vld [vmem:[#allocation3 + $0xd8] sm:$0xff]
      %v1066 = vld [vmem:[#allocation3 + $0xe0] sm:$0xff]
      %v1067 = vld [vmem:[#allocation3 + $0xe8] sm:$0xff]
      %v1068 = vld [vmem:[#allocation3 + $0xf0] sm:$0xff]
      %v1069 = vld [vmem:[#allocation3 + $0xf8] sm:$0xff]
      %v1070 = vld [vmem:[#allocation3 + $0x100] sm:$0xff]
      %v1071 = vld [vmem:[#allocation3 + $0x108] sm:$0xff]
      %v1072 = vld [vmem:[#allocation3 + $0x110] sm:$0xff]
      %v1073 = vld [vmem:[#allocation3 + $0x118] sm:$0xff]
      %v1074 = vld [vmem:[#allocation3 + $0x120] sm:$0xff]
      %v1075 = vld [vmem:[#allocation3 + $0x128] sm:$0xff]
      %s1076 = scalar_lea.vmem [#allocation3], 16
      %v1077 = vld [vmem:[%s1076] sm:$0xff]
      %v1078 = vld [vmem:[%s1076 + $0x8] sm:$0xff]
      %v1079 = vld [vmem:[%s1076 + $0x10] sm:$0xff]
      %v1080 = vld [vmem:[%s1076 + $0x18] sm:$0xff]
      %v1081 = vld [vmem:[%s1076 + $0x20] sm:$0xff]
      %v1082 = vld [vmem:[%s1076 + $0x28] sm:$0xff]
      %v1083 = vld [vmem:[%s1076 + $0x30] sm:$0xff]
      %v1084 = vld [vmem:[%s1076 + $0x38] sm:$0xff]
      %v1085 = vld [vmem:[%s1076 + $0x40] sm:$0xff]
      %v1086 = vld [vmem:[%s1076 + $0x48] sm:$0xff]
      %v1087 = vld [vmem:[%s1076 + $0x50] sm:$0xff]
      %v1088 = vld [vmem:[%s1076 + $0x58] sm:$0xff]
      %v1089 = vld [vmem:[%s1076 + $0x60] sm:$0xff]
      %v1090 = vld [vmem:[%s1076 + $0x68] sm:$0xff]
      %v1091 = vld [vmem:[%s1076 + $0x70] sm:$0xff]
      %v1092 = vld [vmem:[%s1076 + $0x78] sm:$0xff]
      %v1093 = vld [vmem:[%s1076 + $0x80] sm:$0xff]
      %v1094 = vld [vmem:[%s1076 + $0x88] sm:$0xff]
      %v1095 = vld [vmem:[%s1076 + $0x90] sm:$0xff]
      %v1096 = vld [vmem:[%s1076 + $0x98] sm:$0xff]
      %v1097 = vld [vmem:[%s1076 + $0xa0] sm:$0xff]
      %v1098 = vld [vmem:[%s1076 + $0xa8] sm:$0xff]
      %v1099 = vld [vmem:[%s1076 + $0xb0] sm:$0xff]
      %v1100 = vld [vmem:[%s1076 + $0xb8] sm:$0xff]
      %v1101 = vld [vmem:[%s1076 + $0xc0] sm:$0xff]
      %v1102 = vld [vmem:[%s1076 + $0xc8] sm:$0xff]
      %v1103 = vld [vmem:[%s1076 + $0xd0] sm:$0xff]
      %v1104 = vld [vmem:[%s1076 + $0xd8] sm:$0xff]
      %v1105 = vld [vmem:[%s1076 + $0xe0] sm:$0xff]
      %v1106 = vld [vmem:[%s1076 + $0xe8] sm:$0xff]
      %v1107 = vld [vmem:[%s1076 + $0xf0] sm:$0xff]
      %v1108 = vld [vmem:[%s1076 + $0xf8] sm:$0xff]
      %v1109 = vld [vmem:[%s1076 + $0x100] sm:$0xff]
      %v1110 = vld [vmem:[%s1076 + $0x108] sm:$0xff]
      %v1111 = vld [vmem:[%s1076 + $0x110] sm:$0xff]
      %v1112 = vld [vmem:[%s1076 + $0x118] sm:$0xff]
      %v1113 = vld [vmem:[%s1076 + $0x120] sm:$0xff]
      %v1114 = vld [vmem:[%s1076 + $0x128] sm:$0xff]
      %v1115 = vmax.f32 %v1038, %v1077
      %v1116 = vmax.f32 %v1039, %v1078
      %v1117 = vmax.f32 %v1040, %v1079
      %v1118 = vmax.f32 %v1041, %v1080
      %v1119 = vmax.f32 %v1042, %v1081
      %v1120 = vmax.f32 %v1043, %v1082
      %v1121 = vmax.f32 %v1044, %v1083
      %v1122 = vmax.f32 %v1045, %v1084
      %v1123 = vmax.f32 %v1046, %v1085
      %v1124 = vmax.f32 %v1047, %v1086
      %v1125 = vmax.f32 %v1048, %v1087
      %v1126 = vmax.f32 %v1049, %v1088
      %v1127 = vmax.f32 %v1050, %v1089
      %v1128 = vmax.f32 %v1051, %v1090
      %v1129 = vmax.f32 %v1052, %v1091
      %v1130 = vmax.f32 %v1053, %v1092
      %v1131 = vmax.f32 %v1054, %v1093
      %v1132 = vmax.f32 %v1055, %v1094
      %v1133 = vmax.f32 %v1056, %v1095
      %v1134 = vmax.f32 %v1057, %v1096
      %v1135 = vmax.f32 %v1058, %v1097
      %v1136 = vmax.f32 %v1059, %v1098
      %v1137 = vmax.f32 %v1060, %v1099
      %v1138 = vmax.f32 %v1061, %v1100
      %v1139 = vmax.f32 %v1062, %v1101
      %v1140 = vmax.f32 %v1063, %v1102
      %v1141 = vmax.f32 %v1064, %v1103
      %v1142 = vmax.f32 %v1065, %v1104
      %v1143 = vmax.f32 %v1066, %v1105
      %v1144 = vmax.f32 %v1067, %v1106
      %v1145 = vmax.f32 %v1068, %v1107
      %v1146 = vmax.f32 %v1069, %v1108
      %v1147 = vmax.f32 %v1070, %v1109
      %v1148 = vmax.f32 %v1071, %v1110
      %v1149 = vmax.f32 %v1072, %v1111
      %v1150 = vmax.f32 %v1073, %v1112
      %v1151 = vmax.f32 %v1074, %v1113
      %v1152 = vmax.f32 %v1075, %v1114
      %v1153 = vmax.f32 %v1115, %v1119
      %v1154 = vmax.f32 %v1116, %v1120
      %v1155 = vmax.f32 %v1117, %v1121
      %v1156 = vmax.f32 %v1118, %v1122
      %v1157 = vmax.f32 %v1119, %v1123
      %v1158 = vmax.f32 %v1120, %v1124
      %v1159 = vmax.f32 %v1121, %v1125
      %v1160 = vmax.f32 %v1122, %v1126
      %v1161 = vmax.f32 %v1123, %v1127
      %v1162 = vmax.f32 %v1124, %v1128
      %v1163 = vmax.f32 %v1125, %v1129
      %v1164 = vmax.f32 %v1126, %v1130
      %v1165 = vmax.f32 %v1127, %v1131
      %v1166 = vmax.f32 %v1128, %v1132
      %v1167 = vmax.f32 %v1129, %v1133
      %v1168 = vmax.f32 %v1130, %v1134
      %v1169 = vmax.f32 %v1131, %v1135
      %v1170 = vmax.f32 %v1132, %v1136
      %v1171 = vmax.f32 %v1133, %v1137
      %v1172 = vmax.f32 %v1134, %v1138
      %v1173 = vmax.f32 %v1135, %v1139
      %v1174 = vmax.f32 %v1136, %v1140
      %v1175 = vmax.f32 %v1137, %v1141
      %v1176 = vmax.f32 %v1138, %v1142
      %v1177 = vmax.f32 %v1139, %v1143
      %v1178 = vmax.f32 %v1140, %v1144
      %v1179 = vmax.f32 %v1141, %v1145
      %v1180 = vmax.f32 %v1142, %v1146
      %v1181 = vmax.f32 %v1143, %v1147
      %v1182 = vmax.f32 %v1144, %v1148
      %v1183 = vmax.f32 %v1145, %v1149
      %v1184 = vmax.f32 %v1146, %v1150
      %v1185 = vmax.f32 %v1147, %v1151
      %v1186 = vmax.f32 %v1148, %v1152
      %v1187 = vmax.f32 %v1153, %v1155
      %v1188 = vmax.f32 %v1154, %v1156
      %v1189 = vmax.f32 %v1155, %v1157
      %v1190 = vmax.f32 %v1156, %v1158
      %v1191 = vmax.f32 %v1157, %v1159
      %v1192 = vmax.f32 %v1158, %v1160
      %v1193 = vmax.f32 %v1159, %v1161
      %v1194 = vmax.f32 %v1160, %v1162
      %v1195 = vmax.f32 %v1161, %v1163
      %v1196 = vmax.f32 %v1162, %v1164
      %v1197 = vmax.f32 %v1163, %v1165
      %v1198 = vmax.f32 %v1164, %v1166
      %v1199 = vmax.f32 %v1165, %v1167
      %v1200 = vmax.f32 %v1166, %v1168
      %v1201 = vmax.f32 %v1167, %v1169
      %v1202 = vmax.f32 %v1168, %v1170
      %v1203 = vmax.f32 %v1169, %v1171
      %v1204 = vmax.f32 %v1170, %v1172
      %v1205 = vmax.f32 %v1171, %v1173
      %v1206 = vmax.f32 %v1172, %v1174
      %v1207 = vmax.f32 %v1173, %v1175
      %v1208 = vmax.f32 %v1174, %v1176
      %v1209 = vmax.f32 %v1175, %v1177
      %v1210 = vmax.f32 %v1176, %v1178
      %v1211 = vmax.f32 %v1177, %v1179
      %v1212 = vmax.f32 %v1178, %v1180
      %v1213 = vmax.f32 %v1179, %v1181
      %v1214 = vmax.f32 %v1180, %v1182
      %v1215 = vmax.f32 %v1181, %v1183
      %v1216 = vmax.f32 %v1182, %v1184
      %v1217 = vmax.f32 %v1183, %v1185
      %v1218 = vmax.f32 %v1184, %v1186
      %s1219 = scalar_lea.vmem %s147, 512
      %1220 = vst.msk [vmem:[%s1219] sm:$0xff] %vm148, %v1187
      %1221 = vst.msk [vmem:[%s1219 + $0x8] sm:$0xff] %vm148, %v1188
      %1222 = vst.msk [vmem:[%s1219 + $0x10] sm:$0xff] %vm148, %v1189
      %1223 = vst.msk [vmem:[%s1219 + $0x18] sm:$0xff] %vm148, %v1190
      %1224 = vst.msk [vmem:[%s1219 + $0x20] sm:$0xff] %vm148, %v1191
      %1225 = vst.msk [vmem:[%s1219 + $0x28] sm:$0xff] %vm148, %v1192
      %1226 = vst.msk [vmem:[%s1219 + $0x30] sm:$0xff] %vm148, %v1193
      %1227 = vst.msk [vmem:[%s1219 + $0x38] sm:$0xff] %vm148, %v1194
      %1228 = vst.msk [vmem:[%s1219 + $0x40] sm:$0xff] %vm148, %v1195
      %1229 = vst.msk [vmem:[%s1219 + $0x48] sm:$0xff] %vm148, %v1196
      %1230 = vst.msk [vmem:[%s1219 + $0x50] sm:$0xff] %vm148, %v1197
      %1231 = vst.msk [vmem:[%s1219 + $0x58] sm:$0xff] %vm148, %v1198
      %1232 = vst.msk [vmem:[%s1219 + $0x60] sm:$0xff] %vm148, %v1199
      %1233 = vst.msk [vmem:[%s1219 + $0x68] sm:$0xff] %vm148, %v1200
      %1234 = vst.msk [vmem:[%s1219 + $0x70] sm:$0xff] %vm148, %v1201
      %1235 = vst.msk [vmem:[%s1219 + $0x78] sm:$0xff] %vm148, %v1202
      %1236 = vst.msk [vmem:[%s1219 + $0x80] sm:$0xff] %vm148, %v1203
      %1237 = vst.msk [vmem:[%s1219 + $0x88] sm:$0xff] %vm148, %v1204
      %1238 = vst.msk [vmem:[%s1219 + $0x90] sm:$0xff] %vm148, %v1205
      %1239 = vst.msk [vmem:[%s1219 + $0x98] sm:$0xff] %vm148, %v1206
      %1240 = vst.msk [vmem:[%s1219 + $0xa0] sm:$0xff] %vm148, %v1207
      %1241 = vst.msk [vmem:[%s1219 + $0xa8] sm:$0xff] %vm148, %v1208
      %1242 = vst.msk [vmem:[%s1219 + $0xb0] sm:$0xff] %vm148, %v1209
      %1243 = vst.msk [vmem:[%s1219 + $0xb8] sm:$0xff] %vm148, %v1210
      %1244 = vst.msk [vmem:[%s1219 + $0xc0] sm:$0xff] %vm148, %v1211
      %1245 = vst.msk [vmem:[%s1219 + $0xc8] sm:$0xff] %vm148, %v1212
      %1246 = vst.msk [vmem:[%s1219 + $0xd0] sm:$0xff] %vm148, %v1213
      %1247 = vst.msk [vmem:[%s1219 + $0xd8] sm:$0xff] %vm148, %v1214
      %1248 = vst.msk [vmem:[%s1219 + $0xe0] sm:$0xff] %vm148, %v1215
      %1249 = vst.msk [vmem:[%s1219 + $0xe8] sm:$0xff] %vm148, %v1216
      %1250 = vst.msk [vmem:[%s1219 + $0xf0] sm:$0xff] %vm148, %v1217
      %1251 = vst.msk [vmem:[%s1219 + $0xf8] sm:$0xff] %vm148, %v1218
      %1252 = vst.msk [vmem:[%s263 + $0x8] sm:$0xff] %vm148, %v1187
      %1253 = vst.msk [vmem:[%s263 + $0x10] sm:$0xff] %vm148, %v1188
      %1254 = vst.msk [vmem:[%s263 + $0x28] sm:$0xff] %vm148, %v1189
      %1255 = vst.msk [vmem:[%s263 + $0x30] sm:$0xff] %vm148, %v1190
      %1256 = vst.msk [vmem:[%s263 + $0x48] sm:$0xff] %vm148, %v1191
      %1257 = vst.msk [vmem:[%s263 + $0x50] sm:$0xff] %vm148, %v1192
      %1258 = vst.msk [vmem:[%s263 + $0x68] sm:$0xff] %vm148, %v1193
      %1259 = vst.msk [vmem:[%s263 + $0x70] sm:$0xff] %vm148, %v1194
      %1260 = vst.msk [vmem:[%s263 + $0x88] sm:$0xff] %vm148, %v1195
      %1261 = vst.msk [vmem:[%s263 + $0x90] sm:$0xff] %vm148, %v1196
      %1262 = vst.msk [vmem:[%s263 + $0xa8] sm:$0xff] %vm148, %v1197
      %1263 = vst.msk [vmem:[%s263 + $0xb0] sm:$0xff] %vm148, %v1198
      %1264 = vst.msk [vmem:[%s263 + $0xc8] sm:$0xff] %vm148, %v1199
      %1265 = vst.msk [vmem:[%s263 + $0xd0] sm:$0xff] %vm148, %v1200
      %1266 = vst.msk [vmem:[%s263 + $0xe8] sm:$0xff] %vm148, %v1201
      %1267 = vst.msk [vmem:[%s263 + $0xf0] sm:$0xff] %vm148, %v1202
      %1268 = vst.msk [vmem:[%s263 + $0x108] sm:$0xff] %vm148, %v1203
      %1269 = vst.msk [vmem:[%s263 + $0x110] sm:$0xff] %vm148, %v1204
      %1270 = vst.msk [vmem:[%s263 + $0x128] sm:$0xff] %vm148, %v1205
      %1271 = vst.msk [vmem:[%s263 + $0x130] sm:$0xff] %vm148, %v1206
      %1272 = vst.msk [vmem:[%s263 + $0x148] sm:$0xff] %vm148, %v1207
      %1273 = vst.msk [vmem:[%s263 + $0x150] sm:$0xff] %vm148, %v1208
      %1274 = vst.msk [vmem:[%s263 + $0x168] sm:$0xff] %vm148, %v1209
      %1275 = vst.msk [vmem:[%s263 + $0x170] sm:$0xff] %vm148, %v1210
      %1276 = vst.msk [vmem:[%s263 + $0x188] sm:$0xff] %vm148, %v1211
      %1277 = vst.msk [vmem:[%s263 + $0x190] sm:$0xff] %vm148, %v1212
      %1278 = vst.msk [vmem:[%s263 + $0x1a8] sm:$0xff] %vm148, %v1213
      %1279 = vst.msk [vmem:[%s263 + $0x1b0] sm:$0xff] %vm148, %v1214
      %1280 = vst.msk [vmem:[%s263 + $0x1c8] sm:$0xff] %vm148, %v1215
      %1281 = vst.msk [vmem:[%s263 + $0x1d0] sm:$0xff] %vm148, %v1216
      %1282 = vst.msk [vmem:[%s263 + $0x1e8] sm:$0xff] %vm148, %v1217
      %1283 = vst.msk [vmem:[%s263 + $0x1f0] sm:$0xff] %vm148, %v1218
      %v1284 = vld [vmem:[#allocation2 + $0x6] sm:$0xff]
      %v1285 = vld [vmem:[#allocation2 + $0xe] sm:$0xff]
      %v1286 = vld [vmem:[#allocation2 + $0x16] sm:$0x7]
      %v1287 = vld [vmem:[#allocation2 + $0x26] sm:$0xff]
      %v1288 = vld [vmem:[#allocation2 + $0x2e] sm:$0xff]
      %v1289 = vld [vmem:[#allocation2 + $0x36] sm:$0x7]
      %v1290 = vld [vmem:[#allocation2 + $0x46] sm:$0xff]
      %v1291 = vld [vmem:[#allocation2 + $0x4e] sm:$0xff]
      %v1292 = vld [vmem:[#allocation2 + $0x56] sm:$0x7]
      %v1293 = vld [vmem:[#allocation2 + $0x66] sm:$0xff]
      %v1294 = vld [vmem:[#allocation2 + $0x6e] sm:$0xff]
      %v1295 = vld [vmem:[#allocation2 + $0x76] sm:$0x7]
      %v1296 = vld [vmem:[#allocation2 + $0x86] sm:$0xff]
      %v1297 = vld [vmem:[#allocation2 + $0x8e] sm:$0xff]
      %v1298 = vld [vmem:[#allocation2 + $0x96] sm:$0x7]
      %v1299 = vld [vmem:[#allocation2 + $0xa6] sm:$0xff]
      %v1300 = vld [vmem:[#allocation2 + $0xae] sm:$0xff]
      %v1301 = vld [vmem:[#allocation2 + $0xb6] sm:$0x7]
      %v1302 = vld [vmem:[#allocation2 + $0xc6] sm:$0xff]
      %v1303 = vld [vmem:[#allocation2 + $0xce] sm:$0xff]
      %v1304 = vld [vmem:[#allocation2 + $0xd6] sm:$0x7]
      %v1305 = vld [vmem:[#allocation2 + $0xe6] sm:$0xff]
      %v1306 = vld [vmem:[#allocation2 + $0xee] sm:$0xff]
      %v1307 = vld [vmem:[#allocation2 + $0xf6] sm:$0x7]
      %v1308 = vld [vmem:[#allocation2 + $0x106] sm:$0xff]
      %v1309 = vld [vmem:[#allocation2 + $0x10e] sm:$0xff]
      %v1310 = vld [vmem:[#allocation2 + $0x116] sm:$0x7]
      %v1311 = vld [vmem:[#allocation2 + $0x126] sm:$0xff]
      %v1312 = vld [vmem:[#allocation2 + $0x12e] sm:$0xff]
      %v1313 = vld [vmem:[#allocation2 + $0x136] sm:$0x7]
      %v1314 = vld [vmem:[#allocation2 + $0x146] sm:$0xff]
      %v1315 = vld [vmem:[#allocation2 + $0x14e] sm:$0xff]
      %v1316 = vld [vmem:[#allocation2 + $0x156] sm:$0x7]
      %v1317 = vld [vmem:[#allocation2 + $0x166] sm:$0xff]
      %v1318 = vld [vmem:[#allocation2 + $0x16e] sm:$0xff]
      %v1319 = vld [vmem:[#allocation2 + $0x176] sm:$0x7]
      %v1320 = vld [vmem:[#allocation2 + $0x186] sm:$0xff]
      %v1321 = vld [vmem:[#allocation2 + $0x18e] sm:$0xff]
      %v1322 = vld [vmem:[#allocation2 + $0x196] sm:$0x7]
      %v1323 = vld [vmem:[#allocation2 + $0x1a6] sm:$0xff]
      %v1324 = vld [vmem:[#allocation2 + $0x1ae] sm:$0xff]
      %v1325 = vld [vmem:[#allocation2 + $0x1b6] sm:$0x7]
      %v1326 = vld [vmem:[#allocation2 + $0x1c6] sm:$0xff]
      %v1327 = vld [vmem:[#allocation2 + $0x1ce] sm:$0xff]
      %v1328 = vld [vmem:[#allocation2 + $0x1d6] sm:$0x7]
      %v1329 = vld [vmem:[#allocation2 + $0x1e6] sm:$0xff]
      %v1330 = vld [vmem:[#allocation2 + $0x1ee] sm:$0xff]
      %v1331 = vld [vmem:[#allocation2 + $0x1f6] sm:$0x7]
      %v1332 = vld [vmem:[#allocation2 + $0x206] sm:$0xff]
      %v1333 = vld [vmem:[#allocation2 + $0x20e] sm:$0xff]
      %v1334 = vld [vmem:[#allocation2 + $0x216] sm:$0x7]
      %v1335 = vld [vmem:[#allocation2 + $0x226] sm:$0xff]
      %v1336 = vld [vmem:[#allocation2 + $0x22e] sm:$0xff]
      %v1337 = vld [vmem:[#allocation2 + $0x236] sm:$0x7]
      %v1338 = vld [vmem:[#allocation2 + $0x246] sm:$0xff]
      %v1339 = vld [vmem:[#allocation2 + $0x24e] sm:$0xff]
      %v1340 = vld [vmem:[#allocation2 + $0x256] sm:$0x7]
      %v1341 = vld [vmem:[#allocation2 + $0x266] sm:$0xff]
      %v1342 = vld [vmem:[#allocation2 + $0x26e] sm:$0xff]
      %v1343 = vld [vmem:[#allocation2 + $0x276] sm:$0x7]
      %v1344 = vld [vmem:[#allocation2 + $0x7] sm:$0xff]
      %v1345 = vld [vmem:[#allocation2 + $0xf] sm:$0xff]
      %v1346 = vld [vmem:[#allocation2 + $0x17] sm:$0x7]
      %v1347 = vld [vmem:[#allocation2 + $0x27] sm:$0xff]
      %v1348 = vld [vmem:[#allocation2 + $0x2f] sm:$0xff]
      %v1349 = vld [vmem:[#allocation2 + $0x37] sm:$0x7]
      %v1350 = vld [vmem:[#allocation2 + $0x47] sm:$0xff]
      %v1351 = vld [vmem:[#allocation2 + $0x4f] sm:$0xff]
      %v1352 = vld [vmem:[#allocation2 + $0x57] sm:$0x7]
      %v1353 = vld [vmem:[#allocation2 + $0x67] sm:$0xff]
      %v1354 = vld [vmem:[#allocation2 + $0x6f] sm:$0xff]
      %v1355 = vld [vmem:[#allocation2 + $0x77] sm:$0x7]
      %v1356 = vld [vmem:[#allocation2 + $0x87] sm:$0xff]
      %v1357 = vld [vmem:[#allocation2 + $0x8f] sm:$0xff]
      %v1358 = vld [vmem:[#allocation2 + $0x97] sm:$0x7]
      %v1359 = vld [vmem:[#allocation2 + $0xa7] sm:$0xff]
      %v1360 = vld [vmem:[#allocation2 + $0xaf] sm:$0xff]
      %v1361 = vld [vmem:[#allocation2 + $0xb7] sm:$0x7]
      %v1362 = vld [vmem:[#allocation2 + $0xc7] sm:$0xff]
      %v1363 = vld [vmem:[#allocation2 + $0xcf] sm:$0xff]
      %v1364 = vld [vmem:[#allocation2 + $0xd7] sm:$0x7]
      %v1365 = vld [vmem:[#allocation2 + $0xe7] sm:$0xff]
      %v1366 = vld [vmem:[#allocation2 + $0xef] sm:$0xff]
      %v1367 = vld [vmem:[#allocation2 + $0xf7] sm:$0x7]
      %v1368 = vld [vmem:[#allocation2 + $0x107] sm:$0xff]
      %v1369 = vld [vmem:[#allocation2 + $0x10f] sm:$0xff]
      %v1370 = vld [vmem:[#allocation2 + $0x117] sm:$0x7]
      %v1371 = vld [vmem:[#allocation2 + $0x127] sm:$0xff]
      %v1372 = vld [vmem:[#allocation2 + $0x12f] sm:$0xff]
      %v1373 = vld [vmem:[#allocation2 + $0x137] sm:$0x7]
      %v1374 = vld [vmem:[#allocation2 + $0x147] sm:$0xff]
      %v1375 = vld [vmem:[#allocation2 + $0x14f] sm:$0xff]
      %v1376 = vld [vmem:[#allocation2 + $0x157] sm:$0x7]
      %v1377 = vld [vmem:[#allocation2 + $0x167] sm:$0xff]
      %v1378 = vld [vmem:[#allocation2 + $0x16f] sm:$0xff]
      %v1379 = vld [vmem:[#allocation2 + $0x177] sm:$0x7]
      %v1380 = vld [vmem:[#allocation2 + $0x187] sm:$0xff]
      %v1381 = vld [vmem:[#allocation2 + $0x18f] sm:$0xff]
      %v1382 = vld [vmem:[#allocation2 + $0x197] sm:$0x7]
      %v1383 = vld [vmem:[#allocation2 + $0x1a7] sm:$0xff]
      %v1384 = vld [vmem:[#allocation2 + $0x1af] sm:$0xff]
      %v1385 = vld [vmem:[#allocation2 + $0x1b7] sm:$0x7]
      %v1386 = vld [vmem:[#allocation2 + $0x1c7] sm:$0xff]
      %v1387 = vld [vmem:[#allocation2 + $0x1cf] sm:$0xff]
      %v1388 = vld [vmem:[#allocation2 + $0x1d7] sm:$0x7]
      %v1389 = vld [vmem:[#allocation2 + $0x1e7] sm:$0xff]
      %v1390 = vld [vmem:[#allocation2 + $0x1ef] sm:$0xff]
      %v1391 = vld [vmem:[#allocation2 + $0x1f7] sm:$0x7]
      %v1392 = vld [vmem:[#allocation2 + $0x207] sm:$0xff]
      %v1393 = vld [vmem:[#allocation2 + $0x20f] sm:$0xff]
      %v1394 = vld [vmem:[#allocation2 + $0x217] sm:$0x7]
      %v1395 = vld [vmem:[#allocation2 + $0x227] sm:$0xff]
      %v1396 = vld [vmem:[#allocation2 + $0x22f] sm:$0xff]
      %v1397 = vld [vmem:[#allocation2 + $0x237] sm:$0x7]
      %v1398 = vld [vmem:[#allocation2 + $0x247] sm:$0xff]
      %v1399 = vld [vmem:[#allocation2 + $0x24f] sm:$0xff]
      %v1400 = vld [vmem:[#allocation2 + $0x257] sm:$0x7]
      %v1401 = vld [vmem:[#allocation2 + $0x267] sm:$0xff]
      %v1402 = vld [vmem:[#allocation2 + $0x26f] sm:$0xff]
      %v1403 = vld [vmem:[#allocation2 + $0x277] sm:$0x7]
      %v1404 = vmax.f32 %v1284, %v1344
      %v1405 = vmax.f32 %v1285, %v1345
      %v1406 = vmax.f32 %v1286, %v1346
      %v1407 = vmax.f32 %v1287, %v1347
      %v1408 = vmax.f32 %v1288, %v1348
      %v1409 = vmax.f32 %v1289, %v1349
      %v1410 = vmax.f32 %v1290, %v1350
      %v1411 = vmax.f32 %v1291, %v1351
      %v1412 = vmax.f32 %v1292, %v1352
      %v1413 = vmax.f32 %v1293, %v1353
      %v1414 = vmax.f32 %v1294, %v1354
      %v1415 = vmax.f32 %v1295, %v1355
      %v1416 = vmax.f32 %v1296, %v1356
      %v1417 = vmax.f32 %v1297, %v1357
      %v1418 = vmax.f32 %v1298, %v1358
      %v1419 = vmax.f32 %v1299, %v1359
      %v1420 = vmax.f32 %v1300, %v1360
      %v1421 = vmax.f32 %v1301, %v1361
      %v1422 = vmax.f32 %v1302, %v1362
      %v1423 = vmax.f32 %v1303, %v1363
      %v1424 = vmax.f32 %v1304, %v1364
      %v1425 = vmax.f32 %v1305, %v1365
      %v1426 = vmax.f32 %v1306, %v1366
      %v1427 = vmax.f32 %v1307, %v1367
      %v1428 = vmax.f32 %v1308, %v1368
      %v1429 = vmax.f32 %v1309, %v1369
      %v1430 = vmax.f32 %v1310, %v1370
      %v1431 = vmax.f32 %v1311, %v1371
      %v1432 = vmax.f32 %v1312, %v1372
      %v1433 = vmax.f32 %v1313, %v1373
      %v1434 = vmax.f32 %v1314, %v1374
      %v1435 = vmax.f32 %v1315, %v1375
      %v1436 = vmax.f32 %v1316, %v1376
      %v1437 = vmax.f32 %v1317, %v1377
      %v1438 = vmax.f32 %v1318, %v1378
      %v1439 = vmax.f32 %v1319, %v1379
      %v1440 = vmax.f32 %v1320, %v1380
      %v1441 = vmax.f32 %v1321, %v1381
      %v1442 = vmax.f32 %v1322, %v1382
      %v1443 = vmax.f32 %v1323, %v1383
      %v1444 = vmax.f32 %v1324, %v1384
      %v1445 = vmax.f32 %v1325, %v1385
      %v1446 = vmax.f32 %v1326, %v1386
      %v1447 = vmax.f32 %v1327, %v1387
      %v1448 = vmax.f32 %v1328, %v1388
      %v1449 = vmax.f32 %v1329, %v1389
      %v1450 = vmax.f32 %v1330, %v1390
      %v1451 = vmax.f32 %v1331, %v1391
      %v1452 = vmax.f32 %v1332, %v1392
      %v1453 = vmax.f32 %v1333, %v1393
      %v1454 = vmax.f32 %v1334, %v1394
      %v1455 = vmax.f32 %v1335, %v1395
      %v1456 = vmax.f32 %v1336, %v1396
      %v1457 = vmax.f32 %v1337, %v1397
      %v1458 = vmax.f32 %v1338, %v1398
      %v1459 = vmax.f32 %v1339, %v1399
      %v1460 = vmax.f32 %v1340, %v1400
      %v1461 = vmax.f32 %v1341, %v1401
      %v1462 = vmax.f32 %v1342, %v1402
      %v1463 = vmax.f32 %v1343, %v1403
      %v1524 = vrot.slane %v1404, 2
      %v1525 = vrot.slane %v1405, 2
      %v1526 = vsel %vm536, %v1524, %v1525
      %v1527 = vrot.slane %v1406, 2
      %v1528 = vsel %vm536, %v1525, %v1527
      %v1529 = vrot.slane %v1407, 2
      %v1530 = vrot.slane %v1408, 2
      %v1531 = vsel %vm536, %v1529, %v1530
      %v1532 = vrot.slane %v1409, 2
      %v1533 = vsel %vm536, %v1530, %v1532
      %v1534 = vrot.slane %v1410, 2
      %v1535 = vrot.slane %v1411, 2
      %v1536 = vsel %vm536, %v1534, %v1535
      %v1537 = vrot.slane %v1412, 2
      %v1538 = vsel %vm536, %v1535, %v1537
      %v1539 = vrot.slane %v1413, 2
      %v1540 = vrot.slane %v1414, 2
      %v1541 = vsel %vm536, %v1539, %v1540
      %v1542 = vrot.slane %v1415, 2
      %v1543 = vsel %vm536, %v1540, %v1542
      %v1544 = vrot.slane %v1416, 2
      %v1545 = vrot.slane %v1417, 2
      %v1546 = vsel %vm536, %v1544, %v1545
      %v1547 = vrot.slane %v1418, 2
      %v1548 = vsel %vm536, %v1545, %v1547
      %v1549 = vrot.slane %v1419, 2
      %v1550 = vrot.slane %v1420, 2
      %v1551 = vsel %vm536, %v1549, %v1550
      %v1552 = vrot.slane %v1421, 2
      %v1553 = vsel %vm536, %v1550, %v1552
      %v1554 = vrot.slane %v1422, 2
      %v1555 = vrot.slane %v1423, 2
      %v1556 = vsel %vm536, %v1554, %v1555
      %v1557 = vrot.slane %v1424, 2
      %v1558 = vsel %vm536, %v1555, %v1557
      %v1559 = vrot.slane %v1425, 2
      %v1560 = vrot.slane %v1426, 2
      %v1561 = vsel %vm536, %v1559, %v1560
      %v1562 = vrot.slane %v1427, 2
      %v1563 = vsel %vm536, %v1560, %v1562
      %v1564 = vrot.slane %v1428, 2
      %v1565 = vrot.slane %v1429, 2
      %v1566 = vsel %vm536, %v1564, %v1565
      %v1567 = vrot.slane %v1430, 2
      %v1568 = vsel %vm536, %v1565, %v1567
      %v1569 = vrot.slane %v1431, 2
      %v1570 = vrot.slane %v1432, 2
      %v1571 = vsel %vm536, %v1569, %v1570
      %v1572 = vrot.slane %v1433, 2
      %v1573 = vsel %vm536, %v1570, %v1572
      %v1574 = vrot.slane %v1434, 2
      %v1575 = vrot.slane %v1435, 2
      %v1576 = vsel %vm536, %v1574, %v1575
      %v1577 = vrot.slane %v1436, 2
      %v1578 = vsel %vm536, %v1575, %v1577
      %v1579 = vrot.slane %v1437, 2
      %v1580 = vrot.slane %v1438, 2
      %v1581 = vsel %vm536, %v1579, %v1580
      %v1582 = vrot.slane %v1439, 2
      %v1583 = vsel %vm536, %v1580, %v1582
      %v1584 = vrot.slane %v1440, 2
      %v1585 = vrot.slane %v1441, 2
      %v1586 = vsel %vm536, %v1584, %v1585
      %v1587 = vrot.slane %v1442, 2
      %v1588 = vsel %vm536, %v1585, %v1587
      %v1589 = vrot.slane %v1443, 2
      %v1590 = vrot.slane %v1444, 2
      %v1591 = vsel %vm536, %v1589, %v1590
      %v1592 = vrot.slane %v1445, 2
      %v1593 = vsel %vm536, %v1590, %v1592
      %v1594 = vrot.slane %v1446, 2
      %v1595 = vrot.slane %v1447, 2
      %v1596 = vsel %vm536, %v1594, %v1595
      %v1597 = vrot.slane %v1448, 2
      %v1598 = vsel %vm536, %v1595, %v1597
      %v1599 = vrot.slane %v1449, 2
      %v1600 = vrot.slane %v1450, 2
      %v1601 = vsel %vm536, %v1599, %v1600
      %v1602 = vrot.slane %v1451, 2
      %v1603 = vsel %vm536, %v1600, %v1602
      %v1604 = vrot.slane %v1452, 2
      %v1605 = vrot.slane %v1453, 2
      %v1606 = vsel %vm536, %v1604, %v1605
      %v1607 = vrot.slane %v1454, 2
      %v1608 = vsel %vm536, %v1605, %v1607
      %v1609 = vrot.slane %v1455, 2
      %v1610 = vrot.slane %v1456, 2
      %v1611 = vsel %vm536, %v1609, %v1610
      %v1612 = vrot.slane %v1457, 2
      %v1613 = vsel %vm536, %v1610, %v1612
      %v1614 = vrot.slane %v1458, 2
      %v1615 = vrot.slane %v1459, 2
      %v1616 = vsel %vm536, %v1614, %v1615
      %v1617 = vrot.slane %v1460, 2
      %v1618 = vsel %vm536, %v1615, %v1617
      %v1619 = vrot.slane %v1461, 2
      %v1620 = vrot.slane %v1462, 2
      %v1621 = vsel %vm536, %v1619, %v1620
      %v1622 = vrot.slane %v1463, 2
      %v1623 = vsel %vm536, %v1620, %v1622
      %v1684 = vmax.f32 %v1404, %v1526
      %v1685 = vmax.f32 %v1405, %v1528
      %v1686 = vmax.f32 %v1406, %v1527
      %v1687 = vmax.f32 %v1407, %v1531
      %v1688 = vmax.f32 %v1408, %v1533
      %v1689 = vmax.f32 %v1409, %v1532
      %v1690 = vmax.f32 %v1410, %v1536
      %v1691 = vmax.f32 %v1411, %v1538
      %v1692 = vmax.f32 %v1412, %v1537
      %v1693 = vmax.f32 %v1413, %v1541
      %v1694 = vmax.f32 %v1414, %v1543
      %v1695 = vmax.f32 %v1415, %v1542
      %v1696 = vmax.f32 %v1416, %v1546
      %v1697 = vmax.f32 %v1417, %v1548
      %v1698 = vmax.f32 %v1418, %v1547
      %v1699 = vmax.f32 %v1419, %v1551
      %v1700 = vmax.f32 %v1420, %v1553
      %v1701 = vmax.f32 %v1421, %v1552
      %v1702 = vmax.f32 %v1422, %v1556
      %v1703 = vmax.f32 %v1423, %v1558
      %v1704 = vmax.f32 %v1424, %v1557
      %v1705 = vmax.f32 %v1425, %v1561
      %v1706 = vmax.f32 %v1426, %v1563
      %v1707 = vmax.f32 %v1427, %v1562
      %v1708 = vmax.f32 %v1428, %v1566
      %v1709 = vmax.f32 %v1429, %v1568
      %v1710 = vmax.f32 %v1430, %v1567
      %v1711 = vmax.f32 %v1431, %v1571
      %v1712 = vmax.f32 %v1432, %v1573
      %v1713 = vmax.f32 %v1433, %v1572
      %v1714 = vmax.f32 %v1434, %v1576
      %v1715 = vmax.f32 %v1435, %v1578
      %v1716 = vmax.f32 %v1436, %v1577
      %v1717 = vmax.f32 %v1437, %v1581
      %v1718 = vmax.f32 %v1438, %v1583
      %v1719 = vmax.f32 %v1439, %v1582
      %v1720 = vmax.f32 %v1440, %v1586
      %v1721 = vmax.f32 %v1441, %v1588
      %v1722 = vmax.f32 %v1442, %v1587
      %v1723 = vmax.f32 %v1443, %v1591
      %v1724 = vmax.f32 %v1444, %v1593
      %v1725 = vmax.f32 %v1445, %v1592
      %v1726 = vmax.f32 %v1446, %v1596
      %v1727 = vmax.f32 %v1447, %v1598
      %v1728 = vmax.f32 %v1448, %v1597
      %v1729 = vmax.f32 %v1449, %v1601
      %v1730 = vmax.f32 %v1450, %v1603
      %v1731 = vmax.f32 %v1451, %v1602
      %v1732 = vmax.f32 %v1452, %v1606
      %v1733 = vmax.f32 %v1453, %v1608
      %v1734 = vmax.f32 %v1454, %v1607
      %v1735 = vmax.f32 %v1455, %v1611
      %v1736 = vmax.f32 %v1456, %v1613
      %v1737 = vmax.f32 %v1457, %v1612
      %v1738 = vmax.f32 %v1458, %v1616
      %v1739 = vmax.f32 %v1459, %v1618
      %v1740 = vmax.f32 %v1460, %v1617
      %v1741 = vmax.f32 %v1461, %v1621
      %v1742 = vmax.f32 %v1462, %v1623
      %v1743 = vmax.f32 %v1463, %v1622
      %v1804 = vrot.slane %v1684, 1
      %v1805 = vrot.slane %v1685, 1
      %v1806 = vsel %vm817, %v1804, %v1805
      %v1807 = vrot.slane %v1686, 1
      %v1808 = vsel %vm817, %v1805, %v1807
      %v1809 = vrot.slane %v1687, 1
      %v1810 = vrot.slane %v1688, 1
      %v1811 = vsel %vm817, %v1809, %v1810
      %v1812 = vrot.slane %v1689, 1
      %v1813 = vsel %vm817, %v1810, %v1812
      %v1814 = vrot.slane %v1690, 1
      %v1815 = vrot.slane %v1691, 1
      %v1816 = vsel %vm817, %v1814, %v1815
      %v1817 = vrot.slane %v1692, 1
      %v1818 = vsel %vm817, %v1815, %v1817
      %v1819 = vrot.slane %v1693, 1
      %v1820 = vrot.slane %v1694, 1
      %v1821 = vsel %vm817, %v1819, %v1820
      %v1822 = vrot.slane %v1695, 1
      %v1823 = vsel %vm817, %v1820, %v1822
      %v1824 = vrot.slane %v1696, 1
      %v1825 = vrot.slane %v1697, 1
      %v1826 = vsel %vm817, %v1824, %v1825
      %v1827 = vrot.slane %v1698, 1
      %v1828 = vsel %vm817, %v1825, %v1827
      %v1829 = vrot.slane %v1699, 1
      %v1830 = vrot.slane %v1700, 1
      %v1831 = vsel %vm817, %v1829, %v1830
      %v1832 = vrot.slane %v1701, 1
      %v1833 = vsel %vm817, %v1830, %v1832
      %v1834 = vrot.slane %v1702, 1
      %v1835 = vrot.slane %v1703, 1
      %v1836 = vsel %vm817, %v1834, %v1835
      %v1837 = vrot.slane %v1704, 1
      %v1838 = vsel %vm817, %v1835, %v1837
      %v1839 = vrot.slane %v1705, 1
      %v1840 = vrot.slane %v1706, 1
      %v1841 = vsel %vm817, %v1839, %v1840
      %v1842 = vrot.slane %v1707, 1
      %v1843 = vsel %vm817, %v1840, %v1842
      %v1844 = vrot.slane %v1708, 1
      %v1845 = vrot.slane %v1709, 1
      %v1846 = vsel %vm817, %v1844, %v1845
      %v1847 = vrot.slane %v1710, 1
      %v1848 = vsel %vm817, %v1845, %v1847
      %v1849 = vrot.slane %v1711, 1
      %v1850 = vrot.slane %v1712, 1
      %v1851 = vsel %vm817, %v1849, %v1850
      %v1852 = vrot.slane %v1713, 1
      %v1853 = vsel %vm817, %v1850, %v1852
      %v1854 = vrot.slane %v1714, 1
      %v1855 = vrot.slane %v1715, 1
      %v1856 = vsel %vm817, %v1854, %v1855
      %v1857 = vrot.slane %v1716, 1
      %v1858 = vsel %vm817, %v1855, %v1857
      %v1859 = vrot.slane %v1717, 1
      %v1860 = vrot.slane %v1718, 1
      %v1861 = vsel %vm817, %v1859, %v1860
      %v1862 = vrot.slane %v1719, 1
      %v1863 = vsel %vm817, %v1860, %v1862
      %v1864 = vrot.slane %v1720, 1
      %v1865 = vrot.slane %v1721, 1
      %v1866 = vsel %vm817, %v1864, %v1865
      %v1867 = vrot.slane %v1722, 1
      %v1868 = vsel %vm817, %v1865, %v1867
      %v1869 = vrot.slane %v1723, 1
      %v1870 = vrot.slane %v1724, 1
      %v1871 = vsel %vm817, %v1869, %v1870
      %v1872 = vrot.slane %v1725, 1
      %v1873 = vsel %vm817, %v1870, %v1872
      %v1874 = vrot.slane %v1726, 1
      %v1875 = vrot.slane %v1727, 1
      %v1876 = vsel %vm817, %v1874, %v1875
      %v1877 = vrot.slane %v1728, 1
      %v1878 = vsel %vm817, %v1875, %v1877
      %v1879 = vrot.slane %v1729, 1
      %v1880 = vrot.slane %v1730, 1
      %v1881 = vsel %vm817, %v1879, %v1880
      %v1882 = vrot.slane %v1731, 1
      %v1883 = vsel %vm817, %v1880, %v1882
      %v1884 = vrot.slane %v1732, 1
      %v1885 = vrot.slane %v1733, 1
      %v1886 = vsel %vm817, %v1884, %v1885
      %v1887 = vrot.slane %v1734, 1
      %v1888 = vsel %vm817, %v1885, %v1887
      %v1889 = vrot.slane %v1735, 1
      %v1890 = vrot.slane %v1736, 1
      %v1891 = vsel %vm817, %v1889, %v1890
      %v1892 = vrot.slane %v1737, 1
      %v1893 = vsel %vm817, %v1890, %v1892
      %v1894 = vrot.slane %v1738, 1
      %v1895 = vrot.slane %v1739, 1
      %v1896 = vsel %vm817, %v1894, %v1895
      %v1897 = vrot.slane %v1740, 1
      %v1898 = vsel %vm817, %v1895, %v1897
      %v1899 = vrot.slane %v1741, 1
      %v1900 = vrot.slane %v1742, 1
      %v1901 = vsel %vm817, %v1899, %v1900
      %v1902 = vrot.slane %v1743, 1
      %v1903 = vsel %vm817, %v1900, %v1902
      %v1944 = vmax.f32 %v1684, %v1806
      %v1945 = vmax.f32 %v1685, %v1808
      %v1946 = vmax.f32 %v1687, %v1811
      %v1947 = vmax.f32 %v1688, %v1813
      %v1948 = vmax.f32 %v1690, %v1816
      %v1949 = vmax.f32 %v1691, %v1818
      %v1950 = vmax.f32 %v1693, %v1821
      %v1951 = vmax.f32 %v1694, %v1823
      %v1952 = vmax.f32 %v1696, %v1826
      %v1953 = vmax.f32 %v1697, %v1828
      %v1954 = vmax.f32 %v1699, %v1831
      %v1955 = vmax.f32 %v1700, %v1833
      %v1956 = vmax.f32 %v1702, %v1836
      %v1957 = vmax.f32 %v1703, %v1838
      %v1958 = vmax.f32 %v1705, %v1841
      %v1959 = vmax.f32 %v1706, %v1843
      %v1960 = vmax.f32 %v1708, %v1846
      %v1961 = vmax.f32 %v1709, %v1848
      %v1962 = vmax.f32 %v1711, %v1851
      %v1963 = vmax.f32 %v1712, %v1853
      %v1964 = vmax.f32 %v1714, %v1856
      %v1965 = vmax.f32 %v1715, %v1858
      %v1966 = vmax.f32 %v1717, %v1861
      %v1967 = vmax.f32 %v1718, %v1863
      %v1968 = vmax.f32 %v1720, %v1866
      %v1969 = vmax.f32 %v1721, %v1868
      %v1970 = vmax.f32 %v1723, %v1871
      %v1971 = vmax.f32 %v1724, %v1873
      %v1972 = vmax.f32 %v1726, %v1876
      %v1973 = vmax.f32 %v1727, %v1878
      %v1974 = vmax.f32 %v1729, %v1881
      %v1975 = vmax.f32 %v1730, %v1883
      %v1976 = vmax.f32 %v1732, %v1886
      %v1977 = vmax.f32 %v1733, %v1888
      %v1978 = vmax.f32 %v1735, %v1891
      %v1979 = vmax.f32 %v1736, %v1893
      %v1980 = vmax.f32 %v1738, %v1896
      %v1981 = vmax.f32 %v1739, %v1898
      %v1982 = vmax.f32 %v1741, %v1901
      %v1983 = vmax.f32 %v1742, %v1903
      %1984 = vst.msk [vmem:[#allocation3] sm:$0xff] %vm148, %v1944
      %1985 = vst.msk [vmem:[#allocation3 + $0x8] sm:$0xff] %vm148, %v1945
      %1986 = vst.msk [vmem:[#allocation3 + $0x10] sm:$0xff] %vm148, %v1946
      %1987 = vst.msk [vmem:[#allocation3 + $0x18] sm:$0xff] %vm148, %v1947
      %1988 = vst.msk [vmem:[#allocation3 + $0x20] sm:$0xff] %vm148, %v1948
      %1989 = vst.msk [vmem:[#allocation3 + $0x28] sm:$0xff] %vm148, %v1949
      %1990 = vst.msk [vmem:[#allocation3 + $0x30] sm:$0xff] %vm148, %v1950
      %1991 = vst.msk [vmem:[#allocation3 + $0x38] sm:$0xff] %vm148, %v1951
      %1992 = vst.msk [vmem:[#allocation3 + $0x40] sm:$0xff] %vm148, %v1952
      %1993 = vst.msk [vmem:[#allocation3 + $0x48] sm:$0xff] %vm148, %v1953
      %1994 = vst.msk [vmem:[#allocation3 + $0x50] sm:$0xff] %vm148, %v1954
      %1995 = vst.msk [vmem:[#allocation3 + $0x58] sm:$0xff] %vm148, %v1955
      %1996 = vst.msk [vmem:[#allocation3 + $0x60] sm:$0xff] %vm148, %v1956
      %1997 = vst.msk [vmem:[#allocation3 + $0x68] sm:$0xff] %vm148, %v1957
      %1998 = vst.msk [vmem:[#allocation3 + $0x70] sm:$0xff] %vm148, %v1958
      %1999 = vst.msk [vmem:[#allocation3 + $0x78] sm:$0xff] %vm148, %v1959
      %2000 = vst.msk [vmem:[#allocation3 + $0x80] sm:$0xff] %vm148, %v1960
      %2001 = vst.msk [vmem:[#allocation3 + $0x88] sm:$0xff] %vm148, %v1961
      %2002 = vst.msk [vmem:[#allocation3 + $0x90] sm:$0xff] %vm148, %v1962
      %2003 = vst.msk [vmem:[#allocation3 + $0x98] sm:$0xff] %vm148, %v1963
      %2004 = vst.msk [vmem:[#allocation3 + $0xa0] sm:$0xff] %vm148, %v1964
      %2005 = vst.msk [vmem:[#allocation3 + $0xa8] sm:$0xff] %vm148, %v1965
      %2006 = vst.msk [vmem:[#allocation3 + $0xb0] sm:$0xff] %vm148, %v1966
      %2007 = vst.msk [vmem:[#allocation3 + $0xb8] sm:$0xff] %vm148, %v1967
      %2008 = vst.msk [vmem:[#allocation3 + $0xc0] sm:$0xff] %vm148, %v1968
      %2009 = vst.msk [vmem:[#allocation3 + $0xc8] sm:$0xff] %vm148, %v1969
      %2010 = vst.msk [vmem:[#allocation3 + $0xd0] sm:$0xff] %vm148, %v1970
      %2011 = vst.msk [vmem:[#allocation3 + $0xd8] sm:$0xff] %vm148, %v1971
      %2012 = vst.msk [vmem:[#allocation3 + $0xe0] sm:$0xff] %vm148, %v1972
      %2013 = vst.msk [vmem:[#allocation3 + $0xe8] sm:$0xff] %vm148, %v1973
      %2014 = vst.msk [vmem:[#allocation3 + $0xf0] sm:$0xff] %vm148, %v1974
      %2015 = vst.msk [vmem:[#allocation3 + $0xf8] sm:$0xff] %vm148, %v1975
      %2016 = vst.msk [vmem:[#allocation3 + $0x100] sm:$0xff] %vm148, %v1976
      %2017 = vst.msk [vmem:[#allocation3 + $0x108] sm:$0xff] %vm148, %v1977
      %2018 = vst.msk [vmem:[#allocation3 + $0x110] sm:$0xff] %vm148, %v1978
      %2019 = vst.msk [vmem:[#allocation3 + $0x118] sm:$0xff] %vm148, %v1979
      %2020 = vst.msk [vmem:[#allocation3 + $0x120] sm:$0xff] %vm148, %v1980
      %2021 = vst.msk [vmem:[#allocation3 + $0x128] sm:$0xff] %vm148, %v1981
      %2022 = vst.msk [vmem:[#allocation3 + $0x130] sm:$0xff] %vm148, %v1982
      %2023 = vst.msk [vmem:[#allocation3 + $0x138] sm:$0xff] %vm148, %v1983
      %v2024 = vld [vmem:[#allocation3] sm:$0xff]
      %v2025 = vld [vmem:[#allocation3 + $0x8] sm:$0xff]
      %v2026 = vld [vmem:[#allocation3 + $0x10] sm:$0xff]
      %v2027 = vld [vmem:[#allocation3 + $0x18] sm:$0xff]
      %v2028 = vld [vmem:[#allocation3 + $0x20] sm:$0xff]
      %v2029 = vld [vmem:[#allocation3 + $0x28] sm:$0xff]
      %v2030 = vld [vmem:[#allocation3 + $0x30] sm:$0xff]
      %v2031 = vld [vmem:[#allocation3 + $0x38] sm:$0xff]
      %v2032 = vld [vmem:[#allocation3 + $0x40] sm:$0xff]
      %v2033 = vld [vmem:[#allocation3 + $0x48] sm:$0xff]
      %v2034 = vld [vmem:[#allocation3 + $0x50] sm:$0xff]
      %v2035 = vld [vmem:[#allocation3 + $0x58] sm:$0xff]
      %v2036 = vld [vmem:[#allocation3 + $0x60] sm:$0xff]
      %v2037 = vld [vmem:[#allocation3 + $0x68] sm:$0xff]
      %v2038 = vld [vmem:[#allocation3 + $0x70] sm:$0xff]
      %v2039 = vld [vmem:[#allocation3 + $0x78] sm:$0xff]
      %v2040 = vld [vmem:[#allocation3 + $0x80] sm:$0xff]
      %v2041 = vld [vmem:[#allocation3 + $0x88] sm:$0xff]
      %v2042 = vld [vmem:[#allocation3 + $0x90] sm:$0xff]
      %v2043 = vld [vmem:[#allocation3 + $0x98] sm:$0xff]
      %v2044 = vld [vmem:[#allocation3 + $0xa0] sm:$0xff]
      %v2045 = vld [vmem:[#allocation3 + $0xa8] sm:$0xff]
      %v2046 = vld [vmem:[#allocation3 + $0xb0] sm:$0xff]
      %v2047 = vld [vmem:[#allocation3 + $0xb8] sm:$0xff]
      %v2048 = vld [vmem:[#allocation3 + $0xc0] sm:$0xff]
      %v2049 = vld [vmem:[#allocation3 + $0xc8] sm:$0xff]
      %v2050 = vld [vmem:[#allocation3 + $0xd0] sm:$0xff]
      %v2051 = vld [vmem:[#allocation3 + $0xd8] sm:$0xff]
      %v2052 = vld [vmem:[#allocation3 + $0xe0] sm:$0xff]
      %v2053 = vld [vmem:[#allocation3 + $0xe8] sm:$0xff]
      %v2054 = vld [vmem:[#allocation3 + $0xf0] sm:$0xff]
      %v2055 = vld [vmem:[#allocation3 + $0xf8] sm:$0xff]
      %v2056 = vld [vmem:[#allocation3 + $0x100] sm:$0xff]
      %v2057 = vld [vmem:[#allocation3 + $0x108] sm:$0xff]
      %v2058 = vld [vmem:[#allocation3 + $0x110] sm:$0xff]
      %v2059 = vld [vmem:[#allocation3 + $0x118] sm:$0xff]
      %v2060 = vld [vmem:[#allocation3 + $0x120] sm:$0xff]
      %v2061 = vld [vmem:[#allocation3 + $0x128] sm:$0xff]
      %v2062 = vld [vmem:[%s1076] sm:$0xff]
      %v2063 = vld [vmem:[%s1076 + $0x8] sm:$0xff]
      %v2064 = vld [vmem:[%s1076 + $0x10] sm:$0xff]
      %v2065 = vld [vmem:[%s1076 + $0x18] sm:$0xff]
      %v2066 = vld [vmem:[%s1076 + $0x20] sm:$0xff]
      %v2067 = vld [vmem:[%s1076 + $0x28] sm:$0xff]
      %v2068 = vld [vmem:[%s1076 + $0x30] sm:$0xff]
      %v2069 = vld [vmem:[%s1076 + $0x38] sm:$0xff]
      %v2070 = vld [vmem:[%s1076 + $0x40] sm:$0xff]
      %v2071 = vld [vmem:[%s1076 + $0x48] sm:$0xff]
      %v2072 = vld [vmem:[%s1076 + $0x50] sm:$0xff]
      %v2073 = vld [vmem:[%s1076 + $0x58] sm:$0xff]
      %v2074 = vld [vmem:[%s1076 + $0x60] sm:$0xff]
      %v2075 = vld [vmem:[%s1076 + $0x68] sm:$0xff]
      %v2076 = vld [vmem:[%s1076 + $0x70] sm:$0xff]
      %v2077 = vld [vmem:[%s1076 + $0x78] sm:$0xff]
      %v2078 = vld [vmem:[%s1076 + $0x80] sm:$0xff]
      %v2079 = vld [vmem:[%s1076 + $0x88] sm:$0xff]
      %v2080 = vld [vmem:[%s1076 + $0x90] sm:$0xff]
      %v2081 = vld [vmem:[%s1076 + $0x98] sm:$0xff]
      %v2082 = vld [vmem:[%s1076 + $0xa0] sm:$0xff]
      %v2083 = vld [vmem:[%s1076 + $0xa8] sm:$0xff]
      %v2084 = vld [vmem:[%s1076 + $0xb0] sm:$0xff]
      %v2085 = vld [vmem:[%s1076 + $0xb8] sm:$0xff]
      %v2086 = vld [vmem:[%s1076 + $0xc0] sm:$0xff]
      %v2087 = vld [vmem:[%s1076 + $0xc8] sm:$0xff]
      %v2088 = vld [vmem:[%s1076 + $0xd0] sm:$0xff]
      %v2089 = vld [vmem:[%s1076 + $0xd8] sm:$0xff]
      %v2090 = vld [vmem:[%s1076 + $0xe0] sm:$0xff]
      %v2091 = vld [vmem:[%s1076 + $0xe8] sm:$0xff]
      %v2092 = vld [vmem:[%s1076 + $0xf0] sm:$0xff]
      %v2093 = vld [vmem:[%s1076 + $0xf8] sm:$0xff]
      %v2094 = vld [vmem:[%s1076 + $0x100] sm:$0xff]
      %v2095 = vld [vmem:[%s1076 + $0x108] sm:$0xff]
      %v2096 = vld [vmem:[%s1076 + $0x110] sm:$0xff]
      %v2097 = vld [vmem:[%s1076 + $0x118] sm:$0xff]
      %v2098 = vld [vmem:[%s1076 + $0x120] sm:$0xff]
      %v2099 = vld [vmem:[%s1076 + $0x128] sm:$0xff]
      %v2100 = vmax.f32 %v2024, %v2062
      %v2101 = vmax.f32 %v2025, %v2063
      %v2102 = vmax.f32 %v2026, %v2064
      %v2103 = vmax.f32 %v2027, %v2065
      %v2104 = vmax.f32 %v2028, %v2066
      %v2105 = vmax.f32 %v2029, %v2067
      %v2106 = vmax.f32 %v2030, %v2068
      %v2107 = vmax.f32 %v2031, %v2069
      %v2108 = vmax.f32 %v2032, %v2070
      %v2109 = vmax.f32 %v2033, %v2071
      %v2110 = vmax.f32 %v2034, %v2072
      %v2111 = vmax.f32 %v2035, %v2073
      %v2112 = vmax.f32 %v2036, %v2074
      %v2113 = vmax.f32 %v2037, %v2075
      %v2114 = vmax.f32 %v2038, %v2076
      %v2115 = vmax.f32 %v2039, %v2077
      %v2116 = vmax.f32 %v2040, %v2078
      %v2117 = vmax.f32 %v2041, %v2079
      %v2118 = vmax.f32 %v2042, %v2080
      %v2119 = vmax.f32 %v2043, %v2081
      %v2120 = vmax.f32 %v2044, %v2082
      %v2121 = vmax.f32 %v2045, %v2083
      %v2122 = vmax.f32 %v2046, %v2084
      %v2123 = vmax.f32 %v2047, %v2085
      %v2124 = vmax.f32 %v2048, %v2086
      %v2125 = vmax.f32 %v2049, %v2087
      %v2126 = vmax.f32 %v2050, %v2088
      %v2127 = vmax.f32 %v2051, %v2089
      %v2128 = vmax.f32 %v2052, %v2090
      %v2129 = vmax.f32 %v2053, %v2091
      %v2130 = vmax.f32 %v2054, %v2092
      %v2131 = vmax.f32 %v2055, %v2093
      %v2132 = vmax.f32 %v2056, %v2094
      %v2133 = vmax.f32 %v2057, %v2095
      %v2134 = vmax.f32 %v2058, %v2096
      %v2135 = vmax.f32 %v2059, %v2097
      %v2136 = vmax.f32 %v2060, %v2098
      %v2137 = vmax.f32 %v2061, %v2099
      %v2138 = vmax.f32 %v2100, %v2104
      %v2139 = vmax.f32 %v2101, %v2105
      %v2140 = vmax.f32 %v2102, %v2106
      %v2141 = vmax.f32 %v2103, %v2107
      %v2142 = vmax.f32 %v2104, %v2108
      %v2143 = vmax.f32 %v2105, %v2109
      %v2144 = vmax.f32 %v2106, %v2110
      %v2145 = vmax.f32 %v2107, %v2111
      %v2146 = vmax.f32 %v2108, %v2112
      %v2147 = vmax.f32 %v2109, %v2113
      %v2148 = vmax.f32 %v2110, %v2114
      %v2149 = vmax.f32 %v2111, %v2115
      %v2150 = vmax.f32 %v2112, %v2116
      %v2151 = vmax.f32 %v2113, %v2117
      %v2152 = vmax.f32 %v2114, %v2118
      %v2153 = vmax.f32 %v2115, %v2119
      %v2154 = vmax.f32 %v2116, %v2120
      %v2155 = vmax.f32 %v2117, %v2121
      %v2156 = vmax.f32 %v2118, %v2122
      %v2157 = vmax.f32 %v2119, %v2123
      %v2158 = vmax.f32 %v2120, %v2124
      %v2159 = vmax.f32 %v2121, %v2125
      %v2160 = vmax.f32 %v2122, %v2126
      %v2161 = vmax.f32 %v2123, %v2127
      %v2162 = vmax.f32 %v2124, %v2128
      %v2163 = vmax.f32 %v2125, %v2129
      %v2164 = vmax.f32 %v2126, %v2130
      %v2165 = vmax.f32 %v2127, %v2131
      %v2166 = vmax.f32 %v2128, %v2132
      %v2167 = vmax.f32 %v2129, %v2133
      %v2168 = vmax.f32 %v2130, %v2134
      %v2169 = vmax.f32 %v2131, %v2135
      %v2170 = vmax.f32 %v2132, %v2136
      %v2171 = vmax.f32 %v2133, %v2137
      %v2172 = vmax.f32 %v2138, %v2140
      %v2173 = vmax.f32 %v2139, %v2141
      %v2174 = vmax.f32 %v2140, %v2142
      %v2175 = vmax.f32 %v2141, %v2143
      %v2176 = vmax.f32 %v2142, %v2144
      %v2177 = vmax.f32 %v2143, %v2145
      %v2178 = vmax.f32 %v2144, %v2146
      %v2179 = vmax.f32 %v2145, %v2147
      %v2180 = vmax.f32 %v2146, %v2148
      %v2181 = vmax.f32 %v2147, %v2149
      %v2182 = vmax.f32 %v2148, %v2150
      %v2183 = vmax.f32 %v2149, %v2151
      %v2184 = vmax.f32 %v2150, %v2152
      %v2185 = vmax.f32 %v2151, %v2153
      %v2186 = vmax.f32 %v2152, %v2154
      %v2187 = vmax.f32 %v2153, %v2155
      %v2188 = vmax.f32 %v2154, %v2156
      %v2189 = vmax.f32 %v2155, %v2157
      %v2190 = vmax.f32 %v2156, %v2158
      %v2191 = vmax.f32 %v2157, %v2159
      %v2192 = vmax.f32 %v2158, %v2160
      %v2193 = vmax.f32 %v2159, %v2161
      %v2194 = vmax.f32 %v2160, %v2162
      %v2195 = vmax.f32 %v2161, %v2163
      %v2196 = vmax.f32 %v2162, %v2164
      %v2197 = vmax.f32 %v2163, %v2165
      %v2198 = vmax.f32 %v2164, %v2166
      %v2199 = vmax.f32 %v2165, %v2167
      %v2200 = vmax.f32 %v2166, %v2168
      %v2201 = vmax.f32 %v2167, %v2169
      %v2202 = vmax.f32 %v2168, %v2170
      %v2203 = vmax.f32 %v2169, %v2171
      %s2204 = scalar_lea.vmem %s147, 256
      %2205 = vst.msk [vmem:[%s2204] sm:$0xff] %vm148, %v2172
      %2206 = vst.msk [vmem:[%s2204 + $0x8] sm:$0xff] %vm148, %v2173
      %2207 = vst.msk [vmem:[%s2204 + $0x10] sm:$0xff] %vm148, %v2174
      %2208 = vst.msk [vmem:[%s2204 + $0x18] sm:$0xff] %vm148, %v2175
      %2209 = vst.msk [vmem:[%s2204 + $0x20] sm:$0xff] %vm148, %v2176
      %2210 = vst.msk [vmem:[%s2204 + $0x28] sm:$0xff] %vm148, %v2177
      %2211 = vst.msk [vmem:[%s2204 + $0x30] sm:$0xff] %vm148, %v2178
      %2212 = vst.msk [vmem:[%s2204 + $0x38] sm:$0xff] %vm148, %v2179
      %2213 = vst.msk [vmem:[%s2204 + $0x40] sm:$0xff] %vm148, %v2180
      %2214 = vst.msk [vmem:[%s2204 + $0x48] sm:$0xff] %vm148, %v2181
      %2215 = vst.msk [vmem:[%s2204 + $0x50] sm:$0xff] %vm148, %v2182
      %2216 = vst.msk [vmem:[%s2204 + $0x58] sm:$0xff] %vm148, %v2183
      %2217 = vst.msk [vmem:[%s2204 + $0x60] sm:$0xff] %vm148, %v2184
      %2218 = vst.msk [vmem:[%s2204 + $0x68] sm:$0xff] %vm148, %v2185
      %2219 = vst.msk [vmem:[%s2204 + $0x70] sm:$0xff] %vm148, %v2186
      %2220 = vst.msk [vmem:[%s2204 + $0x78] sm:$0xff] %vm148, %v2187
      %2221 = vst.msk [vmem:[%s2204 + $0x80] sm:$0xff] %vm148, %v2188
      %2222 = vst.msk [vmem:[%s2204 + $0x88] sm:$0xff] %vm148, %v2189
      %2223 = vst.msk [vmem:[%s2204 + $0x90] sm:$0xff] %vm148, %v2190
      %2224 = vst.msk [vmem:[%s2204 + $0x98] sm:$0xff] %vm148, %v2191
      %2225 = vst.msk [vmem:[%s2204 + $0xa0] sm:$0xff] %vm148, %v2192
      %2226 = vst.msk [vmem:[%s2204 + $0xa8] sm:$0xff] %vm148, %v2193
      %2227 = vst.msk [vmem:[%s2204 + $0xb0] sm:$0xff] %vm148, %v2194
      %2228 = vst.msk [vmem:[%s2204 + $0xb8] sm:$0xff] %vm148, %v2195
      %2229 = vst.msk [vmem:[%s2204 + $0xc0] sm:$0xff] %vm148, %v2196
      %2230 = vst.msk [vmem:[%s2204 + $0xc8] sm:$0xff] %vm148, %v2197
      %2231 = vst.msk [vmem:[%s2204 + $0xd0] sm:$0xff] %vm148, %v2198
      %2232 = vst.msk [vmem:[%s2204 + $0xd8] sm:$0xff] %vm148, %v2199
      %2233 = vst.msk [vmem:[%s2204 + $0xe0] sm:$0xff] %vm148, %v2200
      %2234 = vst.msk [vmem:[%s2204 + $0xe8] sm:$0xff] %vm148, %v2201
      %2235 = vst.msk [vmem:[%s2204 + $0xf0] sm:$0xff] %vm148, %v2202
      %2236 = vst.msk [vmem:[%s2204 + $0xf8] sm:$0xff] %vm148, %v2203
      %2237 = vst.msk [vmem:[%s263 + $0x8] sm:$0xff] %vm148, %v2172
      %2238 = vst.msk [vmem:[%s263 + $0x10] sm:$0xff] %vm148, %v2173
      %2239 = vst.msk [vmem:[%s263 + $0x28] sm:$0xff] %vm148, %v2174
      %2240 = vst.msk [vmem:[%s263 + $0x30] sm:$0xff] %vm148, %v2175
      %2241 = vst.msk [vmem:[%s263 + $0x48] sm:$0xff] %vm148, %v2176
      %2242 = vst.msk [vmem:[%s263 + $0x50] sm:$0xff] %vm148, %v2177
      %2243 = vst.msk [vmem:[%s263 + $0x68] sm:$0xff] %vm148, %v2178
      %2244 = vst.msk [vmem:[%s263 + $0x70] sm:$0xff] %vm148, %v2179
      %2245 = vst.msk [vmem:[%s263 + $0x88] sm:$0xff] %vm148, %v2180
      %2246 = vst.msk [vmem:[%s263 + $0x90] sm:$0xff] %vm148, %v2181
      %2247 = vst.msk [vmem:[%s263 + $0xa8] sm:$0xff] %vm148, %v2182
      %2248 = vst.msk [vmem:[%s263 + $0xb0] sm:$0xff] %vm148, %v2183
      %2249 = vst.msk [vmem:[%s263 + $0xc8] sm:$0xff] %vm148, %v2184
      %2250 = vst.msk [vmem:[%s263 + $0xd0] sm:$0xff] %vm148, %v2185
      %2251 = vst.msk [vmem:[%s263 + $0xe8] sm:$0xff] %vm148, %v2186
      %2252 = vst.msk [vmem:[%s263 + $0xf0] sm:$0xff] %vm148, %v2187
      %2253 = vst.msk [vmem:[%s263 + $0x108] sm:$0xff] %vm148, %v2188
      %2254 = vst.msk [vmem:[%s263 + $0x110] sm:$0xff] %vm148, %v2189
      %2255 = vst.msk [vmem:[%s263 + $0x128] sm:$0xff] %vm148, %v2190
      %2256 = vst.msk [vmem:[%s263 + $0x130] sm:$0xff] %vm148, %v2191
      %2257 = vst.msk [vmem:[%s263 + $0x148] sm:$0xff] %vm148, %v2192
      %2258 = vst.msk [vmem:[%s263 + $0x150] sm:$0xff] %vm148, %v2193
      %2259 = vst.msk [vmem:[%s263 + $0x168] sm:$0xff] %vm148, %v2194
      %2260 = vst.msk [vmem:[%s263 + $0x170] sm:$0xff] %vm148, %v2195
      %2261 = vst.msk [vmem:[%s263 + $0x188] sm:$0xff] %vm148, %v2196
      %2262 = vst.msk [vmem:[%s263 + $0x190] sm:$0xff] %vm148, %v2197
      %2263 = vst.msk [vmem:[%s263 + $0x1a8] sm:$0xff] %vm148, %v2198
      %2264 = vst.msk [vmem:[%s263 + $0x1b0] sm:$0xff] %vm148, %v2199
      %2265 = vst.msk [vmem:[%s263 + $0x1c8] sm:$0xff] %vm148, %v2200
      %2266 = vst.msk [vmem:[%s263 + $0x1d0] sm:$0xff] %vm148, %v2201
      %2267 = vst.msk [vmem:[%s263 + $0x1e8] sm:$0xff] %vm148, %v2202
      %2268 = vst.msk [vmem:[%s263 + $0x1f0] sm:$0xff] %vm148, %v2203
      %v2269 = vld [vmem:[#allocation2 + $0x6] sm:$0xff]
      %v2270 = vld [vmem:[#allocation2 + $0xe] sm:$0xff]
      %v2271 = vld [vmem:[#allocation2 + $0x16] sm:$0x7]
      %v2272 = vld [vmem:[#allocation2 + $0x26] sm:$0xff]
      %v2273 = vld [vmem:[#allocation2 + $0x2e] sm:$0xff]
      %v2274 = vld [vmem:[#allocation2 + $0x36] sm:$0x7]
      %v2275 = vld [vmem:[#allocation2 + $0x46] sm:$0xff]
      %v2276 = vld [vmem:[#allocation2 + $0x4e] sm:$0xff]
      %v2277 = vld [vmem:[#allocation2 + $0x56] sm:$0x7]
      %v2278 = vld [vmem:[#allocation2 + $0x66] sm:$0xff]
      %v2279 = vld [vmem:[#allocation2 + $0x6e] sm:$0xff]
      %v2280 = vld [vmem:[#allocation2 + $0x76] sm:$0x7]
      %v2281 = vld [vmem:[#allocation2 + $0x86] sm:$0xff]
      %v2282 = vld [vmem:[#allocation2 + $0x8e] sm:$0xff]
      %v2283 = vld [vmem:[#allocation2 + $0x96] sm:$0x7]
      %v2284 = vld [vmem:[#allocation2 + $0xa6] sm:$0xff]
      %v2285 = vld [vmem:[#allocation2 + $0xae] sm:$0xff]
      %v2286 = vld [vmem:[#allocation2 + $0xb6] sm:$0x7]
      %v2287 = vld [vmem:[#allocation2 + $0xc6] sm:$0xff]
      %v2288 = vld [vmem:[#allocation2 + $0xce] sm:$0xff]
      %v2289 = vld [vmem:[#allocation2 + $0xd6] sm:$0x7]
      %v2290 = vld [vmem:[#allocation2 + $0xe6] sm:$0xff]
      %v2291 = vld [vmem:[#allocation2 + $0xee] sm:$0xff]
      %v2292 = vld [vmem:[#allocation2 + $0xf6] sm:$0x7]
      %v2293 = vld [vmem:[#allocation2 + $0x106] sm:$0xff]
      %v2294 = vld [vmem:[#allocation2 + $0x10e] sm:$0xff]
      %v2295 = vld [vmem:[#allocation2 + $0x116] sm:$0x7]
      %v2296 = vld [vmem:[#allocation2 + $0x126] sm:$0xff]
      %v2297 = vld [vmem:[#allocation2 + $0x12e] sm:$0xff]
      %v2298 = vld [vmem:[#allocation2 + $0x136] sm:$0x7]
      %v2299 = vld [vmem:[#allocation2 + $0x146] sm:$0xff]
      %v2300 = vld [vmem:[#allocation2 + $0x14e] sm:$0xff]
      %v2301 = vld [vmem:[#allocation2 + $0x156] sm:$0x7]
      %v2302 = vld [vmem:[#allocation2 + $0x166] sm:$0xff]
      %v2303 = vld [vmem:[#allocation2 + $0x16e] sm:$0xff]
      %v2304 = vld [vmem:[#allocation2 + $0x176] sm:$0x7]
      %v2305 = vld [vmem:[#allocation2 + $0x186] sm:$0xff]
      %v2306 = vld [vmem:[#allocation2 + $0x18e] sm:$0xff]
      %v2307 = vld [vmem:[#allocation2 + $0x196] sm:$0x7]
      %v2308 = vld [vmem:[#allocation2 + $0x1a6] sm:$0xff]
      %v2309 = vld [vmem:[#allocation2 + $0x1ae] sm:$0xff]
      %v2310 = vld [vmem:[#allocation2 + $0x1b6] sm:$0x7]
      %v2311 = vld [vmem:[#allocation2 + $0x1c6] sm:$0xff]
      %v2312 = vld [vmem:[#allocation2 + $0x1ce] sm:$0xff]
      %v2313 = vld [vmem:[#allocation2 + $0x1d6] sm:$0x7]
      %v2314 = vld [vmem:[#allocation2 + $0x1e6] sm:$0xff]
      %v2315 = vld [vmem:[#allocation2 + $0x1ee] sm:$0xff]
      %v2316 = vld [vmem:[#allocation2 + $0x1f6] sm:$0x7]
      %v2317 = vld [vmem:[#allocation2 + $0x206] sm:$0xff]
      %v2318 = vld [vmem:[#allocation2 + $0x20e] sm:$0xff]
      %v2319 = vld [vmem:[#allocation2 + $0x216] sm:$0x7]
      %v2320 = vld [vmem:[#allocation2 + $0x226] sm:$0xff]
      %v2321 = vld [vmem:[#allocation2 + $0x22e] sm:$0xff]
      %v2322 = vld [vmem:[#allocation2 + $0x236] sm:$0x7]
      %v2323 = vld [vmem:[#allocation2 + $0x246] sm:$0xff]
      %v2324 = vld [vmem:[#allocation2 + $0x24e] sm:$0xff]
      %v2325 = vld [vmem:[#allocation2 + $0x256] sm:$0x7]
      %v2326 = vld [vmem:[#allocation2 + $0x266] sm:$0xff]
      %v2327 = vld [vmem:[#allocation2 + $0x26e] sm:$0xff]
      %v2328 = vld [vmem:[#allocation2 + $0x276] sm:$0x7]
      %v2329 = vld [vmem:[#allocation2 + $0x7] sm:$0xff]
      %v2330 = vld [vmem:[#allocation2 + $0xf] sm:$0xff]
      %v2331 = vld [vmem:[#allocation2 + $0x17] sm:$0x7]
      %v2332 = vld [vmem:[#allocation2 + $0x27] sm:$0xff]
      %v2333 = vld [vmem:[#allocation2 + $0x2f] sm:$0xff]
      %v2334 = vld [vmem:[#allocation2 + $0x37] sm:$0x7]
      %v2335 = vld [vmem:[#allocation2 + $0x47] sm:$0xff]
      %v2336 = vld [vmem:[#allocation2 + $0x4f] sm:$0xff]
      %v2337 = vld [vmem:[#allocation2 + $0x57] sm:$0x7]
      %v2338 = vld [vmem:[#allocation2 + $0x67] sm:$0xff]
      %v2339 = vld [vmem:[#allocation2 + $0x6f] sm:$0xff]
      %v2340 = vld [vmem:[#allocation2 + $0x77] sm:$0x7]
      %v2341 = vld [vmem:[#allocation2 + $0x87] sm:$0xff]
      %v2342 = vld [vmem:[#allocation2 + $0x8f] sm:$0xff]
      %v2343 = vld [vmem:[#allocation2 + $0x97] sm:$0x7]
      %v2344 = vld [vmem:[#allocation2 + $0xa7] sm:$0xff]
      %v2345 = vld [vmem:[#allocation2 + $0xaf] sm:$0xff]
      %v2346 = vld [vmem:[#allocation2 + $0xb7] sm:$0x7]
      %v2347 = vld [vmem:[#allocation2 + $0xc7] sm:$0xff]
      %v2348 = vld [vmem:[#allocation2 + $0xcf] sm:$0xff]
      %v2349 = vld [vmem:[#allocation2 + $0xd7] sm:$0x7]
      %v2350 = vld [vmem:[#allocation2 + $0xe7] sm:$0xff]
      %v2351 = vld [vmem:[#allocation2 + $0xef] sm:$0xff]
      %v2352 = vld [vmem:[#allocation2 + $0xf7] sm:$0x7]
      %v2353 = vld [vmem:[#allocation2 + $0x107] sm:$0xff]
      %v2354 = vld [vmem:[#allocation2 + $0x10f] sm:$0xff]
      %v2355 = vld [vmem:[#allocation2 + $0x117] sm:$0x7]
      %v2356 = vld [vmem:[#allocation2 + $0x127] sm:$0xff]
      %v2357 = vld [vmem:[#allocation2 + $0x12f] sm:$0xff]
      %v2358 = vld [vmem:[#allocation2 + $0x137] sm:$0x7]
      %v2359 = vld [vmem:[#allocation2 + $0x147] sm:$0xff]
      %v2360 = vld [vmem:[#allocation2 + $0x14f] sm:$0xff]
      %v2361 = vld [vmem:[#allocation2 + $0x157] sm:$0x7]
      %v2362 = vld [vmem:[#allocation2 + $0x167] sm:$0xff]
      %v2363 = vld [vmem:[#allocation2 + $0x16f] sm:$0xff]
      %v2364 = vld [vmem:[#allocation2 + $0x177] sm:$0x7]
      %v2365 = vld [vmem:[#allocation2 + $0x187] sm:$0xff]
      %v2366 = vld [vmem:[#allocation2 + $0x18f] sm:$0xff]
      %v2367 = vld [vmem:[#allocation2 + $0x197] sm:$0x7]
      %v2368 = vld [vmem:[#allocation2 + $0x1a7] sm:$0xff]
      %v2369 = vld [vmem:[#allocation2 + $0x1af] sm:$0xff]
      %v2370 = vld [vmem:[#allocation2 + $0x1b7] sm:$0x7]
      %v2371 = vld [vmem:[#allocation2 + $0x1c7] sm:$0xff]
      %v2372 = vld [vmem:[#allocation2 + $0x1cf] sm:$0xff]
      %v2373 = vld [vmem:[#allocation2 + $0x1d7] sm:$0x7]
      %v2374 = vld [vmem:[#allocation2 + $0x1e7] sm:$0xff]
      %v2375 = vld [vmem:[#allocation2 + $0x1ef] sm:$0xff]
      %v2376 = vld [vmem:[#allocation2 + $0x1f7] sm:$0x7]
      %v2377 = vld [vmem:[#allocation2 + $0x207] sm:$0xff]
      %v2378 = vld [vmem:[#allocation2 + $0x20f] sm:$0xff]
      %v2379 = vld [vmem:[#allocation2 + $0x217] sm:$0x7]
      %v2380 = vld [vmem:[#allocation2 + $0x227] sm:$0xff]
      %v2381 = vld [vmem:[#allocation2 + $0x22f] sm:$0xff]
      %v2382 = vld [vmem:[#allocation2 + $0x237] sm:$0x7]
      %v2383 = vld [vmem:[#allocation2 + $0x247] sm:$0xff]
      %v2384 = vld [vmem:[#allocation2 + $0x24f] sm:$0xff]
      %v2385 = vld [vmem:[#allocation2 + $0x257] sm:$0x7]
      %v2386 = vld [vmem:[#allocation2 + $0x267] sm:$0xff]
      %v2387 = vld [vmem:[#allocation2 + $0x26f] sm:$0xff]
      %v2388 = vld [vmem:[#allocation2 + $0x277] sm:$0x7]
      %v2389 = vmax.f32 %v2269, %v2329
      %v2390 = vmax.f32 %v2270, %v2330
      %v2391 = vmax.f32 %v2271, %v2331
      %v2392 = vmax.f32 %v2272, %v2332
      %v2393 = vmax.f32 %v2273, %v2333
      %v2394 = vmax.f32 %v2274, %v2334
      %v2395 = vmax.f32 %v2275, %v2335
      %v2396 = vmax.f32 %v2276, %v2336
      %v2397 = vmax.f32 %v2277, %v2337
      %v2398 = vmax.f32 %v2278, %v2338
      %v2399 = vmax.f32 %v2279, %v2339
      %v2400 = vmax.f32 %v2280, %v2340
      %v2401 = vmax.f32 %v2281, %v2341
      %v2402 = vmax.f32 %v2282, %v2342
      %v2403 = vmax.f32 %v2283, %v2343
      %v2404 = vmax.f32 %v2284, %v2344
      %v2405 = vmax.f32 %v2285, %v2345
      %v2406 = vmax.f32 %v2286, %v2346
      %v2407 = vmax.f32 %v2287, %v2347
      %v2408 = vmax.f32 %v2288, %v2348
      %v2409 = vmax.f32 %v2289, %v2349
      %v2410 = vmax.f32 %v2290, %v2350
      %v2411 = vmax.f32 %v2291, %v2351
      %v2412 = vmax.f32 %v2292, %v2352
      %v2413 = vmax.f32 %v2293, %v2353
      %v2414 = vmax.f32 %v2294, %v2354
      %v2415 = vmax.f32 %v2295, %v2355
      %v2416 = vmax.f32 %v2296, %v2356
      %v2417 = vmax.f32 %v2297, %v2357
      %v2418 = vmax.f32 %v2298, %v2358
      %v2419 = vmax.f32 %v2299, %v2359
      %v2420 = vmax.f32 %v2300, %v2360
      %v2421 = vmax.f32 %v2301, %v2361
      %v2422 = vmax.f32 %v2302, %v2362
      %v2423 = vmax.f32 %v2303, %v2363
      %v2424 = vmax.f32 %v2304, %v2364
      %v2425 = vmax.f32 %v2305, %v2365
      %v2426 = vmax.f32 %v2306, %v2366
      %v2427 = vmax.f32 %v2307, %v2367
      %v2428 = vmax.f32 %v2308, %v2368
      %v2429 = vmax.f32 %v2309, %v2369
      %v2430 = vmax.f32 %v2310, %v2370
      %v2431 = vmax.f32 %v2311, %v2371
      %v2432 = vmax.f32 %v2312, %v2372
      %v2433 = vmax.f32 %v2313, %v2373
      %v2434 = vmax.f32 %v2314, %v2374
      %v2435 = vmax.f32 %v2315, %v2375
      %v2436 = vmax.f32 %v2316, %v2376
      %v2437 = vmax.f32 %v2317, %v2377
      %v2438 = vmax.f32 %v2318, %v2378
      %v2439 = vmax.f32 %v2319, %v2379
      %v2440 = vmax.f32 %v2320, %v2380
      %v2441 = vmax.f32 %v2321, %v2381
      %v2442 = vmax.f32 %v2322, %v2382
      %v2443 = vmax.f32 %v2323, %v2383
      %v2444 = vmax.f32 %v2324, %v2384
      %v2445 = vmax.f32 %v2325, %v2385
      %v2446 = vmax.f32 %v2326, %v2386
      %v2447 = vmax.f32 %v2327, %v2387
      %v2448 = vmax.f32 %v2328, %v2388
      %v2509 = vrot.slane %v2389, 2
      %v2510 = vrot.slane %v2390, 2
      %v2511 = vsel %vm536, %v2509, %v2510
      %v2512 = vrot.slane %v2391, 2
      %v2513 = vsel %vm536, %v2510, %v2512
      %v2514 = vrot.slane %v2392, 2
      %v2515 = vrot.slane %v2393, 2
      %v2516 = vsel %vm536, %v2514, %v2515
      %v2517 = vrot.slane %v2394, 2
      %v2518 = vsel %vm536, %v2515, %v2517
      %v2519 = vrot.slane %v2395, 2
      %v2520 = vrot.slane %v2396, 2
      %v2521 = vsel %vm536, %v2519, %v2520
      %v2522 = vrot.slane %v2397, 2
      %v2523 = vsel %vm536, %v2520, %v2522
      %v2524 = vrot.slane %v2398, 2
      %v2525 = vrot.slane %v2399, 2
      %v2526 = vsel %vm536, %v2524, %v2525
      %v2527 = vrot.slane %v2400, 2
      %v2528 = vsel %vm536, %v2525, %v2527
      %v2529 = vrot.slane %v2401, 2
      %v2530 = vrot.slane %v2402, 2
      %v2531 = vsel %vm536, %v2529, %v2530
      %v2532 = vrot.slane %v2403, 2
      %v2533 = vsel %vm536, %v2530, %v2532
      %v2534 = vrot.slane %v2404, 2
      %v2535 = vrot.slane %v2405, 2
      %v2536 = vsel %vm536, %v2534, %v2535
      %v2537 = vrot.slane %v2406, 2
      %v2538 = vsel %vm536, %v2535, %v2537
      %v2539 = vrot.slane %v2407, 2
      %v2540 = vrot.slane %v2408, 2
      %v2541 = vsel %vm536, %v2539, %v2540
      %v2542 = vrot.slane %v2409, 2
      %v2543 = vsel %vm536, %v2540, %v2542
      %v2544 = vrot.slane %v2410, 2
      %v2545 = vrot.slane %v2411, 2
      %v2546 = vsel %vm536, %v2544, %v2545
      %v2547 = vrot.slane %v2412, 2
      %v2548 = vsel %vm536, %v2545, %v2547
      %v2549 = vrot.slane %v2413, 2
      %v2550 = vrot.slane %v2414, 2
      %v2551 = vsel %vm536, %v2549, %v2550
      %v2552 = vrot.slane %v2415, 2
      %v2553 = vsel %vm536, %v2550, %v2552
      %v2554 = vrot.slane %v2416, 2
      %v2555 = vrot.slane %v2417, 2
      %v2556 = vsel %vm536, %v2554, %v2555
      %v2557 = vrot.slane %v2418, 2
      %v2558 = vsel %vm536, %v2555, %v2557
      %v2559 = vrot.slane %v2419, 2
      %v2560 = vrot.slane %v2420, 2
      %v2561 = vsel %vm536, %v2559, %v2560
      %v2562 = vrot.slane %v2421, 2
      %v2563 = vsel %vm536, %v2560, %v2562
      %v2564 = vrot.slane %v2422, 2
      %v2565 = vrot.slane %v2423, 2
      %v2566 = vsel %vm536, %v2564, %v2565
      %v2567 = vrot.slane %v2424, 2
      %v2568 = vsel %vm536, %v2565, %v2567
      %v2569 = vrot.slane %v2425, 2
      %v2570 = vrot.slane %v2426, 2
      %v2571 = vsel %vm536, %v2569, %v2570
      %v2572 = vrot.slane %v2427, 2
      %v2573 = vsel %vm536, %v2570, %v2572
      %v2574 = vrot.slane %v2428, 2
      %v2575 = vrot.slane %v2429, 2
      %v2576 = vsel %vm536, %v2574, %v2575
      %v2577 = vrot.slane %v2430, 2
      %v2578 = vsel %vm536, %v2575, %v2577
      %v2579 = vrot.slane %v2431, 2
      %v2580 = vrot.slane %v2432, 2
      %v2581 = vsel %vm536, %v2579, %v2580
      %v2582 = vrot.slane %v2433, 2
      %v2583 = vsel %vm536, %v2580, %v2582
      %v2584 = vrot.slane %v2434, 2
      %v2585 = vrot.slane %v2435, 2
      %v2586 = vsel %vm536, %v2584, %v2585
      %v2587 = vrot.slane %v2436, 2
      %v2588 = vsel %vm536, %v2585, %v2587
      %v2589 = vrot.slane %v2437, 2
      %v2590 = vrot.slane %v2438, 2
      %v2591 = vsel %vm536, %v2589, %v2590
      %v2592 = vrot.slane %v2439, 2
      %v2593 = vsel %vm536, %v2590, %v2592
      %v2594 = vrot.slane %v2440, 2
      %v2595 = vrot.slane %v2441, 2
      %v2596 = vsel %vm536, %v2594, %v2595
      %v2597 = vrot.slane %v2442, 2
      %v2598 = vsel %vm536, %v2595, %v2597
      %v2599 = vrot.slane %v2443, 2
      %v2600 = vrot.slane %v2444, 2
      %v2601 = vsel %vm536, %v2599, %v2600
      %v2602 = vrot.slane %v2445, 2
      %v2603 = vsel %vm536, %v2600, %v2602
      %v2604 = vrot.slane %v2446, 2
      %v2605 = vrot.slane %v2447, 2
      %v2606 = vsel %vm536, %v2604, %v2605
      %v2607 = vrot.slane %v2448, 2
      %v2608 = vsel %vm536, %v2605, %v2607
      %v2669 = vmax.f32 %v2389, %v2511
      %v2670 = vmax.f32 %v2390, %v2513
      %v2671 = vmax.f32 %v2391, %v2512
      %v2672 = vmax.f32 %v2392, %v2516
      %v2673 = vmax.f32 %v2393, %v2518
      %v2674 = vmax.f32 %v2394, %v2517
      %v2675 = vmax.f32 %v2395, %v2521
      %v2676 = vmax.f32 %v2396, %v2523
      %v2677 = vmax.f32 %v2397, %v2522
      %v2678 = vmax.f32 %v2398, %v2526
      %v2679 = vmax.f32 %v2399, %v2528
      %v2680 = vmax.f32 %v2400, %v2527
      %v2681 = vmax.f32 %v2401, %v2531
      %v2682 = vmax.f32 %v2402, %v2533
      %v2683 = vmax.f32 %v2403, %v2532
      %v2684 = vmax.f32 %v2404, %v2536
      %v2685 = vmax.f32 %v2405, %v2538
      %v2686 = vmax.f32 %v2406, %v2537
      %v2687 = vmax.f32 %v2407, %v2541
      %v2688 = vmax.f32 %v2408, %v2543
      %v2689 = vmax.f32 %v2409, %v2542
      %v2690 = vmax.f32 %v2410, %v2546
      %v2691 = vmax.f32 %v2411, %v2548
      %v2692 = vmax.f32 %v2412, %v2547
      %v2693 = vmax.f32 %v2413, %v2551
      %v2694 = vmax.f32 %v2414, %v2553
      %v2695 = vmax.f32 %v2415, %v2552
      %v2696 = vmax.f32 %v2416, %v2556
      %v2697 = vmax.f32 %v2417, %v2558
      %v2698 = vmax.f32 %v2418, %v2557
      %v2699 = vmax.f32 %v2419, %v2561
      %v2700 = vmax.f32 %v2420, %v2563
      %v2701 = vmax.f32 %v2421, %v2562
      %v2702 = vmax.f32 %v2422, %v2566
      %v2703 = vmax.f32 %v2423, %v2568
      %v2704 = vmax.f32 %v2424, %v2567
      %v2705 = vmax.f32 %v2425, %v2571
      %v2706 = vmax.f32 %v2426, %v2573
      %v2707 = vmax.f32 %v2427, %v2572
      %v2708 = vmax.f32 %v2428, %v2576
      %v2709 = vmax.f32 %v2429, %v2578
      %v2710 = vmax.f32 %v2430, %v2577
      %v2711 = vmax.f32 %v2431, %v2581
      %v2712 = vmax.f32 %v2432, %v2583
      %v2713 = vmax.f32 %v2433, %v2582
      %v2714 = vmax.f32 %v2434, %v2586
      %v2715 = vmax.f32 %v2435, %v2588
      %v2716 = vmax.f32 %v2436, %v2587
      %v2717 = vmax.f32 %v2437, %v2591
      %v2718 = vmax.f32 %v2438, %v2593
      %v2719 = vmax.f32 %v2439, %v2592
      %v2720 = vmax.f32 %v2440, %v2596
      %v2721 = vmax.f32 %v2441, %v2598
      %v2722 = vmax.f32 %v2442, %v2597
      %v2723 = vmax.f32 %v2443, %v2601
      %v2724 = vmax.f32 %v2444, %v2603
      %v2725 = vmax.f32 %v2445, %v2602
      %v2726 = vmax.f32 %v2446, %v2606
      %v2727 = vmax.f32 %v2447, %v2608
      %v2728 = vmax.f32 %v2448, %v2607
      %v2789 = vrot.slane %v2669, 1
      %v2790 = vrot.slane %v2670, 1
      %v2791 = vsel %vm817, %v2789, %v2790
      %v2792 = vrot.slane %v2671, 1
      %v2793 = vsel %vm817, %v2790, %v2792
      %v2794 = vrot.slane %v2672, 1
      %v2795 = vrot.slane %v2673, 1
      %v2796 = vsel %vm817, %v2794, %v2795
      %v2797 = vrot.slane %v2674, 1
      %v2798 = vsel %vm817, %v2795, %v2797
      %v2799 = vrot.slane %v2675, 1
      %v2800 = vrot.slane %v2676, 1
      %v2801 = vsel %vm817, %v2799, %v2800
      %v2802 = vrot.slane %v2677, 1
      %v2803 = vsel %vm817, %v2800, %v2802
      %v2804 = vrot.slane %v2678, 1
      %v2805 = vrot.slane %v2679, 1
      %v2806 = vsel %vm817, %v2804, %v2805
      %v2807 = vrot.slane %v2680, 1
      %v2808 = vsel %vm817, %v2805, %v2807
      %v2809 = vrot.slane %v2681, 1
      %v2810 = vrot.slane %v2682, 1
      %v2811 = vsel %vm817, %v2809, %v2810
      %v2812 = vrot.slane %v2683, 1
      %v2813 = vsel %vm817, %v2810, %v2812
      %v2814 = vrot.slane %v2684, 1
      %v2815 = vrot.slane %v2685, 1
      %v2816 = vsel %vm817, %v2814, %v2815
      %v2817 = vrot.slane %v2686, 1
      %v2818 = vsel %vm817, %v2815, %v2817
      %v2819 = vrot.slane %v2687, 1
      %v2820 = vrot.slane %v2688, 1
      %v2821 = vsel %vm817, %v2819, %v2820
      %v2822 = vrot.slane %v2689, 1
      %v2823 = vsel %vm817, %v2820, %v2822
      %v2824 = vrot.slane %v2690, 1
      %v2825 = vrot.slane %v2691, 1
      %v2826 = vsel %vm817, %v2824, %v2825
      %v2827 = vrot.slane %v2692, 1
      %v2828 = vsel %vm817, %v2825, %v2827
      %v2829 = vrot.slane %v2693, 1
      %v2830 = vrot.slane %v2694, 1
      %v2831 = vsel %vm817, %v2829, %v2830
      %v2832 = vrot.slane %v2695, 1
      %v2833 = vsel %vm817, %v2830, %v2832
      %v2834 = vrot.slane %v2696, 1
      %v2835 = vrot.slane %v2697, 1
      %v2836 = vsel %vm817, %v2834, %v2835
      %v2837 = vrot.slane %v2698, 1
      %v2838 = vsel %vm817, %v2835, %v2837
      %v2839 = vrot.slane %v2699, 1
      %v2840 = vrot.slane %v2700, 1
      %v2841 = vsel %vm817, %v2839, %v2840
      %v2842 = vrot.slane %v2701, 1
      %v2843 = vsel %vm817, %v2840, %v2842
      %v2844 = vrot.slane %v2702, 1
      %v2845 = vrot.slane %v2703, 1
      %v2846 = vsel %vm817, %v2844, %v2845
      %v2847 = vrot.slane %v2704, 1
      %v2848 = vsel %vm817, %v2845, %v2847
      %v2849 = vrot.slane %v2705, 1
      %v2850 = vrot.slane %v2706, 1
      %v2851 = vsel %vm817, %v2849, %v2850
      %v2852 = vrot.slane %v2707, 1
      %v2853 = vsel %vm817, %v2850, %v2852
      %v2854 = vrot.slane %v2708, 1
      %v2855 = vrot.slane %v2709, 1
      %v2856 = vsel %vm817, %v2854, %v2855
      %v2857 = vrot.slane %v2710, 1
      %v2858 = vsel %vm817, %v2855, %v2857
      %v2859 = vrot.slane %v2711, 1
      %v2860 = vrot.slane %v2712, 1
      %v2861 = vsel %vm817, %v2859, %v2860
      %v2862 = vrot.slane %v2713, 1
      %v2863 = vsel %vm817, %v2860, %v2862
      %v2864 = vrot.slane %v2714, 1
      %v2865 = vrot.slane %v2715, 1
      %v2866 = vsel %vm817, %v2864, %v2865
      %v2867 = vrot.slane %v2716, 1
      %v2868 = vsel %vm817, %v2865, %v2867
      %v2869 = vrot.slane %v2717, 1
      %v2870 = vrot.slane %v2718, 1
      %v2871 = vsel %vm817, %v2869, %v2870
      %v2872 = vrot.slane %v2719, 1
      %v2873 = vsel %vm817, %v2870, %v2872
      %v2874 = vrot.slane %v2720, 1
      %v2875 = vrot.slane %v2721, 1
      %v2876 = vsel %vm817, %v2874, %v2875
      %v2877 = vrot.slane %v2722, 1
      %v2878 = vsel %vm817, %v2875, %v2877
      %v2879 = vrot.slane %v2723, 1
      %v2880 = vrot.slane %v2724, 1
      %v2881 = vsel %vm817, %v2879, %v2880
      %v2882 = vrot.slane %v2725, 1
      %v2883 = vsel %vm817, %v2880, %v2882
      %v2884 = vrot.slane %v2726, 1
      %v2885 = vrot.slane %v2727, 1
      %v2886 = vsel %vm817, %v2884, %v2885
      %v2887 = vrot.slane %v2728, 1
      %v2888 = vsel %vm817, %v2885, %v2887
      %v2929 = vmax.f32 %v2669, %v2791
      %v2930 = vmax.f32 %v2670, %v2793
      %v2931 = vmax.f32 %v2672, %v2796
      %v2932 = vmax.f32 %v2673, %v2798
      %v2933 = vmax.f32 %v2675, %v2801
      %v2934 = vmax.f32 %v2676, %v2803
      %v2935 = vmax.f32 %v2678, %v2806
      %v2936 = vmax.f32 %v2679, %v2808
      %v2937 = vmax.f32 %v2681, %v2811
      %v2938 = vmax.f32 %v2682, %v2813
      %v2939 = vmax.f32 %v2684, %v2816
      %v2940 = vmax.f32 %v2685, %v2818
      %v2941 = vmax.f32 %v2687, %v2821
      %v2942 = vmax.f32 %v2688, %v2823
      %v2943 = vmax.f32 %v2690, %v2826
      %v2944 = vmax.f32 %v2691, %v2828
      %v2945 = vmax.f32 %v2693, %v2831
      %v2946 = vmax.f32 %v2694, %v2833
      %v2947 = vmax.f32 %v2696, %v2836
      %v2948 = vmax.f32 %v2697, %v2838
      %v2949 = vmax.f32 %v2699, %v2841
      %v2950 = vmax.f32 %v2700, %v2843
      %v2951 = vmax.f32 %v2702, %v2846
      %v2952 = vmax.f32 %v2703, %v2848
      %v2953 = vmax.f32 %v2705, %v2851
      %v2954 = vmax.f32 %v2706, %v2853
      %v2955 = vmax.f32 %v2708, %v2856
      %v2956 = vmax.f32 %v2709, %v2858
      %v2957 = vmax.f32 %v2711, %v2861
      %v2958 = vmax.f32 %v2712, %v2863
      %v2959 = vmax.f32 %v2714, %v2866
      %v2960 = vmax.f32 %v2715, %v2868
      %v2961 = vmax.f32 %v2717, %v2871
      %v2962 = vmax.f32 %v2718, %v2873
      %v2963 = vmax.f32 %v2720, %v2876
      %v2964 = vmax.f32 %v2721, %v2878
      %v2965 = vmax.f32 %v2723, %v2881
      %v2966 = vmax.f32 %v2724, %v2883
      %v2967 = vmax.f32 %v2726, %v2886
      %v2968 = vmax.f32 %v2727, %v2888
      %2969 = vst.msk [vmem:[#allocation3] sm:$0xff] %vm148, %v2929
      %2970 = vst.msk [vmem:[#allocation3 + $0x8] sm:$0xff] %vm148, %v2930
      %2971 = vst.msk [vmem:[#allocation3 + $0x10] sm:$0xff] %vm148, %v2931
      %2972 = vst.msk [vmem:[#allocation3 + $0x18] sm:$0xff] %vm148, %v2932
      %2973 = vst.msk [vmem:[#allocation3 + $0x20] sm:$0xff] %vm148, %v2933
      %2974 = vst.msk [vmem:[#allocation3 + $0x28] sm:$0xff] %vm148, %v2934
      %2975 = vst.msk [vmem:[#allocation3 + $0x30] sm:$0xff] %vm148, %v2935
      %2976 = vst.msk [vmem:[#allocation3 + $0x38] sm:$0xff] %vm148, %v2936
      %2977 = vst.msk [vmem:[#allocation3 + $0x40] sm:$0xff] %vm148, %v2937
      %2978 = vst.msk [vmem:[#allocation3 + $0x48] sm:$0xff] %vm148, %v2938
      %2979 = vst.msk [vmem:[#allocation3 + $0x50] sm:$0xff] %vm148, %v2939
      %2980 = vst.msk [vmem:[#allocation3 + $0x58] sm:$0xff] %vm148, %v2940
      %2981 = vst.msk [vmem:[#allocation3 + $0x60] sm:$0xff] %vm148, %v2941
      %2982 = vst.msk [vmem:[#allocation3 + $0x68] sm:$0xff] %vm148, %v2942
      %2983 = vst.msk [vmem:[#allocation3 + $0x70] sm:$0xff] %vm148, %v2943
      %2984 = vst.msk [vmem:[#allocation3 + $0x78] sm:$0xff] %vm148, %v2944
      %2985 = vst.msk [vmem:[#allocation3 + $0x80] sm:$0xff] %vm148, %v2945
      %2986 = vst.msk [vmem:[#allocation3 + $0x88] sm:$0xff] %vm148, %v2946
      %2987 = vst.msk [vmem:[#allocation3 + $0x90] sm:$0xff] %vm148, %v2947
      %2988 = vst.msk [vmem:[#allocation3 + $0x98] sm:$0xff] %vm148, %v2948
      %2989 = vst.msk [vmem:[#allocation3 + $0xa0] sm:$0xff] %vm148, %v2949
      %2990 = vst.msk [vmem:[#allocation3 + $0xa8] sm:$0xff] %vm148, %v2950
      %2991 = vst.msk [vmem:[#allocation3 + $0xb0] sm:$0xff] %vm148, %v2951
      %2992 = vst.msk [vmem:[#allocation3 + $0xb8] sm:$0xff] %vm148, %v2952
      %2993 = vst.msk [vmem:[#allocation3 + $0xc0] sm:$0xff] %vm148, %v2953
      %2994 = vst.msk [vmem:[#allocation3 + $0xc8] sm:$0xff] %vm148, %v2954
      %2995 = vst.msk [vmem:[#allocation3 + $0xd0] sm:$0xff] %vm148, %v2955
      %2996 = vst.msk [vmem:[#allocation3 + $0xd8] sm:$0xff] %vm148, %v2956
      %2997 = vst.msk [vmem:[#allocation3 + $0xe0] sm:$0xff] %vm148, %v2957
      %2998 = vst.msk [vmem:[#allocation3 + $0xe8] sm:$0xff] %vm148, %v2958
      %2999 = vst.msk [vmem:[#allocation3 + $0xf0] sm:$0xff] %vm148, %v2959
      %3000 = vst.msk [vmem:[#allocation3 + $0xf8] sm:$0xff] %vm148, %v2960
      %3001 = vst.msk [vmem:[#allocation3 + $0x100] sm:$0xff] %vm148, %v2961
      %3002 = vst.msk [vmem:[#allocation3 + $0x108] sm:$0xff] %vm148, %v2962
      %3003 = vst.msk [vmem:[#allocation3 + $0x110] sm:$0xff] %vm148, %v2963
      %3004 = vst.msk [vmem:[#allocation3 + $0x118] sm:$0xff] %vm148, %v2964
      %3005 = vst.msk [vmem:[#allocation3 + $0x120] sm:$0xff] %vm148, %v2965
      %3006 = vst.msk [vmem:[#allocation3 + $0x128] sm:$0xff] %vm148, %v2966
      %3007 = vst.msk [vmem:[#allocation3 + $0x130] sm:$0xff] %vm148, %v2967
      %3008 = vst.msk [vmem:[#allocation3 + $0x138] sm:$0xff] %vm148, %v2968
      %v3009 = vld [vmem:[#allocation3] sm:$0xff]
      %v3010 = vld [vmem:[#allocation3 + $0x8] sm:$0xff]
      %v3011 = vld [vmem:[#allocation3 + $0x10] sm:$0xff]
      %v3012 = vld [vmem:[#allocation3 + $0x18] sm:$0xff]
      %v3013 = vld [vmem:[#allocation3 + $0x20] sm:$0xff]
      %v3014 = vld [vmem:[#allocation3 + $0x28] sm:$0xff]
      %v3015 = vld [vmem:[#allocation3 + $0x30] sm:$0xff]
      %v3016 = vld [vmem:[#allocation3 + $0x38] sm:$0xff]
      %v3017 = vld [vmem:[#allocation3 + $0x40] sm:$0xff]
      %v3018 = vld [vmem:[#allocation3 + $0x48] sm:$0xff]
      %v3019 = vld [vmem:[#allocation3 + $0x50] sm:$0xff]
      %v3020 = vld [vmem:[#allocation3 + $0x58] sm:$0xff]
      %v3021 = vld [vmem:[#allocation3 + $0x60] sm:$0xff]
      %v3022 = vld [vmem:[#allocation3 + $0x68] sm:$0xff]
      %v3023 = vld [vmem:[#allocation3 + $0x70] sm:$0xff]
      %v3024 = vld [vmem:[#allocation3 + $0x78] sm:$0xff]
      %v3025 = vld [vmem:[#allocation3 + $0x80] sm:$0xff]
      %v3026 = vld [vmem:[#allocation3 + $0x88] sm:$0xff]
      %v3027 = vld [vmem:[#allocation3 + $0x90] sm:$0xff]
      %v3028 = vld [vmem:[#allocation3 + $0x98] sm:$0xff]
      %v3029 = vld [vmem:[#allocation3 + $0xa0] sm:$0xff]
      %v3030 = vld [vmem:[#allocation3 + $0xa8] sm:$0xff]
      %v3031 = vld [vmem:[#allocation3 + $0xb0] sm:$0xff]
      %v3032 = vld [vmem:[#allocation3 + $0xb8] sm:$0xff]
      %v3033 = vld [vmem:[#allocation3 + $0xc0] sm:$0xff]
      %v3034 = vld [vmem:[#allocation3 + $0xc8] sm:$0xff]
      %v3035 = vld [vmem:[#allocation3 + $0xd0] sm:$0xff]
      %v3036 = vld [vmem:[#allocation3 + $0xd8] sm:$0xff]
      %v3037 = vld [vmem:[#allocation3 + $0xe0] sm:$0xff]
      %v3038 = vld [vmem:[#allocation3 + $0xe8] sm:$0xff]
      %v3039 = vld [vmem:[#allocation3 + $0xf0] sm:$0xff]
      %v3040 = vld [vmem:[#allocation3 + $0xf8] sm:$0xff]
      %v3041 = vld [vmem:[#allocation3 + $0x100] sm:$0xff]
      %v3042 = vld [vmem:[#allocation3 + $0x108] sm:$0xff]
      %v3043 = vld [vmem:[#allocation3 + $0x110] sm:$0xff]
      %v3044 = vld [vmem:[#allocation3 + $0x118] sm:$0xff]
      %v3045 = vld [vmem:[#allocation3 + $0x120] sm:$0xff]
      %v3046 = vld [vmem:[#allocation3 + $0x128] sm:$0xff]
      %v3047 = vld [vmem:[%s1076] sm:$0xff]
      %v3048 = vld [vmem:[%s1076 + $0x8] sm:$0xff]
      %v3049 = vld [vmem:[%s1076 + $0x10] sm:$0xff]
      %v3050 = vld [vmem:[%s1076 + $0x18] sm:$0xff]
      %v3051 = vld [vmem:[%s1076 + $0x20] sm:$0xff]
      %v3052 = vld [vmem:[%s1076 + $0x28] sm:$0xff]
      %v3053 = vld [vmem:[%s1076 + $0x30] sm:$0xff]
      %v3054 = vld [vmem:[%s1076 + $0x38] sm:$0xff]
      %v3055 = vld [vmem:[%s1076 + $0x40] sm:$0xff]
      %v3056 = vld [vmem:[%s1076 + $0x48] sm:$0xff]
      %v3057 = vld [vmem:[%s1076 + $0x50] sm:$0xff]
      %v3058 = vld [vmem:[%s1076 + $0x58] sm:$0xff]
      %v3059 = vld [vmem:[%s1076 + $0x60] sm:$0xff]
      %v3060 = vld [vmem:[%s1076 + $0x68] sm:$0xff]
      %v3061 = vld [vmem:[%s1076 + $0x70] sm:$0xff]
      %v3062 = vld [vmem:[%s1076 + $0x78] sm:$0xff]
      %v3063 = vld [vmem:[%s1076 + $0x80] sm:$0xff]
      %v3064 = vld [vmem:[%s1076 + $0x88] sm:$0xff]
      %v3065 = vld [vmem:[%s1076 + $0x90] sm:$0xff]
      %v3066 = vld [vmem:[%s1076 + $0x98] sm:$0xff]
      %v3067 = vld [vmem:[%s1076 + $0xa0] sm:$0xff]
      %v3068 = vld [vmem:[%s1076 + $0xa8] sm:$0xff]
      %v3069 = vld [vmem:[%s1076 + $0xb0] sm:$0xff]
      %v3070 = vld [vmem:[%s1076 + $0xb8] sm:$0xff]
      %v3071 = vld [vmem:[%s1076 + $0xc0] sm:$0xff]
      %v3072 = vld [vmem:[%s1076 + $0xc8] sm:$0xff]
      %v3073 = vld [vmem:[%s1076 + $0xd0] sm:$0xff]
      %v3074 = vld [vmem:[%s1076 + $0xd8] sm:$0xff]
      %v3075 = vld [vmem:[%s1076 + $0xe0] sm:$0xff]
      %v3076 = vld [vmem:[%s1076 + $0xe8] sm:$0xff]
      %v3077 = vld [vmem:[%s1076 + $0xf0] sm:$0xff]
      %v3078 = vld [vmem:[%s1076 + $0xf8] sm:$0xff]
      %v3079 = vld [vmem:[%s1076 + $0x100] sm:$0xff]
      %v3080 = vld [vmem:[%s1076 + $0x108] sm:$0xff]
      %v3081 = vld [vmem:[%s1076 + $0x110] sm:$0xff]
      %v3082 = vld [vmem:[%s1076 + $0x118] sm:$0xff]
      %v3083 = vld [vmem:[%s1076 + $0x120] sm:$0xff]
      %v3084 = vld [vmem:[%s1076 + $0x128] sm:$0xff]
      %v3085 = vmax.f32 %v3009, %v3047
      %v3086 = vmax.f32 %v3010, %v3048
      %v3087 = vmax.f32 %v3011, %v3049
      %v3088 = vmax.f32 %v3012, %v3050
      %v3089 = vmax.f32 %v3013, %v3051
      %v3090 = vmax.f32 %v3014, %v3052
      %v3091 = vmax.f32 %v3015, %v3053
      %v3092 = vmax.f32 %v3016, %v3054
      %v3093 = vmax.f32 %v3017, %v3055
      %v3094 = vmax.f32 %v3018, %v3056
      %v3095 = vmax.f32 %v3019, %v3057
      %v3096 = vmax.f32 %v3020, %v3058
      %v3097 = vmax.f32 %v3021, %v3059
      %v3098 = vmax.f32 %v3022, %v3060
      %v3099 = vmax.f32 %v3023, %v3061
      %v3100 = vmax.f32 %v3024, %v3062
      %v3101 = vmax.f32 %v3025, %v3063
      %v3102 = vmax.f32 %v3026, %v3064
      %v3103 = vmax.f32 %v3027, %v3065
      %v3104 = vmax.f32 %v3028, %v3066
      %v3105 = vmax.f32 %v3029, %v3067
      %v3106 = vmax.f32 %v3030, %v3068
      %v3107 = vmax.f32 %v3031, %v3069
      %v3108 = vmax.f32 %v3032, %v3070
      %v3109 = vmax.f32 %v3033, %v3071
      %v3110 = vmax.f32 %v3034, %v3072
      %v3111 = vmax.f32 %v3035, %v3073
      %v3112 = vmax.f32 %v3036, %v3074
      %v3113 = vmax.f32 %v3037, %v3075
      %v3114 = vmax.f32 %v3038, %v3076
      %v3115 = vmax.f32 %v3039, %v3077
      %v3116 = vmax.f32 %v3040, %v3078
      %v3117 = vmax.f32 %v3041, %v3079
      %v3118 = vmax.f32 %v3042, %v3080
      %v3119 = vmax.f32 %v3043, %v3081
      %v3120 = vmax.f32 %v3044, %v3082
      %v3121 = vmax.f32 %v3045, %v3083
      %v3122 = vmax.f32 %v3046, %v3084
      %v3123 = vmax.f32 %v3085, %v3089
      %v3124 = vmax.f32 %v3086, %v3090
      %v3125 = vmax.f32 %v3087, %v3091
      %v3126 = vmax.f32 %v3088, %v3092
      %v3127 = vmax.f32 %v3089, %v3093
      %v3128 = vmax.f32 %v3090, %v3094
      %v3129 = vmax.f32 %v3091, %v3095
      %v3130 = vmax.f32 %v3092, %v3096
      %v3131 = vmax.f32 %v3093, %v3097
      %v3132 = vmax.f32 %v3094, %v3098
      %v3133 = vmax.f32 %v3095, %v3099
      %v3134 = vmax.f32 %v3096, %v3100
      %v3135 = vmax.f32 %v3097, %v3101
      %v3136 = vmax.f32 %v3098, %v3102
      %v3137 = vmax.f32 %v3099, %v3103
      %v3138 = vmax.f32 %v3100, %v3104
      %v3139 = vmax.f32 %v3101, %v3105
      %v3140 = vmax.f32 %v3102, %v3106
      %v3141 = vmax.f32 %v3103, %v3107
      %v3142 = vmax.f32 %v3104, %v3108
      %v3143 = vmax.f32 %v3105, %v3109
      %v3144 = vmax.f32 %v3106, %v3110
      %v3145 = vmax.f32 %v3107, %v3111
      %v3146 = vmax.f32 %v3108, %v3112
      %v3147 = vmax.f32 %v3109, %v3113
      %v3148 = vmax.f32 %v3110, %v3114
      %v3149 = vmax.f32 %v3111, %v3115
      %v3150 = vmax.f32 %v3112, %v3116
      %v3151 = vmax.f32 %v3113, %v3117
      %v3152 = vmax.f32 %v3114, %v3118
      %v3153 = vmax.f32 %v3115, %v3119
      %v3154 = vmax.f32 %v3116, %v3120
      %v3155 = vmax.f32 %v3117, %v3121
      %v3156 = vmax.f32 %v3118, %v3122
      %v3157 = vmax.f32 %v3123, %v3125
      %v3158 = vmax.f32 %v3124, %v3126
      %v3159 = vmax.f32 %v3125, %v3127
      %v3160 = vmax.f32 %v3126, %v3128
      %v3161 = vmax.f32 %v3127, %v3129
      %v3162 = vmax.f32 %v3128, %v3130
      %v3163 = vmax.f32 %v3129, %v3131
      %v3164 = vmax.f32 %v3130, %v3132
      %v3165 = vmax.f32 %v3131, %v3133
      %v3166 = vmax.f32 %v3132, %v3134
      %v3167 = vmax.f32 %v3133, %v3135
      %v3168 = vmax.f32 %v3134, %v3136
      %v3169 = vmax.f32 %v3135, %v3137
      %v3170 = vmax.f32 %v3136, %v3138
      %v3171 = vmax.f32 %v3137, %v3139
      %v3172 = vmax.f32 %v3138, %v3140
      %v3173 = vmax.f32 %v3139, %v3141
      %v3174 = vmax.f32 %v3140, %v3142
      %v3175 = vmax.f32 %v3141, %v3143
      %v3176 = vmax.f32 %v3142, %v3144
      %v3177 = vmax.f32 %v3143, %v3145
      %v3178 = vmax.f32 %v3144, %v3146
      %v3179 = vmax.f32 %v3145, %v3147
      %v3180 = vmax.f32 %v3146, %v3148
      %v3181 = vmax.f32 %v3147, %v3149
      %v3182 = vmax.f32 %v3148, %v3150
      %v3183 = vmax.f32 %v3149, %v3151
      %v3184 = vmax.f32 %v3150, %v3152
      %v3185 = vmax.f32 %v3151, %v3153
      %v3186 = vmax.f32 %v3152, %v3154
      %v3187 = vmax.f32 %v3153, %v3155
      %v3188 = vmax.f32 %v3154, %v3156
      %3189 = vst.msk [vmem:[%s147] sm:$0xff] %vm148, %v3157
      %3190 = vst.msk [vmem:[%s147 + $0x8] sm:$0xff] %vm148, %v3158
      %3191 = vst.msk [vmem:[%s147 + $0x10] sm:$0xff] %vm148, %v3159
      %3192 = vst.msk [vmem:[%s147 + $0x18] sm:$0xff] %vm148, %v3160
      %3193 = vst.msk [vmem:[%s147 + $0x20] sm:$0xff] %vm148, %v3161
      %3194 = vst.msk [vmem:[%s147 + $0x28] sm:$0xff] %vm148, %v3162
      %3195 = vst.msk [vmem:[%s147 + $0x30] sm:$0xff] %vm148, %v3163
      %3196 = vst.msk [vmem:[%s147 + $0x38] sm:$0xff] %vm148, %v3164
      %3197 = vst.msk [vmem:[%s147 + $0x40] sm:$0xff] %vm148, %v3165
      %3198 = vst.msk [vmem:[%s147 + $0x48] sm:$0xff] %vm148, %v3166
      %3199 = vst.msk [vmem:[%s147 + $0x50] sm:$0xff] %vm148, %v3167
      %3200 = vst.msk [vmem:[%s147 + $0x58] sm:$0xff] %vm148, %v3168
      %3201 = vst.msk [vmem:[%s147 + $0x60] sm:$0xff] %vm148, %v3169
      %3202 = vst.msk [vmem:[%s147 + $0x68] sm:$0xff] %vm148, %v3170
      %3203 = vst.msk [vmem:[%s147 + $0x70] sm:$0xff] %vm148, %v3171
      %3204 = vst.msk [vmem:[%s147 + $0x78] sm:$0xff] %vm148, %v3172
      %3205 = vst.msk [vmem:[%s147 + $0x80] sm:$0xff] %vm148, %v3173
      %3206 = vst.msk [vmem:[%s147 + $0x88] sm:$0xff] %vm148, %v3174
      %3207 = vst.msk [vmem:[%s147 + $0x90] sm:$0xff] %vm148, %v3175
      %3208 = vst.msk [vmem:[%s147 + $0x98] sm:$0xff] %vm148, %v3176
      %3209 = vst.msk [vmem:[%s147 + $0xa0] sm:$0xff] %vm148, %v3177
      %3210 = vst.msk [vmem:[%s147 + $0xa8] sm:$0xff] %vm148, %v3178
      %3211 = vst.msk [vmem:[%s147 + $0xb0] sm:$0xff] %vm148, %v3179
      %3212 = vst.msk [vmem:[%s147 + $0xb8] sm:$0xff] %vm148, %v3180
      %3213 = vst.msk [vmem:[%s147 + $0xc0] sm:$0xff] %vm148, %v3181
      %3214 = vst.msk [vmem:[%s147 + $0xc8] sm:$0xff] %vm148, %v3182
      %3215 = vst.msk [vmem:[%s147 + $0xd0] sm:$0xff] %vm148, %v3183
      %3216 = vst.msk [vmem:[%s147 + $0xd8] sm:$0xff] %vm148, %v3184
      %3217 = vst.msk [vmem:[%s147 + $0xe0] sm:$0xff] %vm148, %v3185
      %3218 = vst.msk [vmem:[%s147 + $0xe8] sm:$0xff] %vm148, %v3186
      %3219 = vst.msk [vmem:[%s147 + $0xf0] sm:$0xff] %vm148, %v3187
      %3220 = vst.msk [vmem:[%s147 + $0xf8] sm:$0xff] %vm148, %v3188
      %p3221 = scmp.lt.s32.totalorder %s16, 1
      %s3222 = scalar_select %p3221, %s16, 1
      %p3223 = scmp.lt.s32.totalorder %s17, 0
      %s3224 = scalar_select %p3223, %s17, 0
      %s3225 = smul.addr %s3222, 128
      %s3226 = sadd.s32 %s3224, %s3225
      %s3227 = smul.addr %s3226, 8
      %s3228 = scalar_lea.vmem %s1, %s3227
      // Predicated region
      $region25: #{_spp_nchw.1} parent=23 // pred_check
        %p3229 = pneg %p72
      $region26: #{_spp_nchw.1} parent=23 // pred_check_branch
        %3231 = sbr.rel (%p3229) target = $region28
      $region27: #{_spp_nchw.1} parent=23 // pred_region
        _
      $region28: #{_spp_nchw.1} parent=23 // pred_fallthru
        _
    $region24: #{_spp_nchw.1} parent=5 // pred_fallthru
      _
    %p3232 = scmp.le.s32.totalorder 2, %s7
    // Predicated region
    $region29: #{_spp_nchw.1} parent=5 // pred_check
      %p3233 = pneg %p3232
    $region30: #{_spp_nchw.1} parent=5 // pred_check_branch
      %3235 = sbr.rel (%p3233) target = $region32
    $region31: #{_spp_nchw.1} parent=5 // pred_region
      %s3236 = ssub.s32 %s7, 2
      // Predicated region
      $region33: #{_spp_nchw.1} parent=31 // pred_check
        %p3237 = pneg %p78
      $region34: #{_spp_nchw.1} parent=31 // pred_check_branch
        %3239 = sbr.rel (%p3237) target = $region36
      $region35: #{_spp_nchw.1} parent=31 // pred_region
        %p3240 = scmp.lt.s32.totalorder %s18, 1
        %s3241 = scalar_select %p3240, %s18, 1
        %p3242 = scmp.lt.s32.totalorder %s19, 0
        %s3243 = scalar_select %p3242, %s19, 0
        %s3244 = smul.addr %s3241, 128
        %s3245 = sadd.s32 %s3243, %s3244
        %s3246 = smul.addr %s3245, 8
        %s3247 = scalar_lea.vmem %s1, %s3246
      $region36: #{_spp_nchw.1} parent=31 // pred_fallthru
        _
    $region32: #{_spp_nchw.1} parent=5 // pred_fallthru
      _
  $region6: #{_spp_nchw.1} parent=0 // loop_footer
    %s11 = sadd.s32 1, %s7
  $region7: #{_spp_nchw.1} parent=0 // loop_footer_branch
    %6 = sbr.rel target = $region3
  $region8: #{_spp_nchw.1} parent=0 // loop_exit
    _

</llo_original>
